<compile_context>
chip_gen: v7x
topology: tpu7x:2x2x1
jax: 0.10.0
libtpu: 0.0.40
codegen_flags: <defaults>
</compile_context>

<pallas_src>
import functools
import math

import jax
import jax.numpy as jnp
from jax.experimental import pallas as pl
from jax.experimental.pallas import tpu as pltpu


# -----------------------------------------------------------------------------
# Pallas kernels
# -----------------------------------------------------------------------------
def _ccn_kernel(x_ref, wb_ref, bb_ref, wh_ref, bh_ref, o_ref, *, Wq, L):
    """Fused CCN for one batch element, lane-dense (Cout, HW) layout.

    x_ref : (1, C, (H+3)*Wq)  zero-padded image, spatially flattened.
    wb_ref: (9, Cout, C)      combined 3x3 weights (1x1 branch on centre tap).
    bb_ref: (Cout, 1)         branch bias.
    wh_ref: (1, Cout)         1x1 head weight.
    bh_ref: (1, 1)            head bias.
    o_ref : (1, 1, L)         density map, L = H*Wq (garbage in the 2 pad cols).
    """
    x = x_ref[0]                                   # (C, (H+3)*Wq)
    cout = bb_ref.shape[0]

    acc = jnp.zeros((cout, L), jnp.float32)
    for t in range(9):                             # 9 shifted-slice matmuls
        dy, dx = divmod(t, 3)
        s = dy * Wq + dx
        acc = acc + jnp.dot(wb_ref[t], x[:, s:s + L],
                            preferred_element_type=jnp.float32)

    feat = jnp.maximum(acc + bb_ref[...], 0.0)     # (Cout, L), ReLU in vregs
    dens = jnp.dot(wh_ref[...], feat,
                   preferred_element_type=jnp.float32) + bh_ref[...]   # (1, L)
    o_ref[0] = dens.astype(o_ref.dtype)


def _loss_kernel(p_ref, g_ref, mse_ref, ssim_ref, *,
                 H, W, win, mse_denom, ssim_denom):
    """Fused MSE + SSIM statistics: reads pred and gt exactly once per batch.

    p_ref, g_ref: (1, H+10, W+10) maps zero-padded by 5 (SSIM 'same' padding;
                  the zero pad contributes nothing to the MSE sum).
    Accumulates over the batch grid axis; finalizes mean MSE and 1 - mean SSIM.
    """
    b = pl.program_id(0)

    @pl.when(b == 0)
    def _():
        mse_ref[...] = jnp.zeros_like(mse_ref)
        ssim_ref[...] = jnp.zeros_like(ssim_ref)

    x = p_ref[0]                                   # (Hs, Ws)
    y = g_ref[0]

    d = x - y
    mse_ref[...] += jnp.sum(d * d)[None, None]

    ksz = len(win)

    def gfilt(img):                                # separable 11-tap gaussian
        h = win[0] * img[:, 0:W]                   # horizontal pass  -> (Hs, W)
        for k in range(1, ksz):
            h = h + win[k] * img[:, k:k + W]
        v = win[0] * h[0:H, :]                     # vertical pass    -> (H, W)
        for k in range(1, ksz):
            v = v + win[k] * h[k:k + H, :]
        return v

    mu1 = gfilt(x)
    mu2 = gfilt(y)
    e11 = gfilt(x * x)
    e22 = gfilt(y * y)
    e12 = gfilt(x * y)

    c1 = 0.01 ** 2
    c2 = 0.03 ** 2
    mu1mu2 = mu1 * mu2
    sigma1 = e11 - mu1 * mu1
    sigma2 = e22 - mu2 * mu2
    sigma12 = e12 - mu1mu2
    num = (2.0 * mu1mu2 + c1) * (2.0 * sigma12 + c2)
    den = (mu1 * mu1 + mu2 * mu2 + c1) * (sigma1 + sigma2 + c2)
    ssim_ref[...] += jnp.sum(num / den)[None, None]

    @pl.when(b == pl.num_programs(0) - 1)
    def _():
        mse_ref[...] = mse_ref[...] / mse_denom
        ssim_ref[...] = 1.0 - ssim_ref[...] / ssim_denom


# -----------------------------------------------------------------------------
# pallas_call wrappers
# -----------------------------------------------------------------------------
def ccn_forward(img_nchw, params):
    """Representative SANet-like CCN, fully fused into one pallas_call."""
    N, C, H, W = img_nchw.shape
    cmid = params["b1"].shape[0]
    cout = 2 * cmid
    Wq = W + 2
    L = H * Wq
    M = (H + 3) * Wq                               # extra bottom row: slice slack

    wb, bb, wh, bh = _pack_params(params, C, cmid)

    # Zero-pad (top 1, bottom 2, left 1, right 1) and flatten spatially (glue).
    xp = jnp.pad(img_nchw, ((0, 0), (0, 0), (1, 2), (1, 1)))
    x_flat = xp.reshape(N, C, M)

    dens_flat = pl.pallas_call(
        functools.partial(_ccn_kernel, Wq=Wq, L=L),
        out_shape=jax.ShapeDtypeStruct((N, 1, L), jnp.float32),
        grid=(N,),
        in_specs=[
            pl.BlockSpec((1, C, M), lambda n: (n, 0, 0)),
            pl.BlockSpec((9, cout, C), lambda n: (0, 0, 0)),
            pl.BlockSpec((cout, 1), lambda n: (0, 0)),
            pl.BlockSpec((1, cout), lambda n: (0, 0)),
            pl.BlockSpec((1, 1), lambda n: (0, 0)),
        ],
        out_specs=pl.BlockSpec((1, 1, L), lambda n: (n, 0, 0)),
        compiler_params=pltpu.CompilerParams(dimension_semantics=("parallel",)),
    )(x_flat, wb, bb, wh, bh)

    # Drop the 2 garbage pad columns; return NCHW like the torch module (glue).
    dens = dens_flat.reshape(N, 1, H, Wq)[:, :, :, :W]
    return dens


def combined_loss(pred_nhw, gt_nhw, window_size=11, sigma=1.5):
    """Returns (MSE(pred, gt), 1 - SSIM(pred, gt)) in a single fused kernel."""
    N, H, W = pred_nhw.shape
    r = window_size // 2
    Hs, Ws = H + 2 * r, W + 2 * r
    win = _gaussian_window(window_size, sigma)     # tuple of python floats

    pred_pad = jnp.pad(pred_nhw, ((0, 0), (r, r), (r, r)))
    gt_pad = jnp.pad(gt_nhw, ((0, 0), (r, r), (r, r)))

    mse, one_minus_ssim = pl.pallas_call(
        functools.partial(_loss_kernel, H=H, W=W, win=win,
                          mse_denom=float(N * H * W),
                          ssim_denom=float(N * H * W)),
        out_shape=(jax.ShapeDtypeStruct((1, 1), jnp.float32),
                   jax.ShapeDtypeStruct((1, 1), jnp.float32)),
        grid=(N,),
        in_specs=[
            pl.BlockSpec((1, Hs, Ws), lambda n: (n, 0, 0)),
            pl.BlockSpec((1, Hs, Ws), lambda n: (n, 0, 0)),
        ],
        out_specs=(pl.BlockSpec((1, 1), lambda n: (0, 0)),
                   pl.BlockSpec((1, 1), lambda n: (0, 0))),
        compiler_params=pltpu.CompilerParams(dimension_semantics=("arbitrary",)),
    )(pred_pad, gt_pad)
    return mse[0, 0], one_minus_ssim[0, 0]


# -----------------------------------------------------------------------------
# Glue: gaussian window, weight packing, full forward
# -----------------------------------------------------------------------------
def _gaussian_window(size=11, sigma=1.5):
    half = size // 2
    g = [math.exp(-((i - half) ** 2) / (2.0 * sigma ** 2)) for i in range(size)]
    s = sum(g)
    return tuple(v / s for v in g)


def _pack_params(params, cin, cmid):
    """Merge the 1x1 and 3x3 branches into one (9, 2*cmid, cin) conv weight."""
    cout = 2 * cmid
    w2 = params["w2"].reshape(9, cin, cmid)                   # tap-major, c, o
    wb = jnp.zeros((9, cout, cin), jnp.float32)
    wb = wb.at[:, cmid:, :].set(jnp.transpose(w2, (0, 2, 1)))  # 3x3 branch
    wb = wb.at[4, :cmid, :].set(params["w1"].T)                # 1x1 = centre tap
    bb = jnp.concatenate([params["b1"], params["b2"]]).reshape(cout, 1)
    wh = params["w3"].T                                        # (1, 2*cmid)
    bh = params["b3"].reshape(1, 1)
    return wb, bb, wh, bh


def crowd_counter_forward(img_nchw, gt_map, params):
    """Mirrors CrowdCounter.forward: returns density_map plus (loss_1, loss_2)."""
    density_map = ccn_forward(img_nchw, params)                # (N, 1, H, W)
    pred = density_map[:, 0]                                   # .squeeze()
    loss_1, loss_2 = combined_loss(pred, gt_map)               # MSE, 1 - SSIM
    return density_map, loss_1, loss_2


def init_params(key, cin, cmid=8):
    k1, k2, k3 = jax.random.split(key, 3)
    return {
        # 1x1 branch: (Cin, cmid); 3x3 branch: (9*Cin, cmid) tap-major;
        # head: (2*cmid, 1) on concat([branch1, branch2]).
        "w1": 0.1 * jax.random.normal(k1, (cin, cmid), jnp.float32),
        "b1": jnp.zeros((cmid,), jnp.float32),
        "w2": 0.1 * jax.random.normal(k2, (9 * cin, cmid), jnp.float32),
        "b2": jnp.zeros((cmid,), jnp.float32),
        "w3": 0.1 * jax.random.normal(k3, (2 * cmid, 1), jnp.float32),
        "b3": jnp.zeros((1,), jnp.float32),
    }


if __name__ == "__main__":
    key = jax.random.PRNGKey(0)
    k_img, k_gt, k_par = jax.random.split(key, 3)

    N, C, H, W = 2, 3, 16, 16
    img = jax.random.normal(k_img, (N, C, H, W), jnp.float32)
    gt_map = jax.nn.relu(jax.random.normal(k_gt, (N, H, W), jnp.float32))
    params = init_params(k_par, C)

    fwd = jax.jit(crowd_counter_forward)
    density_map, loss_1, loss_2 = fwd(img, gt_map, params)
    jax.block_until_ready((density_map, loss_1, loss_2))

    assert density_map.shape == (N, 1, H, W)
    assert loss_1.shape == () and loss_2.shape == ()
    print("KERNEL_OK")
</pallas_src>

<mosaic_0001>
module attributes {stable_mosaic.version = 11 : i64} {
  func.func @_ccn_kernel(%arg0: i32, %arg1: memref<1x3x342xf32, #tpu.memory_space<vmem>>, %arg2: memref<9x16x3xf32, #tpu.memory_space<vmem>>, %arg3: memref<16x1xf32, #tpu.memory_space<vmem>>, %arg4: memref<1x16xf32, #tpu.memory_space<vmem>>, %arg5: memref<1x1xf32, #tpu.memory_space<vmem>>, %arg6: memref<1x1x288xf32, #tpu.memory_space<vmem>>) attributes {dimension_semantics = [#tpu.dimension_semantics<parallel>], iteration_bounds = array<i64: 2>, scalar_prefetch = 0 : i64, scratch_operands = 0 : i64, tpu.core_type = #tpu.core_type<tc>, window_params = [{transform_indices = @transform_0, window_bounds = array<i64: 1, 3, 342>}, {pipeline_mode = #tpu.pipeline_mode<synchronous>, transform_indices = @transform_1, window_bounds = array<i64: 9, 16, 3>}, {pipeline_mode = #tpu.pipeline_mode<synchronous>, transform_indices = @transform_2, window_bounds = array<i64: 16, 1>}, {pipeline_mode = #tpu.pipeline_mode<synchronous>, transform_indices = @transform_3, window_bounds = array<i64: 1, 16>}, {pipeline_mode = #tpu.pipeline_mode<synchronous>, transform_indices = @transform_4, window_bounds = array<i64: 1, 1>}, {transform_indices = @transform_5, window_bounds = array<i64: 1, 1, 288>}]} {
    %c0 = arith.constant 0 : index
    %c0_0 = arith.constant 0 : index
    %c0_1 = arith.constant 0 : index
    %0 = vector.load %arg1[%c0, %c0_0, %c0_1] : memref<1x3x342xf32, #tpu.memory_space<vmem>>, vector<1x3x342xf32>
    %1 = vector.shape_cast %0 : vector<1x3x342xf32> to vector<3x342xf32>
    %cst = arith.constant 0.000000e+00 : f32
    %2 = vector.broadcast %cst : f32 to vector<16x288xf32>
    %c0_2 = arith.constant 0 : index
    %c0_3 = arith.constant 0 : index
    %c0_4 = arith.constant 0 : index
    %3 = vector.load %arg2[%c0_2, %c0_3, %c0_4] : memref<9x16x3xf32, #tpu.memory_space<vmem>>, vector<1x16x3xf32>
    %4 = vector.shape_cast %3 : vector<1x16x3xf32> to vector<16x3xf32>
    %5 = vector.extract_strided_slice %1 {offsets = [0, 0], sizes = [3, 288], strides = [1, 1]} : vector<3x342xf32> to vector<3x288xf32>
    %cst_5 = arith.constant dense<0.000000e+00> : vector<16x288xf32>
    %6 = tpu.matmul %4, %5, %cst_5 {dimension_numbers = #tpu.dot_dimension_numbers<[1], [0], [0], [1], [0, 0, 1, 1], [], []>} : vector<16x3xf32>, vector<3x288xf32>, vector<16x288xf32> -> vector<16x288xf32>
    %7 = arith.addf %2, %6 : vector<16x288xf32>
    %c1 = arith.constant 1 : index
    %c0_6 = arith.constant 0 : index
    %c0_7 = arith.constant 0 : index
    %8 = vector.load %arg2[%c1, %c0_6, %c0_7] : memref<9x16x3xf32, #tpu.memory_space<vmem>>, vector<1x16x3xf32>
    %9 = vector.shape_cast %8 : vector<1x16x3xf32> to vector<16x3xf32>
    %10 = vector.extract_strided_slice %1 {offsets = [0, 1], sizes = [3, 288], strides = [1, 1]} : vector<3x342xf32> to vector<3x288xf32>
    %cst_8 = arith.constant dense<0.000000e+00> : vector<16x288xf32>
    %11 = tpu.matmul %9, %10, %cst_8 {dimension_numbers = #tpu.dot_dimension_numbers<[1], [0], [0], [1], [0, 0, 1, 1], [], []>} : vector<16x3xf32>, vector<3x288xf32>, vector<16x288xf32> -> vector<16x288xf32>
    %12 = arith.addf %7, %11 : vector<16x288xf32>
    %c2 = arith.constant 2 : index
    %c0_9 = arith.constant 0 : index
    %c0_10 = arith.constant 0 : index
    %13 = vector.load %arg2[%c2, %c0_9, %c0_10] : memref<9x16x3xf32, #tpu.memory_space<vmem>>, vector<1x16x3xf32>
    %14 = vector.shape_cast %13 : vector<1x16x3xf32> to vector<16x3xf32>
    %15 = vector.extract_strided_slice %1 {offsets = [0, 2], sizes = [3, 288], strides = [1, 1]} : vector<3x342xf32> to vector<3x288xf32>
    %cst_11 = arith.constant dense<0.000000e+00> : vector<16x288xf32>
    %16 = tpu.matmul %14, %15, %cst_11 {dimension_numbers = #tpu.dot_dimension_numbers<[1], [0], [0], [1], [0, 0, 1, 1], [], []>} : vector<16x3xf32>, vector<3x288xf32>, vector<16x288xf32> -> vector<16x288xf32>
    %17 = arith.addf %12, %16 : vector<16x288xf32>
    %c3 = arith.constant 3 : index
    %c0_12 = arith.constant 0 : index
    %c0_13 = arith.constant 0 : index
    %18 = vector.load %arg2[%c3, %c0_12, %c0_13] : memref<9x16x3xf32, #tpu.memory_space<vmem>>, vector<1x16x3xf32>
    %19 = vector.shape_cast %18 : vector<1x16x3xf32> to vector<16x3xf32>
    %20 = vector.extract_strided_slice %1 {offsets = [0, 18], sizes = [3, 288], strides = [1, 1]} : vector<3x342xf32> to vector<3x288xf32>
    %cst_14 = arith.constant dense<0.000000e+00> : vector<16x288xf32>
    %21 = tpu.matmul %19, %20, %cst_14 {dimension_numbers = #tpu.dot_dimension_numbers<[1], [0], [0], [1], [0, 0, 1, 1], [], []>} : vector<16x3xf32>, vector<3x288xf32>, vector<16x288xf32> -> vector<16x288xf32>
    %22 = arith.addf %17, %21 : vector<16x288xf32>
    %c4 = arith.constant 4 : index
    %c0_15 = arith.constant 0 : index
    %c0_16 = arith.constant 0 : index
    %23 = vector.load %arg2[%c4, %c0_15, %c0_16] : memref<9x16x3xf32, #tpu.memory_space<vmem>>, vector<1x16x3xf32>
    %24 = vector.shape_cast %23 : vector<1x16x3xf32> to vector<16x3xf32>
    %25 = vector.extract_strided_slice %1 {offsets = [0, 19], sizes = [3, 288], strides = [1, 1]} : vector<3x342xf32> to vector<3x288xf32>
    %cst_17 = arith.constant dense<0.000000e+00> : vector<16x288xf32>
    %26 = tpu.matmul %24, %25, %cst_17 {dimension_numbers = #tpu.dot_dimension_numbers<[1], [0], [0], [1], [0, 0, 1, 1], [], []>} : vector<16x3xf32>, vector<3x288xf32>, vector<16x288xf32> -> vector<16x288xf32>
    %27 = arith.addf %22, %26 : vector<16x288xf32>
    %c5 = arith.constant 5 : index
    %c0_18 = arith.constant 0 : index
    %c0_19 = arith.constant 0 : index
    %28 = vector.load %arg2[%c5, %c0_18, %c0_19] : memref<9x16x3xf32, #tpu.memory_space<vmem>>, vector<1x16x3xf32>
    %29 = vector.shape_cast %28 : vector<1x16x3xf32> to vector<16x3xf32>
    %30 = vector.extract_strided_slice %1 {offsets = [0, 20], sizes = [3, 288], strides = [1, 1]} : vector<3x342xf32> to vector<3x288xf32>
    %cst_20 = arith.constant dense<0.000000e+00> : vector<16x288xf32>
    %31 = tpu.matmul %29, %30, %cst_20 {dimension_numbers = #tpu.dot_dimension_numbers<[1], [0], [0], [1], [0, 0, 1, 1], [], []>} : vector<16x3xf32>, vector<3x288xf32>, vector<16x288xf32> -> vector<16x288xf32>
    %32 = arith.addf %27, %31 : vector<16x288xf32>
    %c6 = arith.constant 6 : index
    %c0_21 = arith.constant 0 : index
    %c0_22 = arith.constant 0 : index
    %33 = vector.load %arg2[%c6, %c0_21, %c0_22] : memref<9x16x3xf32, #tpu.memory_space<vmem>>, vector<1x16x3xf32>
    %34 = vector.shape_cast %33 : vector<1x16x3xf32> to vector<16x3xf32>
    %35 = vector.extract_strided_slice %1 {offsets = [0, 36], sizes = [3, 288], strides = [1, 1]} : vector<3x342xf32> to vector<3x288xf32>
    %cst_23 = arith.constant dense<0.000000e+00> : vector<16x288xf32>
    %36 = tpu.matmul %34, %35, %cst_23 {dimension_numbers = #tpu.dot_dimension_numbers<[1], [0], [0], [1], [0, 0, 1, 1], [], []>} : vector<16x3xf32>, vector<3x288xf32>, vector<16x288xf32> -> vector<16x288xf32>
    %37 = arith.addf %32, %36 : vector<16x288xf32>
    %c7 = arith.constant 7 : index
    %c0_24 = arith.constant 0 : index
    %c0_25 = arith.constant 0 : index
    %38 = vector.load %arg2[%c7, %c0_24, %c0_25] : memref<9x16x3xf32, #tpu.memory_space<vmem>>, vector<1x16x3xf32>
    %39 = vector.shape_cast %38 : vector<1x16x3xf32> to vector<16x3xf32>
    %40 = vector.extract_strided_slice %1 {offsets = [0, 37], sizes = [3, 288], strides = [1, 1]} : vector<3x342xf32> to vector<3x288xf32>
    %cst_26 = arith.constant dense<0.000000e+00> : vector<16x288xf32>
    %41 = tpu.matmul %39, %40, %cst_26 {dimension_numbers = #tpu.dot_dimension_numbers<[1], [0], [0], [1], [0, 0, 1, 1], [], []>} : vector<16x3xf32>, vector<3x288xf32>, vector<16x288xf32> -> vector<16x288xf32>
    %42 = arith.addf %37, %41 : vector<16x288xf32>
    %c8 = arith.constant 8 : index
    %c0_27 = arith.constant 0 : index
    %c0_28 = arith.constant 0 : index
    %43 = vector.load %arg2[%c8, %c0_27, %c0_28] : memref<9x16x3xf32, #tpu.memory_space<vmem>>, vector<1x16x3xf32>
    %44 = vector.shape_cast %43 : vector<1x16x3xf32> to vector<16x3xf32>
    %45 = vector.extract_strided_slice %1 {offsets = [0, 38], sizes = [3, 288], strides = [1, 1]} : vector<3x342xf32> to vector<3x288xf32>
    %cst_29 = arith.constant dense<0.000000e+00> : vector<16x288xf32>
    %46 = tpu.matmul %44, %45, %cst_29 {dimension_numbers = #tpu.dot_dimension_numbers<[1], [0], [0], [1], [0, 0, 1, 1], [], []>} : vector<16x3xf32>, vector<3x288xf32>, vector<16x288xf32> -> vector<16x288xf32>
    %47 = arith.addf %42, %46 : vector<16x288xf32>
    %c0_30 = arith.constant 0 : index
    %c0_31 = arith.constant 0 : index
    %48 = vector.load %arg3[%c0_30, %c0_31] : memref<16x1xf32, #tpu.memory_space<vmem>>, vector<16x1xf32>
    %49 = vector.broadcast %48 : vector<16x1xf32> to vector<16x288xf32>
    %50 = arith.addf %47, %49 : vector<16x288xf32>
    %cst_32 = arith.constant 0.000000e+00 : f32
    %51 = vector.broadcast %cst_32 : f32 to vector<16x288xf32>
    %52 = arith.maximumf %50, %51 : vector<16x288xf32>
    %c0_33 = arith.constant 0 : index
    %c0_34 = arith.constant 0 : index
    %53 = vector.load %arg4[%c0_33, %c0_34] : memref<1x16xf32, #tpu.memory_space<vmem>>, vector<1x16xf32>
    %cst_35 = arith.constant dense<0.000000e+00> : vector<1x288xf32>
    %54 = tpu.matmul %53, %52, %cst_35 {dimension_numbers = #tpu.dot_dimension_numbers<[1], [0], [0], [1], [0, 0, 1, 1], [], []>} : vector<1x16xf32>, vector<16x288xf32>, vector<1x288xf32> -> vector<1x288xf32>
    %c0_36 = arith.constant 0 : index
    %c0_37 = arith.constant 0 : index
    %55 = vector.load %arg5[%c0_36, %c0_37] : memref<1x1xf32, #tpu.memory_space<vmem>>, vector<1x1xf32>
    %56 = vector.broadcast %55 : vector<1x1xf32> to vector<1x288xf32>
    %57 = arith.addf %54, %56 : vector<1x288xf32>
    %c0_38 = arith.constant 0 : index
    %c0_39 = arith.constant 0 : index
    %c0_40 = arith.constant 0 : index
    %58 = vector.load %arg6[%c0_38, %c0_39, %c0_40] : memref<1x1x288xf32, #tpu.memory_space<vmem>>, vector<1x1x288xf32>
    %59 = vector.shape_cast %58 : vector<1x1x288xf32> to vector<1x288xf32>
    %60 = vector.shape_cast %57 : vector<1x288xf32> to vector<1x1x288xf32>
    tpu.vector_store %arg6[%c0_38, %c0_39, %c0_40], %60 {strides = array<i32>} : memref<1x1x288xf32, #tpu.memory_space<vmem>>, vector<1x1x288xf32>,
    return
  }
  func.func @transform_0(%arg0: i32) -> (i32, i32, i32) {
    %c0_i32 = arith.constant 0 : i32
    %c0_i32_0 = arith.constant 0 : i32
    %c0_i32_1 = arith.constant 0 : i32
    return %arg0, %c0_i32, %c0_i32_0 : i32, i32, i32
  }
  func.func @transform_1(%arg0: i32) -> (i32, i32, i32) {
    %c0_i32 = arith.constant 0 : i32
    %c0_i32_0 = arith.constant 0 : i32
    %c0_i32_1 = arith.constant 0 : i32
    %c0_i32_2 = arith.constant 0 : i32
    return %c0_i32, %c0_i32_0, %c0_i32_1 : i32, i32, i32
  }
  func.func @transform_2(%arg0: i32) -> (i32, i32) {
    %c0_i32 = arith.constant 0 : i32
    %c0_i32_0 = arith.constant 0 : i32
    %c0_i32_1 = arith.constant 0 : i32
    return %c0_i32, %c0_i32_0 : i32, i32
  }
  func.func @transform_3(%arg0: i32) -> (i32, i32) {
    %c0_i32 = arith.constant 0 : i32
    %c0_i32_0 = arith.constant 0 : i32
    %c0_i32_1 = arith.constant 0 : i32
    return %c0_i32, %c0_i32_0 : i32, i32
  }
  func.func @transform_4(%arg0: i32) -> (i32, i32) {
    %c0_i32 = arith.constant 0 : i32
    %c0_i32_0 = arith.constant 0 : i32
    %c0_i32_1 = arith.constant 0 : i32
    return %c0_i32, %c0_i32_0 : i32, i32
  }
  func.func @transform_5(%arg0: i32) -> (i32, i32, i32) {
    %c0_i32 = arith.constant 0 : i32
    %c0_i32_0 = arith.constant 0 : i32
    %c0_i32_1 = arith.constant 0 : i32
    return %arg0, %c0_i32, %c0_i32_0 : i32, i32, i32
  }
}

module attributes {stable_mosaic.version = 11 : i64} {
  func.func @_loss_kernel(%arg0: i32, %arg1: memref<1x26x26xf32, #tpu.memory_space<vmem>>, %arg2: memref<1x26x26xf32, #tpu.memory_space<vmem>>, %arg3: memref<1x1xf32, #tpu.memory_space<vmem>>, %arg4: memref<1x1xf32, #tpu.memory_space<vmem>>) attributes {dimension_semantics = [#tpu.dimension_semantics<arbitrary>], iteration_bounds = array<i64: 2>, scalar_prefetch = 0 : i64, scratch_operands = 0 : i64, tpu.core_type = #tpu.core_type<tc>, window_params = [{transform_indices = @transform_0, window_bounds = array<i64: 1, 26, 26>}, {transform_indices = @transform_1, window_bounds = array<i64: 1, 26, 26>}, {pipeline_mode = #tpu.pipeline_mode<synchronous>, transform_indices = @transform_2, window_bounds = array<i64: 1, 1>}, {pipeline_mode = #tpu.pipeline_mode<synchronous>, transform_indices = @transform_3, window_bounds = array<i64: 1, 1>}]} {
    %c0_i32 = arith.constant 0 : i32
    %0 = arith.cmpi eq, %arg0, %c0_i32 : i32
    %1 = arith.extui %0 : i1 to i32
    %c0_i32_0 = arith.constant 0 : i32
    %2 = arith.cmpi ne, %1, %c0_i32_0 : i32
    scf.if %2 {
      %cst_132 = arith.constant 0.000000e+00 : f32
      %486 = vector.broadcast %cst_132 : f32 to vector<1x1xf32>
      %c0_133 = arith.constant 0 : index
      %c0_134 = arith.constant 0 : index
      %487 = vector.load %arg3[%c0_133, %c0_134] : memref<1x1xf32, #tpu.memory_space<vmem>>, vector<1x1xf32>
      tpu.vector_store %arg3[%c0_133, %c0_134], %486 {strides = array<i32>} : memref<1x1xf32, #tpu.memory_space<vmem>>, vector<1x1xf32>,
      %cst_135 = arith.constant 0.000000e+00 : f32
      %488 = vector.broadcast %cst_135 : f32 to vector<1x1xf32>
      %c0_136 = arith.constant 0 : index
      %c0_137 = arith.constant 0 : index
      %489 = vector.load %arg4[%c0_136, %c0_137] : memref<1x1xf32, #tpu.memory_space<vmem>>, vector<1x1xf32>
      tpu.vector_store %arg4[%c0_136, %c0_137], %488 {strides = array<i32>} : memref<1x1xf32, #tpu.memory_space<vmem>>, vector<1x1xf32>,
    } else {
    }
    %c0 = arith.constant 0 : index
    %c0_1 = arith.constant 0 : index
    %c0_2 = arith.constant 0 : index
    %3 = vector.load %arg1[%c0, %c0_1, %c0_2] : memref<1x26x26xf32, #tpu.memory_space<vmem>>, vector<1x26x26xf32>
    %4 = vector.shape_cast %3 : vector<1x26x26xf32> to vector<26x26xf32>
    %c0_3 = arith.constant 0 : index
    %c0_4 = arith.constant 0 : index
    %c0_5 = arith.constant 0 : index
    %5 = vector.load %arg2[%c0_3, %c0_4, %c0_5] : memref<1x26x26xf32, #tpu.memory_space<vmem>>, vector<1x26x26xf32>
    %6 = vector.shape_cast %5 : vector<1x26x26xf32> to vector<26x26xf32>
    %7 = arith.subf %4, %6 : vector<26x26xf32>
    %c0_6 = arith.constant 0 : index
    %c0_7 = arith.constant 0 : index
    %8 = vector.load %arg3[%c0_6, %c0_7] : memref<1x1xf32, #tpu.memory_space<vmem>>, vector<1x1xf32>
    %9 = arith.mulf %7, %7 : vector<26x26xf32>
    %10 = vector.shape_cast %9 : vector<26x26xf32> to vector<1x26x26xf32>
    %cst = arith.constant dense<0.000000e+00> : vector<1xf32>
    %11 = vector.multi_reduction <add>, %10, %cst [1, 2] : vector<1x26x26xf32> to vector<1xf32>
    %12 = vector.shape_cast %11 : vector<1xf32> to vector<1x1x1xf32>
    %13 = vector.extract %12[0, 0, 0] : f32 from vector<1x1x1xf32>
    %14 = vector.broadcast %13 : f32 to vector<1x1xf32>
    %15 = arith.addf %8, %14 : vector<1x1xf32>
    %c0_8 = arith.constant 0 : index
    %c0_9 = arith.constant 0 : index
    %16 = vector.load %arg3[%c0_8, %c0_9] : memref<1x1xf32, #tpu.memory_space<vmem>>, vector<1x1xf32>
    tpu.vector_store %arg3[%c0_8, %c0_9], %15 {strides = array<i32>} : memref<1x1xf32, #tpu.memory_space<vmem>>, vector<1x1xf32>,
    %17 = vector.extract_strided_slice %4 {offsets = [0, 0], sizes = [26, 16], strides = [1, 1]} : vector<26x26xf32> to vector<26x16xf32>
    %cst_10 = arith.constant 0.00102838012 : f32
    %18 = vector.broadcast %cst_10 : f32 to vector<26x16xf32>
    %19 = arith.mulf %18, %17 : vector<26x16xf32>
    %20 = vector.extract_strided_slice %4 {offsets = [0, 1], sizes = [26, 16], strides = [1, 1]} : vector<26x26xf32> to vector<26x16xf32>
    %cst_11 = arith.constant 0.00759875821 : f32
    %21 = vector.broadcast %cst_11 : f32 to vector<26x16xf32>
    %22 = arith.mulf %21, %20 : vector<26x16xf32>
    %23 = arith.addf %19, %22 : vector<26x16xf32>
    %24 = vector.extract_strided_slice %4 {offsets = [0, 2], sizes = [26, 16], strides = [1, 1]} : vector<26x26xf32> to vector<26x16xf32>
    %cst_12 = arith.constant 0.0360007733 : f32
    %25 = vector.broadcast %cst_12 : f32 to vector<26x16xf32>
    %26 = arith.mulf %25, %24 : vector<26x16xf32>
    %27 = arith.addf %23, %26 : vector<26x16xf32>
    %28 = vector.extract_strided_slice %4 {offsets = [0, 3], sizes = [26, 16], strides = [1, 1]} : vector<26x26xf32> to vector<26x16xf32>
    %cst_13 = arith.constant 0.109360687 : f32
    %29 = vector.broadcast %cst_13 : f32 to vector<26x16xf32>
    %30 = arith.mulf %29, %28 : vector<26x16xf32>
    %31 = arith.addf %27, %30 : vector<26x16xf32>
    %32 = vector.extract_strided_slice %4 {offsets = [0, 4], sizes = [26, 16], strides = [1, 1]} : vector<26x26xf32> to vector<26x16xf32>
    %cst_14 = arith.constant 0.213005543 : f32
    %33 = vector.broadcast %cst_14 : f32 to vector<26x16xf32>
    %34 = arith.mulf %33, %32 : vector<26x16xf32>
    %35 = arith.addf %31, %34 : vector<26x16xf32>
    %36 = vector.extract_strided_slice %4 {offsets = [0, 5], sizes = [26, 16], strides = [1, 1]} : vector<26x26xf32> to vector<26x16xf32>
    %cst_15 = arith.constant 0.266011715 : f32
    %37 = vector.broadcast %cst_15 : f32 to vector<26x16xf32>
    %38 = arith.mulf %37, %36 : vector<26x16xf32>
    %39 = arith.addf %35, %38 : vector<26x16xf32>
    %40 = vector.extract_strided_slice %4 {offsets = [0, 6], sizes = [26, 16], strides = [1, 1]} : vector<26x26xf32> to vector<26x16xf32>
    %cst_16 = arith.constant 0.213005543 : f32
    %41 = vector.broadcast %cst_16 : f32 to vector<26x16xf32>
    %42 = arith.mulf %41, %40 : vector<26x16xf32>
    %43 = arith.addf %39, %42 : vector<26x16xf32>
    %44 = vector.extract_strided_slice %4 {offsets = [0, 7], sizes = [26, 16], strides = [1, 1]} : vector<26x26xf32> to vector<26x16xf32>
    %cst_17 = arith.constant 0.109360687 : f32
    %45 = vector.broadcast %cst_17 : f32 to vector<26x16xf32>
    %46 = arith.mulf %45, %44 : vector<26x16xf32>
    %47 = arith.addf %43, %46 : vector<26x16xf32>
    %48 = vector.extract_strided_slice %4 {offsets = [0, 8], sizes = [26, 16], strides = [1, 1]} : vector<26x26xf32> to vector<26x16xf32>
    %cst_18 = arith.constant 0.0360007733 : f32
    %49 = vector.broadcast %cst_18 : f32 to vector<26x16xf32>
    %50 = arith.mulf %49, %48 : vector<26x16xf32>
    %51 = arith.addf %47, %50 : vector<26x16xf32>
    %52 = vector.extract_strided_slice %4 {offsets = [0, 9], sizes = [26, 16], strides = [1, 1]} : vector<26x26xf32> to vector<26x16xf32>
    %cst_19 = arith.constant 0.00759875821 : f32
    %53 = vector.broadcast %cst_19 : f32 to vector<26x16xf32>
    %54 = arith.mulf %53, %52 : vector<26x16xf32>
    %55 = arith.addf %51, %54 : vector<26x16xf32>
    %56 = vector.extract_strided_slice %4 {offsets = [0, 10], sizes = [26, 16], strides = [1, 1]} : vector<26x26xf32> to vector<26x16xf32>
    %cst_20 = arith.constant 0.00102838012 : f32
    %57 = vector.broadcast %cst_20 : f32 to vector<26x16xf32>
    %58 = arith.mulf %57, %56 : vector<26x16xf32>
    %59 = arith.addf %55, %58 : vector<26x16xf32>
    %60 = vector.extract_strided_slice %59 {offsets = [0, 0], sizes = [16, 16], strides = [1, 1]} : vector<26x16xf32> to vector<16x16xf32>
    %cst_21 = arith.constant 0.00102838012 : f32
    %61 = vector.broadcast %cst_21 : f32 to vector<16x16xf32>
    %62 = arith.mulf %61, %60 : vector<16x16xf32>
    %63 = vector.extract_strided_slice %59 {offsets = [1, 0], sizes = [16, 16], strides = [1, 1]} : vector<26x16xf32> to vector<16x16xf32>
    %cst_22 = arith.constant 0.00759875821 : f32
    %64 = vector.broadcast %cst_22 : f32 to vector<16x16xf32>
    %65 = arith.mulf %64, %63 : vector<16x16xf32>
    %66 = arith.addf %62, %65 : vector<16x16xf32>
    %67 = vector.extract_strided_slice %59 {offsets = [2, 0], sizes = [16, 16], strides = [1, 1]} : vector<26x16xf32> to vector<16x16xf32>
    %cst_23 = arith.constant 0.0360007733 : f32
    %68 = vector.broadcast %cst_23 : f32 to vector<16x16xf32>
    %69 = arith.mulf %68, %67 : vector<16x16xf32>
    %70 = arith.addf %66, %69 : vector<16x16xf32>
    %71 = vector.extract_strided_slice %59 {offsets = [3, 0], sizes = [16, 16], strides = [1, 1]} : vector<26x16xf32> to vector<16x16xf32>
    %cst_24 = arith.constant 0.109360687 : f32
    %72 = vector.broadcast %cst_24 : f32 to vector<16x16xf32>
    %73 = arith.mulf %72, %71 : vector<16x16xf32>
    %74 = arith.addf %70, %73 : vector<16x16xf32>
    %75 = vector.extract_strided_slice %59 {offsets = [4, 0], sizes = [16, 16], strides = [1, 1]} : vector<26x16xf32> to vector<16x16xf32>
    %cst_25 = arith.constant 0.213005543 : f32
    %76 = vector.broadcast %cst_25 : f32 to vector<16x16xf32>
    %77 = arith.mulf %76, %75 : vector<16x16xf32>
    %78 = arith.addf %74, %77 : vector<16x16xf32>
    %79 = vector.extract_strided_slice %59 {offsets = [5, 0], sizes = [16, 16], strides = [1, 1]} : vector<26x16xf32> to vector<16x16xf32>
    %cst_26 = arith.constant 0.266011715 : f32
    %80 = vector.broadcast %cst_26 : f32 to vector<16x16xf32>
    %81 = arith.mulf %80, %79 : vector<16x16xf32>
    %82 = arith.addf %78, %81 : vector<16x16xf32>
    %83 = vector.extract_strided_slice %59 {offsets = [6, 0], sizes = [16, 16], strides = [1, 1]} : vector<26x16xf32> to vector<16x16xf32>
    %cst_27 = arith.constant 0.213005543 : f32
    %84 = vector.broadcast %cst_27 : f32 to vector<16x16xf32>
    %85 = arith.mulf %84, %83 : vector<16x16xf32>
    %86 = arith.addf %82, %85 : vector<16x16xf32>
    %87 = vector.extract_strided_slice %59 {offsets = [7, 0], sizes = [16, 16], strides = [1, 1]} : vector<26x16xf32> to vector<16x16xf32>
    %cst_28 = arith.constant 0.109360687 : f32
    %88 = vector.broadcast %cst_28 : f32 to vector<16x16xf32>
    %89 = arith.mulf %88, %87 : vector<16x16xf32>
    %90 = arith.addf %86, %89 : vector<16x16xf32>
    %91 = vector.extract_strided_slice %59 {offsets = [8, 0], sizes = [16, 16], strides = [1, 1]} : vector<26x16xf32> to vector<16x16xf32>
    %cst_29 = arith.constant 0.0360007733 : f32
    %92 = vector.broadcast %cst_29 : f32 to vector<16x16xf32>
    %93 = arith.mulf %92, %91 : vector<16x16xf32>
    %94 = arith.addf %90, %93 : vector<16x16xf32>
    %95 = vector.extract_strided_slice %59 {offsets = [9, 0], sizes = [16, 16], strides = [1, 1]} : vector<26x16xf32> to vector<16x16xf32>
    %cst_30 = arith.constant 0.00759875821 : f32
    %96 = vector.broadcast %cst_30 : f32 to vector<16x16xf32>
    %97 = arith.mulf %96, %95 : vector<16x16xf32>
    %98 = arith.addf %94, %97 : vector<16x16xf32>
    %99 = vector.extract_strided_slice %59 {offsets = [10, 0], sizes = [16, 16], strides = [1, 1]} : vector<26x16xf32> to vector<16x16xf32>
    %cst_31 = arith.constant 0.00102838012 : f32
    %100 = vector.broadcast %cst_31 : f32 to vector<16x16xf32>
    %101 = arith.mulf %100, %99 : vector<16x16xf32>
    %102 = arith.addf %98, %101 : vector<16x16xf32>
    %103 = vector.extract_strided_slice %6 {offsets = [0, 0], sizes = [26, 16], strides = [1, 1]} : vector<26x26xf32> to vector<26x16xf32>
    %cst_32 = arith.constant 0.00102838012 : f32
    %104 = vector.broadcast %cst_32 : f32 to vector<26x16xf32>
    %105 = arith.mulf %104, %103 : vector<26x16xf32>
    %106 = vector.extract_strided_slice %6 {offsets = [0, 1], sizes = [26, 16], strides = [1, 1]} : vector<26x26xf32> to vector<26x16xf32>
    %cst_33 = arith.constant 0.00759875821 : f32
    %107 = vector.broadcast %cst_33 : f32 to vector<26x16xf32>
    %108 = arith.mulf %107, %106 : vector<26x16xf32>
    %109 = arith.addf %105, %108 : vector<26x16xf32>
    %110 = vector.extract_strided_slice %6 {offsets = [0, 2], sizes = [26, 16], strides = [1, 1]} : vector<26x26xf32> to vector<26x16xf32>
    %cst_34 = arith.constant 0.0360007733 : f32
    %111 = vector.broadcast %cst_34 : f32 to vector<26x16xf32>
    %112 = arith.mulf %111, %110 : vector<26x16xf32>
    %113 = arith.addf %109, %112 : vector<26x16xf32>
    %114 = vector.extract_strided_slice %6 {offsets = [0, 3], sizes = [26, 16], strides = [1, 1]} : vector<26x26xf32> to vector<26x16xf32>
    %cst_35 = arith.constant 0.109360687 : f32
    %115 = vector.broadcast %cst_35 : f32 to vector<26x16xf32>
    %116 = arith.mulf %115, %114 : vector<26x16xf32>
    %117 = arith.addf %113, %116 : vector<26x16xf32>
    %118 = vector.extract_strided_slice %6 {offsets = [0, 4], sizes = [26, 16], strides = [1, 1]} : vector<26x26xf32> to vector<26x16xf32>
    %cst_36 = arith.constant 0.213005543 : f32
    %119 = vector.broadcast %cst_36 : f32 to vector<26x16xf32>
    %120 = arith.mulf %119, %118 : vector<26x16xf32>
    %121 = arith.addf %117, %120 : vector<26x16xf32>
    %122 = vector.extract_strided_slice %6 {offsets = [0, 5], sizes = [26, 16], strides = [1, 1]} : vector<26x26xf32> to vector<26x16xf32>
    %cst_37 = arith.constant 0.266011715 : f32
    %123 = vector.broadcast %cst_37 : f32 to vector<26x16xf32>
    %124 = arith.mulf %123, %122 : vector<26x16xf32>
    %125 = arith.addf %121, %124 : vector<26x16xf32>
    %126 = vector.extract_strided_slice %6 {offsets = [0, 6], sizes = [26, 16], strides = [1, 1]} : vector<26x26xf32> to vector<26x16xf32>
    %cst_38 = arith.constant 0.213005543 : f32
    %127 = vector.broadcast %cst_38 : f32 to vector<26x16xf32>
    %128 = arith.mulf %127, %126 : vector<26x16xf32>
    %129 = arith.addf %125, %128 : vector<26x16xf32>
    %130 = vector.extract_strided_slice %6 {offsets = [0, 7], sizes = [26, 16], strides = [1, 1]} : vector<26x26xf32> to vector<26x16xf32>
    %cst_39 = arith.constant 0.109360687 : f32
    %131 = vector.broadcast %cst_39 : f32 to vector<26x16xf32>
    %132 = arith.mulf %131, %130 : vector<26x16xf32>
    %133 = arith.addf %129, %132 : vector<26x16xf32>
    %134 = vector.extract_strided_slice %6 {offsets = [0, 8], sizes = [26, 16], strides = [1, 1]} : vector<26x26xf32> to vector<26x16xf32>
    %cst_40 = arith.constant 0.0360007733 : f32
    %135 = vector.broadcast %cst_40 : f32 to vector<26x16xf32>
    %136 = arith.mulf %135, %134 : vector<26x16xf32>
    %137 = arith.addf %133, %136 : vector<26x16xf32>
    %138 = vector.extract_strided_slice %6 {offsets = [0, 9], sizes = [26, 16], strides = [1, 1]} : vector<26x26xf32> to vector<26x16xf32>
    %cst_41 = arith.constant 0.00759875821 : f32
    %139 = vector.broadcast %cst_41 : f32 to vector<26x16xf32>
    %140 = arith.mulf %139, %138 : vector<26x16xf32>
    %141 = arith.addf %137, %140 : vector<26x16xf32>
    %142 = vector.extract_strided_slice %6 {offsets = [0, 10], sizes = [26, 16], strides = [1, 1]} : vector<26x26xf32> to vector<26x16xf32>
    %cst_42 = arith.constant 0.00102838012 : f32
    %143 = vector.broadcast %cst_42 : f32 to vector<26x16xf32>
    %144 = arith.mulf %143, %142 : vector<26x16xf32>
    %145 = arith.addf %141, %144 : vector<26x16xf32>
    %146 = vector.extract_strided_slice %145 {offsets = [0, 0], sizes = [16, 16], strides = [1, 1]} : vector<26x16xf32> to vector<16x16xf32>
    %cst_43 = arith.constant 0.00102838012 : f32
    %147 = vector.broadcast %cst_43 : f32 to vector<16x16xf32>
    %148 = arith.mulf %147, %146 : vector<16x16xf32>
    %149 = vector.extract_strided_slice %145 {offsets = [1, 0], sizes = [16, 16], strides = [1, 1]} : vector<26x16xf32> to vector<16x16xf32>
    %cst_44 = arith.constant 0.00759875821 : f32
    %150 = vector.broadcast %cst_44 : f32 to vector<16x16xf32>
    %151 = arith.mulf %150, %149 : vector<16x16xf32>
    %152 = arith.addf %148, %151 : vector<16x16xf32>
    %153 = vector.extract_strided_slice %145 {offsets = [2, 0], sizes = [16, 16], strides = [1, 1]} : vector<26x16xf32> to vector<16x16xf32>
    %cst_45 = arith.constant 0.0360007733 : f32
    %154 = vector.broadcast %cst_45 : f32 to vector<16x16xf32>
    %155 = arith.mulf %154, %153 : vector<16x16xf32>
    %156 = arith.addf %152, %155 : vector<16x16xf32>
    %157 = vector.extract_strided_slice %145 {offsets = [3, 0], sizes = [16, 16], strides = [1, 1]} : vector<26x16xf32> to vector<16x16xf32>
    %cst_46 = arith.constant 0.109360687 : f32
    %158 = vector.broadcast %cst_46 : f32 to vector<16x16xf32>
    %159 = arith.mulf %158, %157 : vector<16x16xf32>
    %160 = arith.addf %156, %159 : vector<16x16xf32>
    %161 = vector.extract_strided_slice %145 {offsets = [4, 0], sizes = [16, 16], strides = [1, 1]} : vector<26x16xf32> to vector<16x16xf32>
    %cst_47 = arith.constant 0.213005543 : f32
    %162 = vector.broadcast %cst_47 : f32 to vector<16x16xf32>
    %163 = arith.mulf %162, %161 : vector<16x16xf32>
    %164 = arith.addf %160, %163 : vector<16x16xf32>
    %165 = vector.extract_strided_slice %145 {offsets = [5, 0], sizes = [16, 16], strides = [1, 1]} : vector<26x16xf32> to vector<16x16xf32>
    %cst_48 = arith.constant 0.266011715 : f32
    %166 = vector.broadcast %cst_48 : f32 to vector<16x16xf32>
    %167 = arith.mulf %166, %165 : vector<16x16xf32>
    %168 = arith.addf %164, %167 : vector<16x16xf32>
    %169 = vector.extract_strided_slice %145 {offsets = [6, 0], sizes = [16, 16], strides = [1, 1]} : vector<26x16xf32> to vector<16x16xf32>
    %cst_49 = arith.constant 0.213005543 : f32
    %170 = vector.broadcast %cst_49 : f32 to vector<16x16xf32>
    %171 = arith.mulf %170, %169 : vector<16x16xf32>
    %172 = arith.addf %168, %171 : vector<16x16xf32>
    %173 = vector.extract_strided_slice %145 {offsets = [7, 0], sizes = [16, 16], strides = [1, 1]} : vector<26x16xf32> to vector<16x16xf32>
    %cst_50 = arith.constant 0.109360687 : f32
    %174 = vector.broadcast %cst_50 : f32 to vector<16x16xf32>
    %175 = arith.mulf %174, %173 : vector<16x16xf32>
    %176 = arith.addf %172, %175 : vector<16x16xf32>
    %177 = vector.extract_strided_slice %145 {offsets = [8, 0], sizes = [16, 16], strides = [1, 1]} : vector<26x16xf32> to vector<16x16xf32>
    %cst_51 = arith.constant 0.0360007733 : f32
    %178 = vector.broadcast %cst_51 : f32 to vector<16x16xf32>
    %179 = arith.mulf %178, %177 : vector<16x16xf32>
    %180 = arith.addf %176, %179 : vector<16x16xf32>
    %181 = vector.extract_strided_slice %145 {offsets = [9, 0], sizes = [16, 16], strides = [1, 1]} : vector<26x16xf32> to vector<16x16xf32>
    %cst_52 = arith.constant 0.00759875821 : f32
    %182 = vector.broadcast %cst_52 : f32 to vector<16x16xf32>
    %183 = arith.mulf %182, %181 : vector<16x16xf32>
    %184 = arith.addf %180, %183 : vector<16x16xf32>
    %185 = vector.extract_strided_slice %145 {offsets = [10, 0], sizes = [16, 16], strides = [1, 1]} : vector<26x16xf32> to vector<16x16xf32>
    %cst_53 = arith.constant 0.00102838012 : f32
    %186 = vector.broadcast %cst_53 : f32 to vector<16x16xf32>
    %187 = arith.mulf %186, %185 : vector<16x16xf32>
    %188 = arith.addf %184, %187 : vector<16x16xf32>
    %189 = arith.mulf %4, %4 : vector<26x26xf32>
    %190 = vector.extract_strided_slice %189 {offsets = [0, 0], sizes = [26, 16], strides = [1, 1]} : vector<26x26xf32> to vector<26x16xf32>
    %cst_54 = arith.constant 0.00102838012 : f32
    %191 = vector.broadcast %cst_54 : f32 to vector<26x16xf32>
    %192 = arith.mulf %191, %190 : vector<26x16xf32>
    %193 = vector.extract_strided_slice %189 {offsets = [0, 1], sizes = [26, 16], strides = [1, 1]} : vector<26x26xf32> to vector<26x16xf32>
    %cst_55 = arith.constant 0.00759875821 : f32
    %194 = vector.broadcast %cst_55 : f32 to vector<26x16xf32>
    %195 = arith.mulf %194, %193 : vector<26x16xf32>
    %196 = arith.addf %192, %195 : vector<26x16xf32>
    %197 = vector.extract_strided_slice %189 {offsets = [0, 2], sizes = [26, 16], strides = [1, 1]} : vector<26x26xf32> to vector<26x16xf32>
    %cst_56 = arith.constant 0.0360007733 : f32
    %198 = vector.broadcast %cst_56 : f32 to vector<26x16xf32>
    %199 = arith.mulf %198, %197 : vector<26x16xf32>
    %200 = arith.addf %196, %199 : vector<26x16xf32>
    %201 = vector.extract_strided_slice %189 {offsets = [0, 3], sizes = [26, 16], strides = [1, 1]} : vector<26x26xf32> to vector<26x16xf32>
    %cst_57 = arith.constant 0.109360687 : f32
    %202 = vector.broadcast %cst_57 : f32 to vector<26x16xf32>
    %203 = arith.mulf %202, %201 : vector<26x16xf32>
    %204 = arith.addf %200, %203 : vector<26x16xf32>
    %205 = vector.extract_strided_slice %189 {offsets = [0, 4], sizes = [26, 16], strides = [1, 1]} : vector<26x26xf32> to vector<26x16xf32>
    %cst_58 = arith.constant 0.213005543 : f32
    %206 = vector.broadcast %cst_58 : f32 to vector<26x16xf32>
    %207 = arith.mulf %206, %205 : vector<26x16xf32>
    %208 = arith.addf %204, %207 : vector<26x16xf32>
    %209 = vector.extract_strided_slice %189 {offsets = [0, 5], sizes = [26, 16], strides = [1, 1]} : vector<26x26xf32> to vector<26x16xf32>
    %cst_59 = arith.constant 0.266011715 : f32
    %210 = vector.broadcast %cst_59 : f32 to vector<26x16xf32>
    %211 = arith.mulf %210, %209 : vector<26x16xf32>
    %212 = arith.addf %208, %211 : vector<26x16xf32>
    %213 = vector.extract_strided_slice %189 {offsets = [0, 6], sizes = [26, 16], strides = [1, 1]} : vector<26x26xf32> to vector<26x16xf32>
    %cst_60 = arith.constant 0.213005543 : f32
    %214 = vector.broadcast %cst_60 : f32 to vector<26x16xf32>
    %215 = arith.mulf %214, %213 : vector<26x16xf32>
    %216 = arith.addf %212, %215 : vector<26x16xf32>
    %217 = vector.extract_strided_slice %189 {offsets = [0, 7], sizes = [26, 16], strides = [1, 1]} : vector<26x26xf32> to vector<26x16xf32>
    %cst_61 = arith.constant 0.109360687 : f32
    %218 = vector.broadcast %cst_61 : f32 to vector<26x16xf32>
    %219 = arith.mulf %218, %217 : vector<26x16xf32>
    %220 = arith.addf %216, %219 : vector<26x16xf32>
    %221 = vector.extract_strided_slice %189 {offsets = [0, 8], sizes = [26, 16], strides = [1, 1]} : vector<26x26xf32> to vector<26x16xf32>
    %cst_62 = arith.constant 0.0360007733 : f32
    %222 = vector.broadcast %cst_62 : f32 to vector<26x16xf32>
    %223 = arith.mulf %222, %221 : vector<26x16xf32>
    %224 = arith.addf %220, %223 : vector<26x16xf32>
    %225 = vector.extract_strided_slice %189 {offsets = [0, 9], sizes = [26, 16], strides = [1, 1]} : vector<26x26xf32> to vector<26x16xf32>
    %cst_63 = arith.constant 0.00759875821 : f32
    %226 = vector.broadcast %cst_63 : f32 to vector<26x16xf32>
    %227 = arith.mulf %226, %225 : vector<26x16xf32>
    %228 = arith.addf %224, %227 : vector<26x16xf32>
    %229 = vector.extract_strided_slice %189 {offsets = [0, 10], sizes = [26, 16], strides = [1, 1]} : vector<26x26xf32> to vector<26x16xf32>
    %cst_64 = arith.constant 0.00102838012 : f32
    %230 = vector.broadcast %cst_64 : f32 to vector<26x16xf32>
    %231 = arith.mulf %230, %229 : vector<26x16xf32>
    %232 = arith.addf %228, %231 : vector<26x16xf32>
    %233 = vector.extract_strided_slice %232 {offsets = [0, 0], sizes = [16, 16], strides = [1, 1]} : vector<26x16xf32> to vector<16x16xf32>
    %cst_65 = arith.constant 0.00102838012 : f32
    %234 = vector.broadcast %cst_65 : f32 to vector<16x16xf32>
    %235 = arith.mulf %234, %233 : vector<16x16xf32>
    %236 = vector.extract_strided_slice %232 {offsets = [1, 0], sizes = [16, 16], strides = [1, 1]} : vector<26x16xf32> to vector<16x16xf32>
    %cst_66 = arith.constant 0.00759875821 : f32
    %237 = vector.broadcast %cst_66 : f32 to vector<16x16xf32>
    %238 = arith.mulf %237, %236 : vector<16x16xf32>
    %239 = arith.addf %235, %238 : vector<16x16xf32>
    %240 = vector.extract_strided_slice %232 {offsets = [2, 0], sizes = [16, 16], strides = [1, 1]} : vector<26x16xf32> to vector<16x16xf32>
    %cst_67 = arith.constant 0.0360007733 : f32
    %241 = vector.broadcast %cst_67 : f32 to vector<16x16xf32>
    %242 = arith.mulf %241, %240 : vector<16x16xf32>
    %243 = arith.addf %239, %242 : vector<16x16xf32>
    %244 = vector.extract_strided_slice %232 {offsets = [3, 0], sizes = [16, 16], strides = [1, 1]} : vector<26x16xf32> to vector<16x16xf32>
    %cst_68 = arith.constant 0.109360687 : f32
    %245 = vector.broadcast %cst_68 : f32 to vector<16x16xf32>
    %246 = arith.mulf %245, %244 : vector<16x16xf32>
    %247 = arith.addf %243, %246 : vector<16x16xf32>
    %248 = vector.extract_strided_slice %232 {offsets = [4, 0], sizes = [16, 16], strides = [1, 1]} : vector<26x16xf32> to vector<16x16xf32>
    %cst_69 = arith.constant 0.213005543 : f32
    %249 = vector.broadcast %cst_69 : f32 to vector<16x16xf32>
    %250 = arith.mulf %249, %248 : vector<16x16xf32>
    %251 = arith.addf %247, %250 : vector<16x16xf32>
    %252 = vector.extract_strided_slice %232 {offsets = [5, 0], sizes = [16, 16], strides = [1, 1]} : vector<26x16xf32> to vector<16x16xf32>
    %cst_70 = arith.constant 0.266011715 : f32
    %253 = vector.broadcast %cst_70 : f32 to vector<16x16xf32>
    %254 = arith.mulf %253, %252 : vector<16x16xf32>
    %255 = arith.addf %251, %254 : vector<16x16xf32>
    %256 = vector.extract_strided_slice %232 {offsets = [6, 0], sizes = [16, 16], strides = [1, 1]} : vector<26x16xf32> to vector<16x16xf32>
    %cst_71 = arith.constant 0.213005543 : f32
    %257 = vector.broadcast %cst_71 : f32 to vector<16x16xf32>
    %258 = arith.mulf %257, %256 : vector<16x16xf32>
    %259 = arith.addf %255, %258 : vector<16x16xf32>
    %260 = vector.extract_strided_slice %232 {offsets = [7, 0], sizes = [16, 16], strides = [1, 1]} : vector<26x16xf32> to vector<16x16xf32>
    %cst_72 = arith.constant 0.109360687 : f32
    %261 = vector.broadcast %cst_72 : f32 to vector<16x16xf32>
    %262 = arith.mulf %261, %260 : vector<16x16xf32>
    %263 = arith.addf %259, %262 : vector<16x16xf32>
    %264 = vector.extract_strided_slice %232 {offsets = [8, 0], sizes = [16, 16], strides = [1, 1]} : vector<26x16xf32> to vector<16x16xf32>
    %cst_73 = arith.constant 0.0360007733 : f32
    %265 = vector.broadcast %cst_73 : f32 to vector<16x16xf32>
    %266 = arith.mulf %265, %264 : vector<16x16xf32>
    %267 = arith.addf %263, %266 : vector<16x16xf32>
    %268 = vector.extract_strided_slice %232 {offsets = [9, 0], sizes = [16, 16], strides = [1, 1]} : vector<26x16xf32> to vector<16x16xf32>
    %cst_74 = arith.constant 0.00759875821 : f32
    %269 = vector.broadcast %cst_74 : f32 to vector<16x16xf32>
    %270 = arith.mulf %269, %268 : vector<16x16xf32>
    %271 = arith.addf %267, %270 : vector<16x16xf32>
    %272 = vector.extract_strided_slice %232 {offsets = [10, 0], sizes = [16, 16], strides = [1, 1]} : vector<26x16xf32> to vector<16x16xf32>
    %cst_75 = arith.constant 0.00102838012 : f32
    %273 = vector.broadcast %cst_75 : f32 to vector<16x16xf32>
    %274 = arith.mulf %273, %272 : vector<16x16xf32>
    %275 = arith.addf %271, %274 : vector<16x16xf32>
    %276 = arith.mulf %6, %6 : vector<26x26xf32>
    %277 = vector.extract_strided_slice %276 {offsets = [0, 0], sizes = [26, 16], strides = [1, 1]} : vector<26x26xf32> to vector<26x16xf32>
    %cst_76 = arith.constant 0.00102838012 : f32
    %278 = vector.broadcast %cst_76 : f32 to vector<26x16xf32>
    %279 = arith.mulf %278, %277 : vector<26x16xf32>
    %280 = vector.extract_strided_slice %276 {offsets = [0, 1], sizes = [26, 16], strides = [1, 1]} : vector<26x26xf32> to vector<26x16xf32>
    %cst_77 = arith.constant 0.00759875821 : f32
    %281 = vector.broadcast %cst_77 : f32 to vector<26x16xf32>
    %282 = arith.mulf %281, %280 : vector<26x16xf32>
    %283 = arith.addf %279, %282 : vector<26x16xf32>
    %284 = vector.extract_strided_slice %276 {offsets = [0, 2], sizes = [26, 16], strides = [1, 1]} : vector<26x26xf32> to vector<26x16xf32>
    %cst_78 = arith.constant 0.0360007733 : f32
    %285 = vector.broadcast %cst_78 : f32 to vector<26x16xf32>
    %286 = arith.mulf %285, %284 : vector<26x16xf32>
    %287 = arith.addf %283, %286 : vector<26x16xf32>
    %288 = vector.extract_strided_slice %276 {offsets = [0, 3], sizes = [26, 16], strides = [1, 1]} : vector<26x26xf32> to vector<26x16xf32>
    %cst_79 = arith.constant 0.109360687 : f32
    %289 = vector.broadcast %cst_79 : f32 to vector<26x16xf32>
    %290 = arith.mulf %289, %288 : vector<26x16xf32>
    %291 = arith.addf %287, %290 : vector<26x16xf32>
    %292 = vector.extract_strided_slice %276 {offsets = [0, 4], sizes = [26, 16], strides = [1, 1]} : vector<26x26xf32> to vector<26x16xf32>
    %cst_80 = arith.constant 0.213005543 : f32
    %293 = vector.broadcast %cst_80 : f32 to vector<26x16xf32>
    %294 = arith.mulf %293, %292 : vector<26x16xf32>
    %295 = arith.addf %291, %294 : vector<26x16xf32>
    %296 = vector.extract_strided_slice %276 {offsets = [0, 5], sizes = [26, 16], strides = [1, 1]} : vector<26x26xf32> to vector<26x16xf32>
    %cst_81 = arith.constant 0.266011715 : f32
    %297 = vector.broadcast %cst_81 : f32 to vector<26x16xf32>
    %298 = arith.mulf %297, %296 : vector<26x16xf32>
    %299 = arith.addf %295, %298 : vector<26x16xf32>
    %300 = vector.extract_strided_slice %276 {offsets = [0, 6], sizes = [26, 16], strides = [1, 1]} : vector<26x26xf32> to vector<26x16xf32>
    %cst_82 = arith.constant 0.213005543 : f32
    %301 = vector.broadcast %cst_82 : f32 to vector<26x16xf32>
    %302 = arith.mulf %301, %300 : vector<26x16xf32>
    %303 = arith.addf %299, %302 : vector<26x16xf32>
    %304 = vector.extract_strided_slice %276 {offsets = [0, 7], sizes = [26, 16], strides = [1, 1]} : vector<26x26xf32> to vector<26x16xf32>
    %cst_83 = arith.constant 0.109360687 : f32
    %305 = vector.broadcast %cst_83 : f32 to vector<26x16xf32>
    %306 = arith.mulf %305, %304 : vector<26x16xf32>
    %307 = arith.addf %303, %306 : vector<26x16xf32>
    %308 = vector.extract_strided_slice %276 {offsets = [0, 8], sizes = [26, 16], strides = [1, 1]} : vector<26x26xf32> to vector<26x16xf32>
    %cst_84 = arith.constant 0.0360007733 : f32
    %309 = vector.broadcast %cst_84 : f32 to vector<26x16xf32>
    %310 = arith.mulf %309, %308 : vector<26x16xf32>
    %311 = arith.addf %307, %310 : vector<26x16xf32>
    %312 = vector.extract_strided_slice %276 {offsets = [0, 9], sizes = [26, 16], strides = [1, 1]} : vector<26x26xf32> to vector<26x16xf32>
    %cst_85 = arith.constant 0.00759875821 : f32
    %313 = vector.broadcast %cst_85 : f32 to vector<26x16xf32>
    %314 = arith.mulf %313, %312 : vector<26x16xf32>
    %315 = arith.addf %311, %314 : vector<26x16xf32>
    %316 = vector.extract_strided_slice %276 {offsets = [0, 10], sizes = [26, 16], strides = [1, 1]} : vector<26x26xf32> to vector<26x16xf32>
    %cst_86 = arith.constant 0.00102838012 : f32
    %317 = vector.broadcast %cst_86 : f32 to vector<26x16xf32>
    %318 = arith.mulf %317, %316 : vector<26x16xf32>
    %319 = arith.addf %315, %318 : vector<26x16xf32>
    %320 = vector.extract_strided_slice %319 {offsets = [0, 0], sizes = [16, 16], strides = [1, 1]} : vector<26x16xf32> to vector<16x16xf32>
    %cst_87 = arith.constant 0.00102838012 : f32
    %321 = vector.broadcast %cst_87 : f32 to vector<16x16xf32>
    %322 = arith.mulf %321, %320 : vector<16x16xf32>
    %323 = vector.extract_strided_slice %319 {offsets = [1, 0], sizes = [16, 16], strides = [1, 1]} : vector<26x16xf32> to vector<16x16xf32>
    %cst_88 = arith.constant 0.00759875821 : f32
    %324 = vector.broadcast %cst_88 : f32 to vector<16x16xf32>
    %325 = arith.mulf %324, %323 : vector<16x16xf32>
    %326 = arith.addf %322, %325 : vector<16x16xf32>
    %327 = vector.extract_strided_slice %319 {offsets = [2, 0], sizes = [16, 16], strides = [1, 1]} : vector<26x16xf32> to vector<16x16xf32>
    %cst_89 = arith.constant 0.0360007733 : f32
    %328 = vector.broadcast %cst_89 : f32 to vector<16x16xf32>
    %329 = arith.mulf %328, %327 : vector<16x16xf32>
    %330 = arith.addf %326, %329 : vector<16x16xf32>
    %331 = vector.extract_strided_slice %319 {offsets = [3, 0], sizes = [16, 16], strides = [1, 1]} : vector<26x16xf32> to vector<16x16xf32>
    %cst_90 = arith.constant 0.109360687 : f32
    %332 = vector.broadcast %cst_90 : f32 to vector<16x16xf32>
    %333 = arith.mulf %332, %331 : vector<16x16xf32>
    %334 = arith.addf %330, %333 : vector<16x16xf32>
    %335 = vector.extract_strided_slice %319 {offsets = [4, 0], sizes = [16, 16], strides = [1, 1]} : vector<26x16xf32> to vector<16x16xf32>
    %cst_91 = arith.constant 0.213005543 : f32
    %336 = vector.broadcast %cst_91 : f32 to vector<16x16xf32>
    %337 = arith.mulf %336, %335 : vector<16x16xf32>
    %338 = arith.addf %334, %337 : vector<16x16xf32>
    %339 = vector.extract_strided_slice %319 {offsets = [5, 0], sizes = [16, 16], strides = [1, 1]} : vector<26x16xf32> to vector<16x16xf32>
    %cst_92 = arith.constant 0.266011715 : f32
    %340 = vector.broadcast %cst_92 : f32 to vector<16x16xf32>
    %341 = arith.mulf %340, %339 : vector<16x16xf32>
    %342 = arith.addf %338, %341 : vector<16x16xf32>
    %343 = vector.extract_strided_slice %319 {offsets = [6, 0], sizes = [16, 16], strides = [1, 1]} : vector<26x16xf32> to vector<16x16xf32>
    %cst_93 = arith.constant 0.213005543 : f32
    %344 = vector.broadcast %cst_93 : f32 to vector<16x16xf32>
    %345 = arith.mulf %344, %343 : vector<16x16xf32>
    %346 = arith.addf %342, %345 : vector<16x16xf32>
    %347 = vector.extract_strided_slice %319 {offsets = [7, 0], sizes = [16, 16], strides = [1, 1]} : vector<26x16xf32> to vector<16x16xf32>
    %cst_94 = arith.constant 0.109360687 : f32
    %348 = vector.broadcast %cst_94 : f32 to vector<16x16xf32>
    %349 = arith.mulf %348, %347 : vector<16x16xf32>
    %350 = arith.addf %346, %349 : vector<16x16xf32>
    %351 = vector.extract_strided_slice %319 {offsets = [8, 0], sizes = [16, 16], strides = [1, 1]} : vector<26x16xf32> to vector<16x16xf32>
    %cst_95 = arith.constant 0.0360007733 : f32
    %352 = vector.broadcast %cst_95 : f32 to vector<16x16xf32>
    %353 = arith.mulf %352, %351 : vector<16x16xf32>
    %354 = arith.addf %350, %353 : vector<16x16xf32>
    %355 = vector.extract_strided_slice %319 {offsets = [9, 0], sizes = [16, 16], strides = [1, 1]} : vector<26x16xf32> to vector<16x16xf32>
    %cst_96 = arith.constant 0.00759875821 : f32
    %356 = vector.broadcast %cst_96 : f32 to vector<16x16xf32>
    %357 = arith.mulf %356, %355 : vector<16x16xf32>
    %358 = arith.addf %354, %357 : vector<16x16xf32>
    %359 = vector.extract_strided_slice %319 {offsets = [10, 0], sizes = [16, 16], strides = [1, 1]} : vector<26x16xf32> to vector<16x16xf32>
    %cst_97 = arith.constant 0.00102838012 : f32
    %360 = vector.broadcast %cst_97 : f32 to vector<16x16xf32>
    %361 = arith.mulf %360, %359 : vector<16x16xf32>
    %362 = arith.addf %358, %361 : vector<16x16xf32>
    %363 = arith.mulf %4, %6 : vector<26x26xf32>
    %364 = vector.extract_strided_slice %363 {offsets = [0, 0], sizes = [26, 16], strides = [1, 1]} : vector<26x26xf32> to vector<26x16xf32>
    %cst_98 = arith.constant 0.00102838012 : f32
    %365 = vector.broadcast %cst_98 : f32 to vector<26x16xf32>
    %366 = arith.mulf %365, %364 : vector<26x16xf32>
    %367 = vector.extract_strided_slice %363 {offsets = [0, 1], sizes = [26, 16], strides = [1, 1]} : vector<26x26xf32> to vector<26x16xf32>
    %cst_99 = arith.constant 0.00759875821 : f32
    %368 = vector.broadcast %cst_99 : f32 to vector<26x16xf32>
    %369 = arith.mulf %368, %367 : vector<26x16xf32>
    %370 = arith.addf %366, %369 : vector<26x16xf32>
    %371 = vector.extract_strided_slice %363 {offsets = [0, 2], sizes = [26, 16], strides = [1, 1]} : vector<26x26xf32> to vector<26x16xf32>
    %cst_100 = arith.constant 0.0360007733 : f32
    %372 = vector.broadcast %cst_100 : f32 to vector<26x16xf32>
    %373 = arith.mulf %372, %371 : vector<26x16xf32>
    %374 = arith.addf %370, %373 : vector<26x16xf32>
    %375 = vector.extract_strided_slice %363 {offsets = [0, 3], sizes = [26, 16], strides = [1, 1]} : vector<26x26xf32> to vector<26x16xf32>
    %cst_101 = arith.constant 0.109360687 : f32
    %376 = vector.broadcast %cst_101 : f32 to vector<26x16xf32>
    %377 = arith.mulf %376, %375 : vector<26x16xf32>
    %378 = arith.addf %374, %377 : vector<26x16xf32>
    %379 = vector.extract_strided_slice %363 {offsets = [0, 4], sizes = [26, 16], strides = [1, 1]} : vector<26x26xf32> to vector<26x16xf32>
    %cst_102 = arith.constant 0.213005543 : f32
    %380 = vector.broadcast %cst_102 : f32 to vector<26x16xf32>
    %381 = arith.mulf %380, %379 : vector<26x16xf32>
    %382 = arith.addf %378, %381 : vector<26x16xf32>
    %383 = vector.extract_strided_slice %363 {offsets = [0, 5], sizes = [26, 16], strides = [1, 1]} : vector<26x26xf32> to vector<26x16xf32>
    %cst_103 = arith.constant 0.266011715 : f32
    %384 = vector.broadcast %cst_103 : f32 to vector<26x16xf32>
    %385 = arith.mulf %384, %383 : vector<26x16xf32>
    %386 = arith.addf %382, %385 : vector<26x16xf32>
    %387 = vector.extract_strided_slice %363 {offsets = [0, 6], sizes = [26, 16], strides = [1, 1]} : vector<26x26xf32> to vector<26x16xf32>
    %cst_104 = arith.constant 0.213005543 : f32
    %388 = vector.broadcast %cst_104 : f32 to vector<26x16xf32>
    %389 = arith.mulf %388, %387 : vector<26x16xf32>
    %390 = arith.addf %386, %389 : vector<26x16xf32>
    %391 = vector.extract_strided_slice %363 {offsets = [0, 7], sizes = [26, 16], strides = [1, 1]} : vector<26x26xf32> to vector<26x16xf32>
    %cst_105 = arith.constant 0.109360687 : f32
    %392 = vector.broadcast %cst_105 : f32 to vector<26x16xf32>
    %393 = arith.mulf %392, %391 : vector<26x16xf32>
    %394 = arith.addf %390, %393 : vector<26x16xf32>
    %395 = vector.extract_strided_slice %363 {offsets = [0, 8], sizes = [26, 16], strides = [1, 1]} : vector<26x26xf32> to vector<26x16xf32>
    %cst_106 = arith.constant 0.0360007733 : f32
    %396 = vector.broadcast %cst_106 : f32 to vector<26x16xf32>
    %397 = arith.mulf %396, %395 : vector<26x16xf32>
    %398 = arith.addf %394, %397 : vector<26x16xf32>
    %399 = vector.extract_strided_slice %363 {offsets = [0, 9], sizes = [26, 16], strides = [1, 1]} : vector<26x26xf32> to vector<26x16xf32>
    %cst_107 = arith.constant 0.00759875821 : f32
    %400 = vector.broadcast %cst_107 : f32 to vector<26x16xf32>
    %401 = arith.mulf %400, %399 : vector<26x16xf32>
    %402 = arith.addf %398, %401 : vector<26x16xf32>
    %403 = vector.extract_strided_slice %363 {offsets = [0, 10], sizes = [26, 16], strides = [1, 1]} : vector<26x26xf32> to vector<26x16xf32>
    %cst_108 = arith.constant 0.00102838012 : f32
    %404 = vector.broadcast %cst_108 : f32 to vector<26x16xf32>
    %405 = arith.mulf %404, %403 : vector<26x16xf32>
    %406 = arith.addf %402, %405 : vector<26x16xf32>
    %407 = vector.extract_strided_slice %406 {offsets = [0, 0], sizes = [16, 16], strides = [1, 1]} : vector<26x16xf32> to vector<16x16xf32>
    %cst_109 = arith.constant 0.00102838012 : f32
    %408 = vector.broadcast %cst_109 : f32 to vector<16x16xf32>
    %409 = arith.mulf %408, %407 : vector<16x16xf32>
    %410 = vector.extract_strided_slice %406 {offsets = [1, 0], sizes = [16, 16], strides = [1, 1]} : vector<26x16xf32> to vector<16x16xf32>
    %cst_110 = arith.constant 0.00759875821 : f32
    %411 = vector.broadcast %cst_110 : f32 to vector<16x16xf32>
    %412 = arith.mulf %411, %410 : vector<16x16xf32>
    %413 = arith.addf %409, %412 : vector<16x16xf32>
    %414 = vector.extract_strided_slice %406 {offsets = [2, 0], sizes = [16, 16], strides = [1, 1]} : vector<26x16xf32> to vector<16x16xf32>
    %cst_111 = arith.constant 0.0360007733 : f32
    %415 = vector.broadcast %cst_111 : f32 to vector<16x16xf32>
    %416 = arith.mulf %415, %414 : vector<16x16xf32>
    %417 = arith.addf %413, %416 : vector<16x16xf32>
    %418 = vector.extract_strided_slice %406 {offsets = [3, 0], sizes = [16, 16], strides = [1, 1]} : vector<26x16xf32> to vector<16x16xf32>
    %cst_112 = arith.constant 0.109360687 : f32
    %419 = vector.broadcast %cst_112 : f32 to vector<16x16xf32>
    %420 = arith.mulf %419, %418 : vector<16x16xf32>
    %421 = arith.addf %417, %420 : vector<16x16xf32>
    %422 = vector.extract_strided_slice %406 {offsets = [4, 0], sizes = [16, 16], strides = [1, 1]} : vector<26x16xf32> to vector<16x16xf32>
    %cst_113 = arith.constant 0.213005543 : f32
    %423 = vector.broadcast %cst_113 : f32 to vector<16x16xf32>
    %424 = arith.mulf %423, %422 : vector<16x16xf32>
    %425 = arith.addf %421, %424 : vector<16x16xf32>
    %426 = vector.extract_strided_slice %406 {offsets = [5, 0], sizes = [16, 16], strides = [1, 1]} : vector<26x16xf32> to vector<16x16xf32>
    %cst_114 = arith.constant 0.266011715 : f32
    %427 = vector.broadcast %cst_114 : f32 to vector<16x16xf32>
    %428 = arith.mulf %427, %426 : vector<16x16xf32>
    %429 = arith.addf %425, %428 : vector<16x16xf32>
    %430 = vector.extract_strided_slice %406 {offsets = [6, 0], sizes = [16, 16], strides = [1, 1]} : vector<26x16xf32> to vector<16x16xf32>
    %cst_115 = arith.constant 0.213005543 : f32
    %431 = vector.broadcast %cst_115 : f32 to vector<16x16xf32>
    %432 = arith.mulf %431, %430 : vector<16x16xf32>
    %433 = arith.addf %429, %432 : vector<16x16xf32>
    %434 = vector.extract_strided_slice %406 {offsets = [7, 0], sizes = [16, 16], strides = [1, 1]} : vector<26x16xf32> to vector<16x16xf32>
    %cst_116 = arith.constant 0.109360687 : f32
    %435 = vector.broadcast %cst_116 : f32 to vector<16x16xf32>
    %436 = arith.mulf %435, %434 : vector<16x16xf32>
    %437 = arith.addf %433, %436 : vector<16x16xf32>
    %438 = vector.extract_strided_slice %406 {offsets = [8, 0], sizes = [16, 16], strides = [1, 1]} : vector<26x16xf32> to vector<16x16xf32>
    %cst_117 = arith.constant 0.0360007733 : f32
    %439 = vector.broadcast %cst_117 : f32 to vector<16x16xf32>
    %440 = arith.mulf %439, %438 : vector<16x16xf32>
    %441 = arith.addf %437, %440 : vector<16x16xf32>
    %442 = vector.extract_strided_slice %406 {offsets = [9, 0], sizes = [16, 16], strides = [1, 1]} : vector<26x16xf32> to vector<16x16xf32>
    %cst_118 = arith.constant 0.00759875821 : f32
    %443 = vector.broadcast %cst_118 : f32 to vector<16x16xf32>
    %444 = arith.mulf %443, %442 : vector<16x16xf32>
    %445 = arith.addf %441, %444 : vector<16x16xf32>
    %446 = vector.extract_strided_slice %406 {offsets = [10, 0], sizes = [16, 16], strides = [1, 1]} : vector<26x16xf32> to vector<16x16xf32>
    %cst_119 = arith.constant 0.00102838012 : f32
    %447 = vector.broadcast %cst_119 : f32 to vector<16x16xf32>
    %448 = arith.mulf %447, %446 : vector<16x16xf32>
    %449 = arith.addf %445, %448 : vector<16x16xf32>
    %450 = arith.mulf %102, %188 : vector<16x16xf32>
    %451 = arith.mulf %102, %102 : vector<16x16xf32>
    %452 = arith.subf %275, %451 : vector<16x16xf32>
    %453 = arith.mulf %188, %188 : vector<16x16xf32>
    %454 = arith.subf %362, %453 : vector<16x16xf32>
    %455 = arith.subf %449, %450 : vector<16x16xf32>
    %cst_120 = arith.constant 2.000000e+00 : f32
    %456 = vector.broadcast %cst_120 : f32 to vector<16x16xf32>
    %457 = arith.mulf %456, %450 : vector<16x16xf32>
    %cst_121 = arith.constant 9.99999974E-5 : f32
    %458 = vector.broadcast %cst_121 : f32 to vector<16x16xf32>
    %459 = arith.addf %457, %458 : vector<16x16xf32>
    %cst_122 = arith.constant 2.000000e+00 : f32
    %460 = vector.broadcast %cst_122 : f32 to vector<16x16xf32>
    %461 = arith.mulf %460, %455 : vector<16x16xf32>
    %cst_123 = arith.constant 8.99999984E-4 : f32
    %462 = vector.broadcast %cst_123 : f32 to vector<16x16xf32>
    %463 = arith.addf %461, %462 : vector<16x16xf32>
    %464 = arith.mulf %459, %463 : vector<16x16xf32>
    %465 = arith.mulf %102, %102 : vector<16x16xf32>
    %466 = arith.mulf %188, %188 : vector<16x16xf32>
    %467 = arith.addf %465, %466 : vector<16x16xf32>
    %cst_124 = arith.constant 9.99999974E-5 : f32
    %468 = vector.broadcast %cst_124 : f32 to vector<16x16xf32>
    %469 = arith.addf %467, %468 : vector<16x16xf32>
    %470 = arith.addf %452, %454 : vector<16x16xf32>
    %cst_125 = arith.constant 8.99999984E-4 : f32
    %471 = vector.broadcast %cst_125 : f32 to vector<16x16xf32>
    %472 = arith.addf %470, %471 : vector<16x16xf32>
    %473 = arith.mulf %469, %472 : vector<16x16xf32>
    %c0_126 = arith.constant 0 : index
    %c0_127 = arith.constant 0 : index
    %474 = vector.load %arg4[%c0_126, %c0_127] : memref<1x1xf32, #tpu.memory_space<vmem>>, vector<1x1xf32>
    %475 = arith.divf %464, %473 : vector<16x16xf32>
    %476 = vector.shape_cast %475 : vector<16x16xf32> to vector<1x16x16xf32>
    %cst_128 = arith.constant dense<0.000000e+00> : vector<1xf32>
    %477 = vector.multi_reduction <add>, %476, %cst_128 [1, 2] : vector<1x16x16xf32> to vector<1xf32>
    %478 = vector.shape_cast %477 : vector<1xf32> to vector<1x1x1xf32>
    %479 = vector.extract %478[0, 0, 0] : f32 from vector<1x1x1xf32>
    %480 = vector.broadcast %479 : f32 to vector<1x1xf32>
    %481 = arith.addf %474, %480 : vector<1x1xf32>
    %c0_129 = arith.constant 0 : index
    %c0_130 = arith.constant 0 : index
    %482 = vector.load %arg4[%c0_129, %c0_130] : memref<1x1xf32, #tpu.memory_space<vmem>>, vector<1x1xf32>
    tpu.vector_store %arg4[%c0_129, %c0_130], %481 {strides = array<i32>} : memref<1x1xf32, #tpu.memory_space<vmem>>, vector<1x1xf32>,
    %c1_i32 = arith.constant 1 : i32
    %483 = arith.cmpi eq, %arg0, %c1_i32 : i32
    %484 = arith.extui %483 : i1 to i32
    %c0_i32_131 = arith.constant 0 : i32
    %485 = arith.cmpi ne, %484, %c0_i32_131 : i32
    scf.if %485 {
      %c0_132 = arith.constant 0 : index
      %c0_133 = arith.constant 0 : index
      %486 = vector.load %arg3[%c0_132, %c0_133] : memref<1x1xf32, #tpu.memory_space<vmem>>, vector<1x1xf32>
      %cst_134 = arith.constant 5.120000e+02 : f32
      %487 = vector.broadcast %cst_134 : f32 to vector<1x1xf32>
      %488 = arith.divf %486, %487 : vector<1x1xf32>
      %c0_135 = arith.constant 0 : index
      %c0_136 = arith.constant 0 : index
      %489 = vector.load %arg3[%c0_135, %c0_136] : memref<1x1xf32, #tpu.memory_space<vmem>>, vector<1x1xf32>
      tpu.vector_store %arg3[%c0_135, %c0_136], %488 {strides = array<i32>} : memref<1x1xf32, #tpu.memory_space<vmem>>, vector<1x1xf32>,
      %c0_137 = arith.constant 0 : index
      %c0_138 = arith.constant 0 : index
      %490 = vector.load %arg4[%c0_137, %c0_138] : memref<1x1xf32, #tpu.memory_space<vmem>>, vector<1x1xf32>
      %cst_139 = arith.constant 5.120000e+02 : f32
      %491 = vector.broadcast %cst_139 : f32 to vector<1x1xf32>
      %492 = arith.divf %490, %491 : vector<1x1xf32>
      %cst_140 = arith.constant 1.000000e+00 : f32
      %493 = vector.broadcast %cst_140 : f32 to vector<1x1xf32>
      %494 = arith.subf %493, %492 : vector<1x1xf32>
      %c0_141 = arith.constant 0 : index
      %c0_142 = arith.constant 0 : index
      %495 = vector.load %arg4[%c0_141, %c0_142] : memref<1x1xf32, #tpu.memory_space<vmem>>, vector<1x1xf32>
      tpu.vector_store %arg4[%c0_141, %c0_142], %494 {strides = array<i32>} : memref<1x1xf32, #tpu.memory_space<vmem>>, vector<1x1xf32>,
    } else {
    }
    return
  }
  func.func @transform_0(%arg0: i32) -> (i32, i32, i32) {
    %c0_i32 = arith.constant 0 : i32
    %c0_i32_0 = arith.constant 0 : i32
    %c0_i32_1 = arith.constant 0 : i32
    return %arg0, %c0_i32, %c0_i32_0 : i32, i32, i32
  }
  func.func @transform_1(%arg0: i32) -> (i32, i32, i32) {
    %c0_i32 = arith.constant 0 : i32
    %c0_i32_0 = arith.constant 0 : i32
    %c0_i32_1 = arith.constant 0 : i32
    return %arg0, %c0_i32, %c0_i32_0 : i32, i32, i32
  }
  func.func @transform_2(%arg0: i32) -> (i32, i32) {
    %c0_i32 = arith.constant 0 : i32
    %c0_i32_0 = arith.constant 0 : i32
    %c0_i32_1 = arith.constant 0 : i32
    return %c0_i32, %c0_i32_0 : i32, i32
  }
  func.func @transform_3(%arg0: i32) -> (i32, i32) {
    %c0_i32 = arith.constant 0 : i32
    %c0_i32_0 = arith.constant 0 : i32
    %c0_i32_1 = arith.constant 0 : i32
    return %c0_i32, %c0_i32_0 : i32, i32
  }
}

</mosaic_0001>

<llo_original>
// kernel: crowd_counter_forward.3
$region0: #{crowd_counter_forward.3}
  #allocation0 [shape = 'u32[]', space=smem, size = 0x4, offset = 0x4, fixed_abs, tag = 'smem constant byte address 0x4 - core index']
  #allocation1 [shape = 'u32[144,128]{1,0:T(1,128)}', space=vmem, size = 0x12000, scoped, tag = 'internal scratch']
  %s0 = inlined_call_operand.vmem [shape: f32[2,26,26], index: 0, kind: input, shape index: {}]
  %s1 = inlined_call_operand.vmem [shape: f32[2,26,26], index: 1, kind: input, shape index: {}]
  %s2 = inlined_call_operand.hbm [shape: f32[1,1], index: 2, kind: output, shape index: {0}]
  %s3 = inlined_call_operand.hbm [shape: f32[1,1], index: 3, kind: output, shape index: {1}]
  %4 = xla_tuple %s2, %s3
  %s5 = sld [smem:[#allocation0]]
  $region57: #{crowd_counter_forward.3} parent=0
    _
  %s7 = ssub.s32 1, %s5
  %s8 = scalar_select 0, %s7, %s5
  $region1: #{crowd_counter_forward.3} parent=0
    #allocation2 [shape = 'u8[512]{0}', space=vmem, size = 0x400, scoped, tag = 'output window, operand 0, single buffered']
    #allocation3 [shape = 's32[2]{0}', space=sflag, size = 0x8, scoped, tag = 'scoped memory for crowd_counter_forward.3']
    #allocation4 [shape = 'u8[512]{0}', space=vmem, size = 0x400, scoped, tag = 'output window, operand 1, single buffered']
    #allocation5 [shape = 's32[1]{0}', space=sflag, size = 0x4, scoped, tag = 'scoped memory for crowd_counter_forward.3']
    %9 = vsyncpa [#allocation3], 0
    %10 = vsyncpa [#allocation5], 0
    loop: start=0, step=1, limit=4
    $region2: #{crowd_counter_forward.3} parent=1 // loop_pre_header
      _
    $region3: #{crowd_counter_forward.3} parent=1 // loop_header
      %s12 = sphi 0, %s16
      %p13 = scmp.ge.s32.totalorder %s12, 4
      %s22 = sphi 0, %s24
      %s25 = sphi 0, %s22
      %s26 = sphi 0, %s25
      %s42 = sphi 0, %s26
      %s48 = sphi 0, %s50
      %s51 = sphi 0, %s48
      %s52 = sphi 0, %s51
      %s68 = sphi 0, %s52
      %s72 = sphi 0, %s72
      %s74 = sphi 0, %s72
      %s75 = sphi 0, %s74
      %s89 = sphi 0, %s75
      %s93 = sphi 0, %s93
      %s95 = sphi 0, %s93
      %s96 = sphi 0, %s95
      %s110 = sphi 0, %s96
    $region4: #{crowd_counter_forward.3} parent=1 // loop_header_branch
      %15 = sbr.rel (%p13) target = $region8
    $region5: #{crowd_counter_forward.3} parent=1 // loop_body
      %s17 = ssub.s32 %s12, 1
      %s18 = ssub.s32 %s12, 2
      %s19 = sadd.s32 %s12, 1
      %s20 = ssub.s32 %s12, %s19
      %p21 = scmp.eq.s32.totalorder %s20, 0
      %s23 = sadd.s32 %s22, 1
      %s24 = scalar_select %p21, %s22, %s23
      %p27 = pneg %p21
      %p28 = scmp.eq.s32.totalorder %s12, 1
      %p29 = por %p27, %p28
      %p30 = scmp.ne.s32.totalorder %s22, %s25
      %p31 = scmp.eq.s32.totalorder %s12, 0
      %p32 = por %p30, %p31
      %p33 = scmp.ne.s32.totalorder %s22, %s25
      %p34 = scmp.eq.s32.totalorder %s17, 1
      %p35 = por %p33, %p34
      %p36 = scmp.ne.s32.totalorder %s25, %s26
      %p37 = scmp.eq.s32.totalorder %s17, 0
      %p38 = por %p36, %p37
      %p39 = scmp.ne.s32.totalorder %s25, %s26
      %p40 = scmp.eq.s32.totalorder %s18, 1
      %p41 = por %p39, %p40
      %p43 = scmp.ne.s32.totalorder %s26, %s42
      %p44 = scmp.eq.s32.totalorder %s18, 0
      %p45 = por %p43, %p44
      %s46 = ssub.s32 %s12, %s19
      %p47 = scmp.eq.s32.totalorder %s46, 0
      %s49 = sadd.s32 %s48, 1
      %s50 = scalar_select %p47, %s48, %s49
      %p53 = pneg %p47
      %p54 = scmp.eq.s32.totalorder %s12, 1
      %p55 = por %p53, %p54
      %p56 = scmp.ne.s32.totalorder %s48, %s51
      %p57 = scmp.eq.s32.totalorder %s12, 0
      %p58 = por %p56, %p57
      %p59 = scmp.ne.s32.totalorder %s48, %s51
      %p60 = scmp.eq.s32.totalorder %s17, 1
      %p61 = por %p59, %p60
      %p62 = scmp.ne.s32.totalorder %s51, %s52
      %p63 = scmp.eq.s32.totalorder %s17, 0
      %p64 = por %p62, %p63
      %p65 = scmp.ne.s32.totalorder %s51, %s52
      %p66 = scmp.eq.s32.totalorder %s18, 1
      %p67 = por %p65, %p66
      %p69 = scmp.ne.s32.totalorder %s52, %s68
      %p70 = scmp.eq.s32.totalorder %s18, 0
      %p71 = por %p69, %p70
      %s73 = sadd.s32 %s72, 1
      %p76 = scmp.eq.s32.totalorder %s12, 1
      %p77 = scmp.ne.s32.totalorder %s72, %s74
      %p78 = scmp.eq.s32.totalorder %s12, 0
      %p79 = por %p77, %p78
      %p80 = scmp.ne.s32.totalorder %s72, %s74
      %p81 = scmp.eq.s32.totalorder %s17, 1
      %p82 = por %p80, %p81
      %p83 = scmp.ne.s32.totalorder %s74, %s75
      %p84 = scmp.eq.s32.totalorder %s17, 0
      %p85 = por %p83, %p84
      %p86 = scmp.ne.s32.totalorder %s74, %s75
      %p87 = scmp.eq.s32.totalorder %s18, 1
      %p88 = por %p86, %p87
      %p90 = scmp.ne.s32.totalorder %s75, %s89
      %p91 = scmp.eq.s32.totalorder %s18, 0
      %p92 = por %p90, %p91
      %s94 = sadd.s32 %s93, 1
      %p97 = scmp.eq.s32.totalorder %s12, 1
      %p98 = scmp.ne.s32.totalorder %s93, %s95
      %p99 = scmp.eq.s32.totalorder %s12, 0
      %p100 = por %p98, %p99
      %p101 = scmp.ne.s32.totalorder %s93, %s95
      %p102 = scmp.eq.s32.totalorder %s17, 1
      %p103 = por %p101, %p102
      %p104 = scmp.ne.s32.totalorder %s95, %s96
      %p105 = scmp.eq.s32.totalorder %s17, 0
      %p106 = por %p104, %p105
      %p107 = scmp.ne.s32.totalorder %s95, %s96
      %p108 = scmp.eq.s32.totalorder %s18, 1
      %p109 = por %p107, %p108
      %p111 = scmp.ne.s32.totalorder %s96, %s110
      %p112 = scmp.eq.s32.totalorder %s18, 0
      %p113 = por %p111, %p112
      %p114 = scmp.le.s32.totalorder 1, %s12
      %p115 = scmp.lt.s32.totalorder %s12, 3
      %p116 = pnand %p114, %p115
      %p117 = pneg %p116
      // Predicated region
      $region9: #{crowd_counter_forward.3} parent=5 // pred_check
        _
      $region10: #{crowd_counter_forward.3} parent=5 // pred_check_branch
        %119 = sbr.rel (%p116) target = $region12
      $region11: #{crowd_counter_forward.3} parent=5 // pred_region
        %s120 = ssub.s32 %s12, 1
      $region12: #{crowd_counter_forward.3} parent=5 // pred_fallthru
        _
      %p121 = scmp.lt.s32.totalorder %s12, 2
      // Predicated region
      $region13: #{crowd_counter_forward.3} parent=5 // pred_check
        %p122 = pneg %p121
      $region14: #{crowd_counter_forward.3} parent=5 // pred_check_branch
        %124 = sbr.rel (%p122) target = $region16
      $region15: #{crowd_counter_forward.3} parent=5 // pred_region
        // Predicated region
        $region17: #{crowd_counter_forward.3} parent=15 // pred_check
          %p125 = pneg %p32
        $region18: #{crowd_counter_forward.3} parent=15 // pred_check_branch
          %127 = sbr.rel (%p125) target = $region20
        $region19: #{crowd_counter_forward.3} parent=15 // pred_region
          %p128 = scmp.lt.s32.totalorder %s12, 1
          %s129 = scalar_select %p128, %s12, 1
          %s130 = smul.addr %s129, 4
          %s131 = smul.addr %s130, 8
          %s132 = scalar_lea.vmem %s0, %s131
        $region20: #{crowd_counter_forward.3} parent=15 // pred_fallthru
          _
        // Predicated region
        $region21: #{crowd_counter_forward.3} parent=15 // pred_check
          %p133 = pneg %p58
        $region22: #{crowd_counter_forward.3} parent=15 // pred_check_branch
          %135 = sbr.rel (%p133) target = $region24
        $region23: #{crowd_counter_forward.3} parent=15 // pred_region
          %p136 = scmp.lt.s32.totalorder %s12, 1
          %s137 = scalar_select %p136, %s12, 1
          %s138 = smul.addr %s137, 4
          %s139 = smul.addr %s138, 8
          %s140 = scalar_lea.vmem %s1, %s139
        $region24: #{crowd_counter_forward.3} parent=15 // pred_fallthru
          _
      $region16: #{crowd_counter_forward.3} parent=5 // pred_fallthru
        _
      %p141 = scmp.le.s32.totalorder 1, %s12
      %p142 = scmp.lt.s32.totalorder %s12, 3
      %p143 = pnand %p141, %p142
      %p144 = pneg %p143
      // Predicated region
      $region25: #{crowd_counter_forward.3} parent=5 // pred_check
        _
      $region26: #{crowd_counter_forward.3} parent=5 // pred_check_branch
        %146 = sbr.rel (%p143) target = $region28
      $region27: #{crowd_counter_forward.3} parent=5 // pred_region
        %s147 = ssub.s32 %s12, 1
        %p148 = scmp.lt.s32.totalorder %s17, 1
        %s149 = scalar_select %p148, %s17, 1
        %s150 = smul.addr %s149, 4
        %s151 = smul.addr %s150, 8
        %s152 = scalar_lea.vmem %s0, %s151
        %p153 = pneg %p38
        %p154 = pneg %p35
        %p155 = scmp.lt.s32.totalorder %s17, 1
        %s156 = scalar_select %p155, %s17, 1
        %s157 = smul.addr %s156, 4
        %s158 = smul.addr %s157, 8
        %s159 = scalar_lea.vmem %s1, %s158
        %p160 = pneg %p64
        %p161 = pneg %p61
        %p162 = pneg %p85
        %p163 = pneg %p82
        %p164 = pneg %p106
        %p165 = pneg %p103
        %p166 = scmp.lt.s32.totalorder %s17, 1
        %s167 = scalar_select %p166, %s17, 1
        %s168 = smul.addr %s167, 4
        %s169 = smul.addr %s168, 8
        %s170 = scalar_lea.vmem %s0, %s169
        %p171 = scmp.lt.s32.totalorder %s17, 1
        %s172 = scalar_select %p171, %s17, 1
        %s173 = smul.addr %s172, 4
        %s174 = smul.addr %s173, 8
        %s175 = scalar_lea.vmem %s1, %s174
        %p176 = scmp.eq.s32.totalorder %s17, 0
        // Predicated region
        $region29: #{crowd_counter_forward.3} parent=27 // pred_check
          %p177 = pneg %p176
        $region30: #{crowd_counter_forward.3} parent=27 // pred_check_branch
          %179 = sbr.rel (%p177) target = $region32
        $region31: #{crowd_counter_forward.3} parent=27 // pred_region
          %vm180 = vcmask 0
          %181 = vst.msk [vmem:[#allocation2] sm:$0x1] %vm180, 0.0
          %182 = vst.msk [vmem:[#allocation4] sm:$0x1] %vm180, 0.0
        $region32: #{crowd_counter_forward.3} parent=27 // pred_fallthru
          _
        %v183 = vld [vmem:[%s170] sm:$0xff]
        %v184 = vld [vmem:[%s170 + $0x8] sm:$0xff]
        %v185 = vld [vmem:[%s170 + $0x10] sm:$0xff]
        %v186 = vld [vmem:[%s170 + $0x18] sm:$0x3]
        %v187 = vld [vmem:[%s175] sm:$0xff]
        %v188 = vld [vmem:[%s175 + $0x8] sm:$0xff]
        %v189 = vld [vmem:[%s175 + $0x10] sm:$0xff]
        %v190 = vld [vmem:[%s175 + $0x18] sm:$0x3]
        %v191 = vsub.f32 %v183, %v187
        %v192 = vsub.f32 %v184, %v188
        %v193 = vsub.f32 %v185, %v189
        %v194 = vsub.f32 %v186, %v190
        %v195 = vld [vmem:[#allocation2] sm:$0x1]
        %v196 = vmul.f32 %v191, %v191
        %v197 = vmul.f32 %v192, %v192
        %v198 = vmul.f32 %v193, %v193
        %v199 = vmul.f32 %v194, %v194
        %vm200 = vcmask 211968
        %v201 = vsel %vm200, %v196, 0.0
        %v202 = vsel %vm200, %v197, 0.0
        %v203 = vadd.f32 %v201, %v202
        %v204 = vsel %vm200, %v198, 0.0
        %v205 = vadd.f32 %v203, %v204
        %vm206 = vcmask 205824
        %v207 = vsel %vm206, %v199, 0.0
        %v208 = vadd.f32 %v205, %v207
        %209 = vadd.xlane.f32.xlu0 %v208
        %v210 = vpop.xlane.xlu0 %209
        %v211 = vrot.slane %v210, 4
        %v212 = vadd.f32 %v210, %v211
        %v213 = vrot.slane %v212, 2
        %v214 = vadd.f32 %v212, %v213
        %v215 = vrot.slane %v214, 1
        %v216 = vadd.f32 %v214, %v215
        %s217 = vtos %v216
        %v218 = vstv %s217
        %v219 = vadd.f32 %v195, %v218
        %vm220 = vcmask 0
        %221 = vst.msk [vmem:[#allocation2] sm:$0x1] %vm220, %v219
        %v222 = vmul.f32 %v183, 0.0010283801
        %v223 = vmul.f32 %v184, 0.0010283801
        %v224 = vmul.f32 %v185, 0.0010283801
        %v225 = vmul.f32 %v186, 0.0010283801
        %v226 = vmul.f32 %v183, 0.007598758
        %v227 = vmul.f32 %v184, 0.007598758
        %v228 = vmul.f32 %v185, 0.007598758
        %v229 = vmul.f32 %v186, 0.007598758
        %234 = vrot.lane.b32.xlu0 %v226, 127
        %v235 = vpop.permute.xlu0 %234
        %236 = vrot.lane.b32.xlu0 %v227, 127
        %v237 = vpop.permute.xlu0 %236
        %238 = vrot.lane.b32.xlu0 %v228, 127
        %v239 = vpop.permute.xlu0 %238
        %240 = vrot.lane.b32.xlu0 %v229, 127
        %v241 = vpop.permute.xlu0 %240
        %v246 = vadd.f32 %v222, %v235
        %v247 = vadd.f32 %v223, %v237
        %v248 = vadd.f32 %v224, %v239
        %v249 = vadd.f32 %v225, %v241
        %v250 = vmul.f32 %v183, 0.036000773
        %v251 = vmul.f32 %v184, 0.036000773
        %v252 = vmul.f32 %v185, 0.036000773
        %v253 = vmul.f32 %v186, 0.036000773
        %258 = vrot.lane.b32.xlu0 %v250, 126
        %v259 = vpop.permute.xlu0 %258
        %260 = vrot.lane.b32.xlu0 %v251, 126
        %v261 = vpop.permute.xlu0 %260
        %262 = vrot.lane.b32.xlu0 %v252, 126
        %v263 = vpop.permute.xlu0 %262
        %264 = vrot.lane.b32.xlu0 %v253, 126
        %v265 = vpop.permute.xlu0 %264
        %v270 = vadd.f32 %v246, %v259
        %v271 = vadd.f32 %v247, %v261
        %v272 = vadd.f32 %v248, %v263
        %v273 = vadd.f32 %v249, %v265
        %v274 = vmul.f32 %v183, 0.10936069
        %v275 = vmul.f32 %v184, 0.10936069
        %v276 = vmul.f32 %v185, 0.10936069
        %v277 = vmul.f32 %v186, 0.10936069
        %282 = vrot.lane.b32.xlu0 %v274, 125
        %v283 = vpop.permute.xlu0 %282
        %284 = vrot.lane.b32.xlu0 %v275, 125
        %v285 = vpop.permute.xlu0 %284
        %286 = vrot.lane.b32.xlu0 %v276, 125
        %v287 = vpop.permute.xlu0 %286
        %288 = vrot.lane.b32.xlu0 %v277, 125
        %v289 = vpop.permute.xlu0 %288
        %v294 = vadd.f32 %v270, %v283
        %v295 = vadd.f32 %v271, %v285
        %v296 = vadd.f32 %v272, %v287
        %v297 = vadd.f32 %v273, %v289
        %v298 = vmul.f32 %v183, 0.21300554
        %v299 = vmul.f32 %v184, 0.21300554
        %v300 = vmul.f32 %v185, 0.21300554
        %v301 = vmul.f32 %v186, 0.21300554
        %306 = vrot.lane.b32.xlu0 %v298, 124
        %v307 = vpop.permute.xlu0 %306
        %308 = vrot.lane.b32.xlu0 %v299, 124
        %v309 = vpop.permute.xlu0 %308
        %310 = vrot.lane.b32.xlu0 %v300, 124
        %v311 = vpop.permute.xlu0 %310
        %312 = vrot.lane.b32.xlu0 %v301, 124
        %v313 = vpop.permute.xlu0 %312
        %v318 = vadd.f32 %v294, %v307
        %v319 = vadd.f32 %v295, %v309
        %v320 = vadd.f32 %v296, %v311
        %v321 = vadd.f32 %v297, %v313
        %v322 = vmul.f32 %v183, 0.26601171
        %v323 = vmul.f32 %v184, 0.26601171
        %v324 = vmul.f32 %v185, 0.26601171
        %v325 = vmul.f32 %v186, 0.26601171
        %330 = vrot.lane.b32.xlu0 %v322, 123
        %v331 = vpop.permute.xlu0 %330
        %332 = vrot.lane.b32.xlu0 %v323, 123
        %v333 = vpop.permute.xlu0 %332
        %334 = vrot.lane.b32.xlu0 %v324, 123
        %v335 = vpop.permute.xlu0 %334
        %336 = vrot.lane.b32.xlu0 %v325, 123
        %v337 = vpop.permute.xlu0 %336
        %v342 = vadd.f32 %v318, %v331
        %v343 = vadd.f32 %v319, %v333
        %v344 = vadd.f32 %v320, %v335
        %v345 = vadd.f32 %v321, %v337
        %346 = vrot.lane.b32.xlu0 %v298, 122
        %v347 = vpop.permute.xlu0 %346
        %348 = vrot.lane.b32.xlu0 %v299, 122
        %v349 = vpop.permute.xlu0 %348
        %350 = vrot.lane.b32.xlu0 %v300, 122
        %v351 = vpop.permute.xlu0 %350
        %352 = vrot.lane.b32.xlu0 %v301, 122
        %v353 = vpop.permute.xlu0 %352
        %v358 = vadd.f32 %v342, %v347
        %v359 = vadd.f32 %v343, %v349
        %v360 = vadd.f32 %v344, %v351
        %v361 = vadd.f32 %v345, %v353
        %362 = vrot.lane.b32.xlu0 %v274, 121
        %v363 = vpop.permute.xlu0 %362
        %364 = vrot.lane.b32.xlu0 %v275, 121
        %v365 = vpop.permute.xlu0 %364
        %366 = vrot.lane.b32.xlu0 %v276, 121
        %v367 = vpop.permute.xlu0 %366
        %368 = vrot.lane.b32.xlu0 %v277, 121
        %v369 = vpop.permute.xlu0 %368
        %v374 = vadd.f32 %v358, %v363
        %v375 = vadd.f32 %v359, %v365
        %v376 = vadd.f32 %v360, %v367
        %v377 = vadd.f32 %v361, %v369
        %378 = vrot.lane.b32.xlu0 %v250, 120
        %v379 = vpop.permute.xlu0 %378
        %380 = vrot.lane.b32.xlu0 %v251, 120
        %v381 = vpop.permute.xlu0 %380
        %382 = vrot.lane.b32.xlu0 %v252, 120
        %v383 = vpop.permute.xlu0 %382
        %384 = vrot.lane.b32.xlu0 %v253, 120
        %v385 = vpop.permute.xlu0 %384
        %v390 = vadd.f32 %v374, %v379
        %v391 = vadd.f32 %v375, %v381
        %v392 = vadd.f32 %v376, %v383
        %v393 = vadd.f32 %v377, %v385
        %394 = vrot.lane.b32.xlu0 %v226, 119
        %v395 = vpop.permute.xlu0 %394
        %396 = vrot.lane.b32.xlu0 %v227, 119
        %v397 = vpop.permute.xlu0 %396
        %398 = vrot.lane.b32.xlu0 %v228, 119
        %v399 = vpop.permute.xlu0 %398
        %400 = vrot.lane.b32.xlu0 %v229, 119
        %v401 = vpop.permute.xlu0 %400
        %v406 = vadd.f32 %v390, %v395
        %v407 = vadd.f32 %v391, %v397
        %v408 = vadd.f32 %v392, %v399
        %v409 = vadd.f32 %v393, %v401
        %414 = vrot.lane.b32.xlu0 %v222, 118
        %v415 = vpop.permute.xlu0 %414
        %416 = vrot.lane.b32.xlu0 %v223, 118
        %v417 = vpop.permute.xlu0 %416
        %418 = vrot.lane.b32.xlu0 %v224, 118
        %v419 = vpop.permute.xlu0 %418
        %420 = vrot.lane.b32.xlu0 %v225, 118
        %v421 = vpop.permute.xlu0 %420
        %v426 = vadd.f32 %v406, %v415
        %v427 = vadd.f32 %v407, %v417
        %v428 = vadd.f32 %v408, %v419
        %v429 = vadd.f32 %v409, %v421
        %v430 = vmul.f32 %v426, 0.0010283801
        %v431 = vmul.f32 %v427, 0.0010283801
        %v432 = vmul.f32 %v426, 0.007598758
        %v433 = vmul.f32 %v427, 0.007598758
        %v434 = vmul.f32 %v428, 0.007598758
        %vm438 = vcmask 1046528
        %v439 = vrot.slane %v432, 1
        %v440 = vrot.slane %v433, 1
        %v441 = vsel %vm438, %v439, %v440
        %v442 = vrot.slane %v434, 1
        %v443 = vsel %vm438, %v440, %v442
        %v446 = vadd.f32 %v430, %v441
        %v447 = vadd.f32 %v431, %v443
        %v448 = vmul.f32 %v426, 0.036000773
        %v449 = vmul.f32 %v427, 0.036000773
        %v450 = vmul.f32 %v428, 0.036000773
        %vm454 = vcmask 1045504
        %v455 = vrot.slane %v448, 2
        %v456 = vrot.slane %v449, 2
        %v457 = vsel %vm454, %v455, %v456
        %v458 = vrot.slane %v450, 2
        %v459 = vsel %vm454, %v456, %v458
        %v462 = vadd.f32 %v446, %v457
        %v463 = vadd.f32 %v447, %v459
        %v464 = vmul.f32 %v426, 0.10936069
        %v465 = vmul.f32 %v427, 0.10936069
        %v466 = vmul.f32 %v428, 0.10936069
        %vm470 = vcmask 1044480
        %v471 = vrot.slane %v464, 3
        %v472 = vrot.slane %v465, 3
        %v473 = vsel %vm470, %v471, %v472
        %v474 = vrot.slane %v466, 3
        %v475 = vsel %vm470, %v472, %v474
        %v478 = vadd.f32 %v462, %v473
        %v479 = vadd.f32 %v463, %v475
        %v480 = vmul.f32 %v426, 0.21300554
        %v481 = vmul.f32 %v427, 0.21300554
        %v482 = vmul.f32 %v428, 0.21300554
        %vm486 = vcmask 1043456
        %v487 = vrot.slane %v480, 4
        %v488 = vrot.slane %v481, 4
        %v489 = vsel %vm486, %v487, %v488
        %v490 = vrot.slane %v482, 4
        %v491 = vsel %vm486, %v488, %v490
        %v494 = vadd.f32 %v478, %v489
        %v495 = vadd.f32 %v479, %v491
        %v496 = vmul.f32 %v426, 0.26601171
        %v497 = vmul.f32 %v427, 0.26601171
        %v498 = vmul.f32 %v428, 0.26601171
        %vm502 = vcmask 1042432
        %v503 = vrot.slane %v496, 5
        %v504 = vrot.slane %v497, 5
        %v505 = vsel %vm502, %v503, %v504
        %v506 = vrot.slane %v498, 5
        %v507 = vsel %vm502, %v504, %v506
        %v510 = vadd.f32 %v494, %v505
        %v511 = vadd.f32 %v495, %v507
        %vm512 = vcmask 1041408
        %v513 = vrot.slane %v480, 6
        %v514 = vrot.slane %v481, 6
        %v515 = vsel %vm512, %v513, %v514
        %v516 = vrot.slane %v482, 6
        %v517 = vsel %vm512, %v514, %v516
        %v520 = vadd.f32 %v510, %v515
        %v521 = vadd.f32 %v511, %v517
        %vm522 = vcmask 1040384
        %v523 = vrot.slane %v464, 7
        %v524 = vrot.slane %v465, 7
        %v525 = vsel %vm522, %v523, %v524
        %v526 = vrot.slane %v466, 7
        %v527 = vsel %vm522, %v524, %v526
        %v530 = vadd.f32 %v520, %v525
        %v531 = vadd.f32 %v521, %v527
        %v532 = vadd.f32 %v530, %v449
        %v533 = vadd.f32 %v531, %v450
        %v534 = vmul.f32 %v429, 0.007598758
        %v536 = vrot.slane %v534, 1
        %v537 = vsel %vm438, %v442, %v536
        %v539 = vadd.f32 %v532, %v443
        %v540 = vadd.f32 %v533, %v537
        %v541 = vmul.f32 %v428, 0.0010283801
        %v542 = vmul.f32 %v429, 0.0010283801
        %v546 = vrot.slane %v431, 2
        %v547 = vrot.slane %v541, 2
        %v548 = vsel %vm454, %v546, %v547
        %v549 = vrot.slane %v542, 2
        %v550 = vsel %vm454, %v547, %v549
        %v553 = vadd.f32 %v539, %v548
        %v554 = vadd.f32 %v540, %v550
        %v555 = vmul.f32 %v187, 0.0010283801
        %v556 = vmul.f32 %v188, 0.0010283801
        %v557 = vmul.f32 %v189, 0.0010283801
        %v558 = vmul.f32 %v190, 0.0010283801
        %v559 = vmul.f32 %v187, 0.007598758
        %v560 = vmul.f32 %v188, 0.007598758
        %v561 = vmul.f32 %v189, 0.007598758
        %v562 = vmul.f32 %v190, 0.007598758
        %567 = vrot.lane.b32.xlu0 %v559, 127
        %v568 = vpop.permute.xlu0 %567
        %569 = vrot.lane.b32.xlu0 %v560, 127
        %v570 = vpop.permute.xlu0 %569
        %571 = vrot.lane.b32.xlu0 %v561, 127
        %v572 = vpop.permute.xlu0 %571
        %573 = vrot.lane.b32.xlu0 %v562, 127
        %v574 = vpop.permute.xlu0 %573
        %v579 = vadd.f32 %v555, %v568
        %v580 = vadd.f32 %v556, %v570
        %v581 = vadd.f32 %v557, %v572
        %v582 = vadd.f32 %v558, %v574
        %v583 = vmul.f32 %v187, 0.036000773
        %v584 = vmul.f32 %v188, 0.036000773
        %v585 = vmul.f32 %v189, 0.036000773
        %v586 = vmul.f32 %v190, 0.036000773
        %591 = vrot.lane.b32.xlu0 %v583, 126
        %v592 = vpop.permute.xlu0 %591
        %593 = vrot.lane.b32.xlu0 %v584, 126
        %v594 = vpop.permute.xlu0 %593
        %595 = vrot.lane.b32.xlu0 %v585, 126
        %v596 = vpop.permute.xlu0 %595
        %597 = vrot.lane.b32.xlu0 %v586, 126
        %v598 = vpop.permute.xlu0 %597
        %v603 = vadd.f32 %v579, %v592
        %v604 = vadd.f32 %v580, %v594
        %v605 = vadd.f32 %v581, %v596
        %v606 = vadd.f32 %v582, %v598
        %v607 = vmul.f32 %v187, 0.10936069
        %v608 = vmul.f32 %v188, 0.10936069
        %v609 = vmul.f32 %v189, 0.10936069
        %v610 = vmul.f32 %v190, 0.10936069
        %615 = vrot.lane.b32.xlu0 %v607, 125
        %v616 = vpop.permute.xlu0 %615
        %617 = vrot.lane.b32.xlu0 %v608, 125
        %v618 = vpop.permute.xlu0 %617
        %619 = vrot.lane.b32.xlu0 %v609, 125
        %v620 = vpop.permute.xlu0 %619
        %621 = vrot.lane.b32.xlu0 %v610, 125
        %v622 = vpop.permute.xlu0 %621
        %v627 = vadd.f32 %v603, %v616
        %v628 = vadd.f32 %v604, %v618
        %v629 = vadd.f32 %v605, %v620
        %v630 = vadd.f32 %v606, %v622
        %v631 = vmul.f32 %v187, 0.21300554
        %v632 = vmul.f32 %v188, 0.21300554
        %v633 = vmul.f32 %v189, 0.21300554
        %v634 = vmul.f32 %v190, 0.21300554
        %639 = vrot.lane.b32.xlu0 %v631, 124
        %v640 = vpop.permute.xlu0 %639
        %641 = vrot.lane.b32.xlu0 %v632, 124
        %v642 = vpop.permute.xlu0 %641
        %643 = vrot.lane.b32.xlu0 %v633, 124
        %v644 = vpop.permute.xlu0 %643
        %645 = vrot.lane.b32.xlu0 %v634, 124
        %v646 = vpop.permute.xlu0 %645
        %v651 = vadd.f32 %v627, %v640
        %v652 = vadd.f32 %v628, %v642
        %v653 = vadd.f32 %v629, %v644
        %v654 = vadd.f32 %v630, %v646
        %v655 = vmul.f32 %v187, 0.26601171
        %v656 = vmul.f32 %v188, 0.26601171
        %v657 = vmul.f32 %v189, 0.26601171
        %v658 = vmul.f32 %v190, 0.26601171
        %663 = vrot.lane.b32.xlu0 %v655, 123
        %v664 = vpop.permute.xlu0 %663
        %665 = vrot.lane.b32.xlu0 %v656, 123
        %v666 = vpop.permute.xlu0 %665
        %667 = vrot.lane.b32.xlu0 %v657, 123
        %v668 = vpop.permute.xlu0 %667
        %669 = vrot.lane.b32.xlu0 %v658, 123
        %v670 = vpop.permute.xlu0 %669
        %v675 = vadd.f32 %v651, %v664
        %v676 = vadd.f32 %v652, %v666
        %v677 = vadd.f32 %v653, %v668
        %v678 = vadd.f32 %v654, %v670
        %679 = vrot.lane.b32.xlu0 %v631, 122
        %v680 = vpop.permute.xlu0 %679
        %681 = vrot.lane.b32.xlu0 %v632, 122
        %v682 = vpop.permute.xlu0 %681
        %683 = vrot.lane.b32.xlu0 %v633, 122
        %v684 = vpop.permute.xlu0 %683
        %685 = vrot.lane.b32.xlu0 %v634, 122
        %v686 = vpop.permute.xlu0 %685
        %v691 = vadd.f32 %v675, %v680
        %v692 = vadd.f32 %v676, %v682
        %v693 = vadd.f32 %v677, %v684
        %v694 = vadd.f32 %v678, %v686
        %695 = vrot.lane.b32.xlu0 %v607, 121
        %v696 = vpop.permute.xlu0 %695
        %697 = vrot.lane.b32.xlu0 %v608, 121
        %v698 = vpop.permute.xlu0 %697
        %699 = vrot.lane.b32.xlu0 %v609, 121
        %v700 = vpop.permute.xlu0 %699
        %701 = vrot.lane.b32.xlu0 %v610, 121
        %v702 = vpop.permute.xlu0 %701
        %v707 = vadd.f32 %v691, %v696
        %v708 = vadd.f32 %v692, %v698
        %v709 = vadd.f32 %v693, %v700
        %v710 = vadd.f32 %v694, %v702
        %711 = vrot.lane.b32.xlu0 %v583, 120
        %v712 = vpop.permute.xlu0 %711
        %713 = vrot.lane.b32.xlu0 %v584, 120
        %v714 = vpop.permute.xlu0 %713
        %715 = vrot.lane.b32.xlu0 %v585, 120
        %v716 = vpop.permute.xlu0 %715
        %717 = vrot.lane.b32.xlu0 %v586, 120
        %v718 = vpop.permute.xlu0 %717
        %v723 = vadd.f32 %v707, %v712
        %v724 = vadd.f32 %v708, %v714
        %v725 = vadd.f32 %v709, %v716
        %v726 = vadd.f32 %v710, %v718
        %727 = vrot.lane.b32.xlu0 %v559, 119
        %v728 = vpop.permute.xlu0 %727
        %729 = vrot.lane.b32.xlu0 %v560, 119
        %v730 = vpop.permute.xlu0 %729
        %731 = vrot.lane.b32.xlu0 %v561, 119
        %v732 = vpop.permute.xlu0 %731
        %733 = vrot.lane.b32.xlu0 %v562, 119
        %v734 = vpop.permute.xlu0 %733
        %v739 = vadd.f32 %v723, %v728
        %v740 = vadd.f32 %v724, %v730
        %v741 = vadd.f32 %v725, %v732
        %v742 = vadd.f32 %v726, %v734
        %747 = vrot.lane.b32.xlu0 %v555, 118
        %v748 = vpop.permute.xlu0 %747
        %749 = vrot.lane.b32.xlu0 %v556, 118
        %v750 = vpop.permute.xlu0 %749
        %751 = vrot.lane.b32.xlu0 %v557, 118
        %v752 = vpop.permute.xlu0 %751
        %753 = vrot.lane.b32.xlu0 %v558, 118
        %v754 = vpop.permute.xlu0 %753
        %v759 = vadd.f32 %v739, %v748
        %v760 = vadd.f32 %v740, %v750
        %v761 = vadd.f32 %v741, %v752
        %v762 = vadd.f32 %v742, %v754
        %v763 = vmul.f32 %v759, 0.0010283801
        %v764 = vmul.f32 %v760, 0.0010283801
        %v765 = vmul.f32 %v759, 0.007598758
        %v766 = vmul.f32 %v760, 0.007598758
        %v767 = vmul.f32 %v761, 0.007598758
        %v771 = vrot.slane %v765, 1
        %v772 = vrot.slane %v766, 1
        %v773 = vsel %vm438, %v771, %v772
        %v774 = vrot.slane %v767, 1
        %v775 = vsel %vm438, %v772, %v774
        %v778 = vadd.f32 %v763, %v773
        %v779 = vadd.f32 %v764, %v775
        %v780 = vmul.f32 %v759, 0.036000773
        %v781 = vmul.f32 %v760, 0.036000773
        %v782 = vmul.f32 %v761, 0.036000773
        %v786 = vrot.slane %v780, 2
        %v787 = vrot.slane %v781, 2
        %v788 = vsel %vm454, %v786, %v787
        %v789 = vrot.slane %v782, 2
        %v790 = vsel %vm454, %v787, %v789
        %v793 = vadd.f32 %v778, %v788
        %v794 = vadd.f32 %v779, %v790
        %v795 = vmul.f32 %v759, 0.10936069
        %v796 = vmul.f32 %v760, 0.10936069
        %v797 = vmul.f32 %v761, 0.10936069
        %v801 = vrot.slane %v795, 3
        %v802 = vrot.slane %v796, 3
        %v803 = vsel %vm470, %v801, %v802
        %v804 = vrot.slane %v797, 3
        %v805 = vsel %vm470, %v802, %v804
        %v808 = vadd.f32 %v793, %v803
        %v809 = vadd.f32 %v794, %v805
        %v810 = vmul.f32 %v759, 0.21300554
        %v811 = vmul.f32 %v760, 0.21300554
        %v812 = vmul.f32 %v761, 0.21300554
        %v816 = vrot.slane %v810, 4
        %v817 = vrot.slane %v811, 4
        %v818 = vsel %vm486, %v816, %v817
        %v819 = vrot.slane %v812, 4
        %v820 = vsel %vm486, %v817, %v819
        %v823 = vadd.f32 %v808, %v818
        %v824 = vadd.f32 %v809, %v820
        %v825 = vmul.f32 %v759, 0.26601171
        %v826 = vmul.f32 %v760, 0.26601171
        %v827 = vmul.f32 %v761, 0.26601171
        %v831 = vrot.slane %v825, 5
        %v832 = vrot.slane %v826, 5
        %v833 = vsel %vm502, %v831, %v832
        %v834 = vrot.slane %v827, 5
        %v835 = vsel %vm502, %v832, %v834
        %v838 = vadd.f32 %v823, %v833
        %v839 = vadd.f32 %v824, %v835
        %v840 = vrot.slane %v810, 6
        %v841 = vrot.slane %v811, 6
        %v842 = vsel %vm512, %v840, %v841
        %v843 = vrot.slane %v812, 6
        %v844 = vsel %vm512, %v841, %v843
        %v847 = vadd.f32 %v838, %v842
        %v848 = vadd.f32 %v839, %v844
        %v849 = vrot.slane %v795, 7
        %v850 = vrot.slane %v796, 7
        %v851 = vsel %vm522, %v849, %v850
        %v852 = vrot.slane %v797, 7
        %v853 = vsel %vm522, %v850, %v852
        %v856 = vadd.f32 %v847, %v851
        %v857 = vadd.f32 %v848, %v853
        %v858 = vadd.f32 %v856, %v781
        %v859 = vadd.f32 %v857, %v782
        %v860 = vmul.f32 %v762, 0.007598758
        %v862 = vrot.slane %v860, 1
        %v863 = vsel %vm438, %v774, %v862
        %v865 = vadd.f32 %v858, %v775
        %v866 = vadd.f32 %v859, %v863
        %v867 = vmul.f32 %v761, 0.0010283801
        %v868 = vmul.f32 %v762, 0.0010283801
        %v872 = vrot.slane %v764, 2
        %v873 = vrot.slane %v867, 2
        %v874 = vsel %vm454, %v872, %v873
        %v875 = vrot.slane %v868, 2
        %v876 = vsel %vm454, %v873, %v875
        %v879 = vadd.f32 %v865, %v874
        %v880 = vadd.f32 %v866, %v876
        %v881 = vmul.f32 %v183, %v183
        %v882 = vmul.f32 %v184, %v184
        %v883 = vmul.f32 %v185, %v185
        %v884 = vmul.f32 %v186, %v186
        %v885 = vmul.f32 %v881, 0.0010283801
        %v886 = vmul.f32 %v882, 0.0010283801
        %v887 = vmul.f32 %v883, 0.0010283801
        %v888 = vmul.f32 %v884, 0.0010283801
        %v889 = vmul.f32 %v881, 0.007598758
        %v890 = vmul.f32 %v882, 0.007598758
        %v891 = vmul.f32 %v883, 0.007598758
        %v892 = vmul.f32 %v884, 0.007598758
        %897 = vrot.lane.b32.xlu0 %v889, 127
        %v898 = vpop.permute.xlu0 %897
        %899 = vrot.lane.b32.xlu0 %v890, 127
        %v900 = vpop.permute.xlu0 %899
        %901 = vrot.lane.b32.xlu0 %v891, 127
        %v902 = vpop.permute.xlu0 %901
        %903 = vrot.lane.b32.xlu0 %v892, 127
        %v904 = vpop.permute.xlu0 %903
        %v909 = vadd.f32 %v885, %v898
        %v910 = vadd.f32 %v886, %v900
        %v911 = vadd.f32 %v887, %v902
        %v912 = vadd.f32 %v888, %v904
        %v913 = vmul.f32 %v881, 0.036000773
        %v914 = vmul.f32 %v882, 0.036000773
        %v915 = vmul.f32 %v883, 0.036000773
        %v916 = vmul.f32 %v884, 0.036000773
        %921 = vrot.lane.b32.xlu0 %v913, 126
        %v922 = vpop.permute.xlu0 %921
        %923 = vrot.lane.b32.xlu0 %v914, 126
        %v924 = vpop.permute.xlu0 %923
        %925 = vrot.lane.b32.xlu0 %v915, 126
        %v926 = vpop.permute.xlu0 %925
        %927 = vrot.lane.b32.xlu0 %v916, 126
        %v928 = vpop.permute.xlu0 %927
        %v933 = vadd.f32 %v909, %v922
        %v934 = vadd.f32 %v910, %v924
        %v935 = vadd.f32 %v911, %v926
        %v936 = vadd.f32 %v912, %v928
        %v937 = vmul.f32 %v881, 0.10936069
        %v938 = vmul.f32 %v882, 0.10936069
        %v939 = vmul.f32 %v883, 0.10936069
        %v940 = vmul.f32 %v884, 0.10936069
        %945 = vrot.lane.b32.xlu0 %v937, 125
        %v946 = vpop.permute.xlu0 %945
        %947 = vrot.lane.b32.xlu0 %v938, 125
        %v948 = vpop.permute.xlu0 %947
        %949 = vrot.lane.b32.xlu0 %v939, 125
        %v950 = vpop.permute.xlu0 %949
        %951 = vrot.lane.b32.xlu0 %v940, 125
        %v952 = vpop.permute.xlu0 %951
        %v957 = vadd.f32 %v933, %v946
        %v958 = vadd.f32 %v934, %v948
        %v959 = vadd.f32 %v935, %v950
        %v960 = vadd.f32 %v936, %v952
        %v961 = vmul.f32 %v881, 0.21300554
        %v962 = vmul.f32 %v882, 0.21300554
        %v963 = vmul.f32 %v883, 0.21300554
        %v964 = vmul.f32 %v884, 0.21300554
        %969 = vrot.lane.b32.xlu0 %v961, 124
        %v970 = vpop.permute.xlu0 %969
        %971 = vrot.lane.b32.xlu0 %v962, 124
        %v972 = vpop.permute.xlu0 %971
        %973 = vrot.lane.b32.xlu0 %v963, 124
        %v974 = vpop.permute.xlu0 %973
        %975 = vrot.lane.b32.xlu0 %v964, 124
        %v976 = vpop.permute.xlu0 %975
        %v981 = vadd.f32 %v957, %v970
        %v982 = vadd.f32 %v958, %v972
        %v983 = vadd.f32 %v959, %v974
        %v984 = vadd.f32 %v960, %v976
        %v985 = vmul.f32 %v881, 0.26601171
        %v986 = vmul.f32 %v882, 0.26601171
        %v987 = vmul.f32 %v883, 0.26601171
        %v988 = vmul.f32 %v884, 0.26601171
        %993 = vrot.lane.b32.xlu0 %v985, 123
        %v994 = vpop.permute.xlu0 %993
        %995 = vrot.lane.b32.xlu0 %v986, 123
        %v996 = vpop.permute.xlu0 %995
        %997 = vrot.lane.b32.xlu0 %v987, 123
        %v998 = vpop.permute.xlu0 %997
        %999 = vrot.lane.b32.xlu0 %v988, 123
        %v1000 = vpop.permute.xlu0 %999
        %v1005 = vadd.f32 %v981, %v994
        %v1006 = vadd.f32 %v982, %v996
        %v1007 = vadd.f32 %v983, %v998
        %v1008 = vadd.f32 %v984, %v1000
        %1009 = vrot.lane.b32.xlu0 %v961, 122
        %v1010 = vpop.permute.xlu0 %1009
        %1011 = vrot.lane.b32.xlu0 %v962, 122
        %v1012 = vpop.permute.xlu0 %1011
        %1013 = vrot.lane.b32.xlu0 %v963, 122
        %v1014 = vpop.permute.xlu0 %1013
        %1015 = vrot.lane.b32.xlu0 %v964, 122
        %v1016 = vpop.permute.xlu0 %1015
        %v1021 = vadd.f32 %v1005, %v1010
        %v1022 = vadd.f32 %v1006, %v1012
        %v1023 = vadd.f32 %v1007, %v1014
        %v1024 = vadd.f32 %v1008, %v1016
        %1025 = vrot.lane.b32.xlu0 %v937, 121
        %v1026 = vpop.permute.xlu0 %1025
        %1027 = vrot.lane.b32.xlu0 %v938, 121
        %v1028 = vpop.permute.xlu0 %1027
        %1029 = vrot.lane.b32.xlu0 %v939, 121
        %v1030 = vpop.permute.xlu0 %1029
        %1031 = vrot.lane.b32.xlu0 %v940, 121
        %v1032 = vpop.permute.xlu0 %1031
        %v1037 = vadd.f32 %v1021, %v1026
        %v1038 = vadd.f32 %v1022, %v1028
        %v1039 = vadd.f32 %v1023, %v1030
        %v1040 = vadd.f32 %v1024, %v1032
        %1041 = vrot.lane.b32.xlu0 %v913, 120
        %v1042 = vpop.permute.xlu0 %1041
        %1043 = vrot.lane.b32.xlu0 %v914, 120
        %v1044 = vpop.permute.xlu0 %1043
        %1045 = vrot.lane.b32.xlu0 %v915, 120
        %v1046 = vpop.permute.xlu0 %1045
        %1047 = vrot.lane.b32.xlu0 %v916, 120
        %v1048 = vpop.permute.xlu0 %1047
        %v1053 = vadd.f32 %v1037, %v1042
        %v1054 = vadd.f32 %v1038, %v1044
        %v1055 = vadd.f32 %v1039, %v1046
        %v1056 = vadd.f32 %v1040, %v1048
        %1057 = vrot.lane.b32.xlu0 %v889, 119
        %v1058 = vpop.permute.xlu0 %1057
        %1059 = vrot.lane.b32.xlu0 %v890, 119
        %v1060 = vpop.permute.xlu0 %1059
        %1061 = vrot.lane.b32.xlu0 %v891, 119
        %v1062 = vpop.permute.xlu0 %1061
        %1063 = vrot.lane.b32.xlu0 %v892, 119
        %v1064 = vpop.permute.xlu0 %1063
        %v1069 = vadd.f32 %v1053, %v1058
        %v1070 = vadd.f32 %v1054, %v1060
        %v1071 = vadd.f32 %v1055, %v1062
        %v1072 = vadd.f32 %v1056, %v1064
        %1077 = vrot.lane.b32.xlu0 %v885, 118
        %v1078 = vpop.permute.xlu0 %1077
        %1079 = vrot.lane.b32.xlu0 %v886, 118
        %v1080 = vpop.permute.xlu0 %1079
        %1081 = vrot.lane.b32.xlu0 %v887, 118
        %v1082 = vpop.permute.xlu0 %1081
        %1083 = vrot.lane.b32.xlu0 %v888, 118
        %v1084 = vpop.permute.xlu0 %1083
        %v1089 = vadd.f32 %v1069, %v1078
        %v1090 = vadd.f32 %v1070, %v1080
        %v1091 = vadd.f32 %v1071, %v1082
        %v1092 = vadd.f32 %v1072, %v1084
        %v1093 = vmul.f32 %v1089, 0.0010283801
        %v1094 = vmul.f32 %v1090, 0.0010283801
        %v1095 = vmul.f32 %v1089, 0.007598758
        %v1096 = vmul.f32 %v1090, 0.007598758
        %v1097 = vmul.f32 %v1091, 0.007598758
        %v1101 = vrot.slane %v1095, 1
        %v1102 = vrot.slane %v1096, 1
        %v1103 = vsel %vm438, %v1101, %v1102
        %v1104 = vrot.slane %v1097, 1
        %v1105 = vsel %vm438, %v1102, %v1104
        %v1108 = vadd.f32 %v1093, %v1103
        %v1109 = vadd.f32 %v1094, %v1105
        %v1110 = vmul.f32 %v1089, 0.036000773
        %v1111 = vmul.f32 %v1090, 0.036000773
        %v1112 = vmul.f32 %v1091, 0.036000773
        %v1116 = vrot.slane %v1110, 2
        %v1117 = vrot.slane %v1111, 2
        %v1118 = vsel %vm454, %v1116, %v1117
        %v1119 = vrot.slane %v1112, 2
        %v1120 = vsel %vm454, %v1117, %v1119
        %v1123 = vadd.f32 %v1108, %v1118
        %v1124 = vadd.f32 %v1109, %v1120
        %v1125 = vmul.f32 %v1089, 0.10936069
        %v1126 = vmul.f32 %v1090, 0.10936069
        %v1127 = vmul.f32 %v1091, 0.10936069
        %v1131 = vrot.slane %v1125, 3
        %v1132 = vrot.slane %v1126, 3
        %v1133 = vsel %vm470, %v1131, %v1132
        %v1134 = vrot.slane %v1127, 3
        %v1135 = vsel %vm470, %v1132, %v1134
        %v1138 = vadd.f32 %v1123, %v1133
        %v1139 = vadd.f32 %v1124, %v1135
        %v1140 = vmul.f32 %v1089, 0.21300554
        %v1141 = vmul.f32 %v1090, 0.21300554
        %v1142 = vmul.f32 %v1091, 0.21300554
        %v1146 = vrot.slane %v1140, 4
        %v1147 = vrot.slane %v1141, 4
        %v1148 = vsel %vm486, %v1146, %v1147
        %v1149 = vrot.slane %v1142, 4
        %v1150 = vsel %vm486, %v1147, %v1149
        %v1153 = vadd.f32 %v1138, %v1148
        %v1154 = vadd.f32 %v1139, %v1150
        %v1155 = vmul.f32 %v1089, 0.26601171
        %v1156 = vmul.f32 %v1090, 0.26601171
        %v1157 = vmul.f32 %v1091, 0.26601171
        %v1161 = vrot.slane %v1155, 5
        %v1162 = vrot.slane %v1156, 5
        %v1163 = vsel %vm502, %v1161, %v1162
        %v1164 = vrot.slane %v1157, 5
        %v1165 = vsel %vm502, %v1162, %v1164
        %v1168 = vadd.f32 %v1153, %v1163
        %v1169 = vadd.f32 %v1154, %v1165
        %v1170 = vrot.slane %v1140, 6
        %v1171 = vrot.slane %v1141, 6
        %v1172 = vsel %vm512, %v1170, %v1171
        %v1173 = vrot.slane %v1142, 6
        %v1174 = vsel %vm512, %v1171, %v1173
        %v1177 = vadd.f32 %v1168, %v1172
        %v1178 = vadd.f32 %v1169, %v1174
        %v1179 = vrot.slane %v1125, 7
        %v1180 = vrot.slane %v1126, 7
        %v1181 = vsel %vm522, %v1179, %v1180
        %v1182 = vrot.slane %v1127, 7
        %v1183 = vsel %vm522, %v1180, %v1182
        %v1186 = vadd.f32 %v1177, %v1181
        %v1187 = vadd.f32 %v1178, %v1183
        %v1188 = vadd.f32 %v1186, %v1111
        %v1189 = vadd.f32 %v1187, %v1112
        %v1190 = vmul.f32 %v1092, 0.007598758
        %v1192 = vrot.slane %v1190, 1
        %v1193 = vsel %vm438, %v1104, %v1192
        %v1195 = vadd.f32 %v1188, %v1105
        %v1196 = vadd.f32 %v1189, %v1193
        %v1197 = vmul.f32 %v1091, 0.0010283801
        %v1198 = vmul.f32 %v1092, 0.0010283801
        %v1202 = vrot.slane %v1094, 2
        %v1203 = vrot.slane %v1197, 2
        %v1204 = vsel %vm454, %v1202, %v1203
        %v1205 = vrot.slane %v1198, 2
        %v1206 = vsel %vm454, %v1203, %v1205
        %v1209 = vadd.f32 %v1195, %v1204
        %v1210 = vadd.f32 %v1196, %v1206
        %v1211 = vmul.f32 %v187, %v187
        %v1212 = vmul.f32 %v188, %v188
        %v1213 = vmul.f32 %v189, %v189
        %v1214 = vmul.f32 %v190, %v190
        %v1215 = vmul.f32 %v1211, 0.0010283801
        %v1216 = vmul.f32 %v1212, 0.0010283801
        %v1217 = vmul.f32 %v1213, 0.0010283801
        %v1218 = vmul.f32 %v1214, 0.0010283801
        %v1219 = vmul.f32 %v1211, 0.007598758
        %v1220 = vmul.f32 %v1212, 0.007598758
        %v1221 = vmul.f32 %v1213, 0.007598758
        %v1222 = vmul.f32 %v1214, 0.007598758
        %1227 = vrot.lane.b32.xlu0 %v1219, 127
        %v1228 = vpop.permute.xlu0 %1227
        %1229 = vrot.lane.b32.xlu0 %v1220, 127
        %v1230 = vpop.permute.xlu0 %1229
        %1231 = vrot.lane.b32.xlu0 %v1221, 127
        %v1232 = vpop.permute.xlu0 %1231
        %1233 = vrot.lane.b32.xlu0 %v1222, 127
        %v1234 = vpop.permute.xlu0 %1233
        %v1239 = vadd.f32 %v1215, %v1228
        %v1240 = vadd.f32 %v1216, %v1230
        %v1241 = vadd.f32 %v1217, %v1232
        %v1242 = vadd.f32 %v1218, %v1234
        %v1243 = vmul.f32 %v1211, 0.036000773
        %v1244 = vmul.f32 %v1212, 0.036000773
        %v1245 = vmul.f32 %v1213, 0.036000773
        %v1246 = vmul.f32 %v1214, 0.036000773
        %1251 = vrot.lane.b32.xlu0 %v1243, 126
        %v1252 = vpop.permute.xlu0 %1251
        %1253 = vrot.lane.b32.xlu0 %v1244, 126
        %v1254 = vpop.permute.xlu0 %1253
        %1255 = vrot.lane.b32.xlu0 %v1245, 126
        %v1256 = vpop.permute.xlu0 %1255
        %1257 = vrot.lane.b32.xlu0 %v1246, 126
        %v1258 = vpop.permute.xlu0 %1257
        %v1263 = vadd.f32 %v1239, %v1252
        %v1264 = vadd.f32 %v1240, %v1254
        %v1265 = vadd.f32 %v1241, %v1256
        %v1266 = vadd.f32 %v1242, %v1258
        %v1267 = vmul.f32 %v1211, 0.10936069
        %v1268 = vmul.f32 %v1212, 0.10936069
        %v1269 = vmul.f32 %v1213, 0.10936069
        %v1270 = vmul.f32 %v1214, 0.10936069
        %1275 = vrot.lane.b32.xlu0 %v1267, 125
        %v1276 = vpop.permute.xlu0 %1275
        %1277 = vrot.lane.b32.xlu0 %v1268, 125
        %v1278 = vpop.permute.xlu0 %1277
        %1279 = vrot.lane.b32.xlu0 %v1269, 125
        %v1280 = vpop.permute.xlu0 %1279
        %1281 = vrot.lane.b32.xlu0 %v1270, 125
        %v1282 = vpop.permute.xlu0 %1281
        %v1287 = vadd.f32 %v1263, %v1276
        %v1288 = vadd.f32 %v1264, %v1278
        %v1289 = vadd.f32 %v1265, %v1280
        %v1290 = vadd.f32 %v1266, %v1282
        %v1291 = vmul.f32 %v1211, 0.21300554
        %v1292 = vmul.f32 %v1212, 0.21300554
        %v1293 = vmul.f32 %v1213, 0.21300554
        %v1294 = vmul.f32 %v1214, 0.21300554
        %1299 = vrot.lane.b32.xlu0 %v1291, 124
        %v1300 = vpop.permute.xlu0 %1299
        %1301 = vrot.lane.b32.xlu0 %v1292, 124
        %v1302 = vpop.permute.xlu0 %1301
        %1303 = vrot.lane.b32.xlu0 %v1293, 124
        %v1304 = vpop.permute.xlu0 %1303
        %1305 = vrot.lane.b32.xlu0 %v1294, 124
        %v1306 = vpop.permute.xlu0 %1305
        %v1311 = vadd.f32 %v1287, %v1300
        %v1312 = vadd.f32 %v1288, %v1302
        %v1313 = vadd.f32 %v1289, %v1304
        %v1314 = vadd.f32 %v1290, %v1306
        %v1315 = vmul.f32 %v1211, 0.26601171
        %v1316 = vmul.f32 %v1212, 0.26601171
        %v1317 = vmul.f32 %v1213, 0.26601171
        %v1318 = vmul.f32 %v1214, 0.26601171
        %1323 = vrot.lane.b32.xlu0 %v1315, 123
        %v1324 = vpop.permute.xlu0 %1323
        %1325 = vrot.lane.b32.xlu0 %v1316, 123
        %v1326 = vpop.permute.xlu0 %1325
        %1327 = vrot.lane.b32.xlu0 %v1317, 123
        %v1328 = vpop.permute.xlu0 %1327
        %1329 = vrot.lane.b32.xlu0 %v1318, 123
        %v1330 = vpop.permute.xlu0 %1329
        %v1335 = vadd.f32 %v1311, %v1324
        %v1336 = vadd.f32 %v1312, %v1326
        %v1337 = vadd.f32 %v1313, %v1328
        %v1338 = vadd.f32 %v1314, %v1330
        %1339 = vrot.lane.b32.xlu0 %v1291, 122
        %v1340 = vpop.permute.xlu0 %1339
        %1341 = vrot.lane.b32.xlu0 %v1292, 122
        %v1342 = vpop.permute.xlu0 %1341
        %1343 = vrot.lane.b32.xlu0 %v1293, 122
        %v1344 = vpop.permute.xlu0 %1343
        %1345 = vrot.lane.b32.xlu0 %v1294, 122
        %v1346 = vpop.permute.xlu0 %1345
        %v1351 = vadd.f32 %v1335, %v1340
        %v1352 = vadd.f32 %v1336, %v1342
        %v1353 = vadd.f32 %v1337, %v1344
        %v1354 = vadd.f32 %v1338, %v1346
        %1355 = vrot.lane.b32.xlu0 %v1267, 121
        %v1356 = vpop.permute.xlu0 %1355
        %1357 = vrot.lane.b32.xlu0 %v1268, 121
        %v1358 = vpop.permute.xlu0 %1357
        %1359 = vrot.lane.b32.xlu0 %v1269, 121
        %v1360 = vpop.permute.xlu0 %1359
        %1361 = vrot.lane.b32.xlu0 %v1270, 121
        %v1362 = vpop.permute.xlu0 %1361
        %v1367 = vadd.f32 %v1351, %v1356
        %v1368 = vadd.f32 %v1352, %v1358
        %v1369 = vadd.f32 %v1353, %v1360
        %v1370 = vadd.f32 %v1354, %v1362
        %1371 = vrot.lane.b32.xlu0 %v1243, 120
        %v1372 = vpop.permute.xlu0 %1371
        %1373 = vrot.lane.b32.xlu0 %v1244, 120
        %v1374 = vpop.permute.xlu0 %1373
        %1375 = vrot.lane.b32.xlu0 %v1245, 120
        %v1376 = vpop.permute.xlu0 %1375
        %1377 = vrot.lane.b32.xlu0 %v1246, 120
        %v1378 = vpop.permute.xlu0 %1377
        %v1383 = vadd.f32 %v1367, %v1372
        %v1384 = vadd.f32 %v1368, %v1374
        %v1385 = vadd.f32 %v1369, %v1376
        %v1386 = vadd.f32 %v1370, %v1378
        %1387 = vrot.lane.b32.xlu0 %v1219, 119
        %v1388 = vpop.permute.xlu0 %1387
        %1389 = vrot.lane.b32.xlu0 %v1220, 119
        %v1390 = vpop.permute.xlu0 %1389
        %1391 = vrot.lane.b32.xlu0 %v1221, 119
        %v1392 = vpop.permute.xlu0 %1391
        %1393 = vrot.lane.b32.xlu0 %v1222, 119
        %v1394 = vpop.permute.xlu0 %1393
        %v1399 = vadd.f32 %v1383, %v1388
        %v1400 = vadd.f32 %v1384, %v1390
        %v1401 = vadd.f32 %v1385, %v1392
        %v1402 = vadd.f32 %v1386, %v1394
        %1407 = vrot.lane.b32.xlu0 %v1215, 118
        %v1408 = vpop.permute.xlu0 %1407
        %1409 = vrot.lane.b32.xlu0 %v1216, 118
        %v1410 = vpop.permute.xlu0 %1409
        %1411 = vrot.lane.b32.xlu0 %v1217, 118
        %v1412 = vpop.permute.xlu0 %1411
        %1413 = vrot.lane.b32.xlu0 %v1218, 118
        %v1414 = vpop.permute.xlu0 %1413
        %v1419 = vadd.f32 %v1399, %v1408
        %v1420 = vadd.f32 %v1400, %v1410
        %v1421 = vadd.f32 %v1401, %v1412
        %v1422 = vadd.f32 %v1402, %v1414
        %v1423 = vmul.f32 %v1419, 0.0010283801
        %v1424 = vmul.f32 %v1420, 0.0010283801
        %v1425 = vmul.f32 %v1419, 0.007598758
        %v1426 = vmul.f32 %v1420, 0.007598758
        %v1427 = vmul.f32 %v1421, 0.007598758
        %v1431 = vrot.slane %v1425, 1
        %v1432 = vrot.slane %v1426, 1
        %v1433 = vsel %vm438, %v1431, %v1432
        %v1434 = vrot.slane %v1427, 1
        %v1435 = vsel %vm438, %v1432, %v1434
        %v1438 = vadd.f32 %v1423, %v1433
        %v1439 = vadd.f32 %v1424, %v1435
        %v1440 = vmul.f32 %v1419, 0.036000773
        %v1441 = vmul.f32 %v1420, 0.036000773
        %v1442 = vmul.f32 %v1421, 0.036000773
        %v1446 = vrot.slane %v1440, 2
        %v1447 = vrot.slane %v1441, 2
        %v1448 = vsel %vm454, %v1446, %v1447
        %v1449 = vrot.slane %v1442, 2
        %v1450 = vsel %vm454, %v1447, %v1449
        %v1453 = vadd.f32 %v1438, %v1448
        %v1454 = vadd.f32 %v1439, %v1450
        %v1455 = vmul.f32 %v1419, 0.10936069
        %v1456 = vmul.f32 %v1420, 0.10936069
        %v1457 = vmul.f32 %v1421, 0.10936069
        %v1461 = vrot.slane %v1455, 3
        %v1462 = vrot.slane %v1456, 3
        %v1463 = vsel %vm470, %v1461, %v1462
        %v1464 = vrot.slane %v1457, 3
        %v1465 = vsel %vm470, %v1462, %v1464
        %v1468 = vadd.f32 %v1453, %v1463
        %v1469 = vadd.f32 %v1454, %v1465
        %v1470 = vmul.f32 %v1419, 0.21300554
        %v1471 = vmul.f32 %v1420, 0.21300554
        %v1472 = vmul.f32 %v1421, 0.21300554
        %v1476 = vrot.slane %v1470, 4
        %v1477 = vrot.slane %v1471, 4
        %v1478 = vsel %vm486, %v1476, %v1477
        %v1479 = vrot.slane %v1472, 4
        %v1480 = vsel %vm486, %v1477, %v1479
        %v1483 = vadd.f32 %v1468, %v1478
        %v1484 = vadd.f32 %v1469, %v1480
        %v1485 = vmul.f32 %v1419, 0.26601171
        %v1486 = vmul.f32 %v1420, 0.26601171
        %v1487 = vmul.f32 %v1421, 0.26601171
        %v1491 = vrot.slane %v1485, 5
        %v1492 = vrot.slane %v1486, 5
        %v1493 = vsel %vm502, %v1491, %v1492
        %v1494 = vrot.slane %v1487, 5
        %v1495 = vsel %vm502, %v1492, %v1494
        %v1498 = vadd.f32 %v1483, %v1493
        %v1499 = vadd.f32 %v1484, %v1495
        %v1500 = vrot.slane %v1470, 6
        %v1501 = vrot.slane %v1471, 6
        %v1502 = vsel %vm512, %v1500, %v1501
        %v1503 = vrot.slane %v1472, 6
        %v1504 = vsel %vm512, %v1501, %v1503
        %v1507 = vadd.f32 %v1498, %v1502
        %v1508 = vadd.f32 %v1499, %v1504
        %v1509 = vrot.slane %v1455, 7
        %v1510 = vrot.slane %v1456, 7
        %v1511 = vsel %vm522, %v1509, %v1510
        %v1512 = vrot.slane %v1457, 7
        %v1513 = vsel %vm522, %v1510, %v1512
        %v1516 = vadd.f32 %v1507, %v1511
        %v1517 = vadd.f32 %v1508, %v1513
        %v1518 = vadd.f32 %v1516, %v1441
        %v1519 = vadd.f32 %v1517, %v1442
        %v1520 = vmul.f32 %v1422, 0.007598758
        %v1522 = vrot.slane %v1520, 1
        %v1523 = vsel %vm438, %v1434, %v1522
        %v1525 = vadd.f32 %v1518, %v1435
        %v1526 = vadd.f32 %v1519, %v1523
        %v1527 = vmul.f32 %v1421, 0.0010283801
        %v1528 = vmul.f32 %v1422, 0.0010283801
        %v1532 = vrot.slane %v1424, 2
        %v1533 = vrot.slane %v1527, 2
        %v1534 = vsel %vm454, %v1532, %v1533
        %v1535 = vrot.slane %v1528, 2
        %v1536 = vsel %vm454, %v1533, %v1535
        %v1539 = vadd.f32 %v1525, %v1534
        %v1540 = vadd.f32 %v1526, %v1536
        %v1541 = vmul.f32 %v183, %v187
        %v1542 = vmul.f32 %v184, %v188
        %v1543 = vmul.f32 %v185, %v189
        %v1544 = vmul.f32 %v186, %v190
        %v1545 = vmul.f32 %v1541, 0.0010283801
        %v1546 = vmul.f32 %v1542, 0.0010283801
        %v1547 = vmul.f32 %v1543, 0.0010283801
        %v1548 = vmul.f32 %v1544, 0.0010283801
        %v1549 = vmul.f32 %v1541, 0.007598758
        %v1550 = vmul.f32 %v1542, 0.007598758
        %v1551 = vmul.f32 %v1543, 0.007598758
        %v1552 = vmul.f32 %v1544, 0.007598758
        %1557 = vrot.lane.b32.xlu0 %v1549, 127
        %v1558 = vpop.permute.xlu0 %1557
        %1559 = vrot.lane.b32.xlu0 %v1550, 127
        %v1560 = vpop.permute.xlu0 %1559
        %1561 = vrot.lane.b32.xlu0 %v1551, 127
        %v1562 = vpop.permute.xlu0 %1561
        %1563 = vrot.lane.b32.xlu0 %v1552, 127
        %v1564 = vpop.permute.xlu0 %1563
        %v1569 = vadd.f32 %v1545, %v1558
        %v1570 = vadd.f32 %v1546, %v1560
        %v1571 = vadd.f32 %v1547, %v1562
        %v1572 = vadd.f32 %v1548, %v1564
        %v1573 = vmul.f32 %v1541, 0.036000773
        %v1574 = vmul.f32 %v1542, 0.036000773
        %v1575 = vmul.f32 %v1543, 0.036000773
        %v1576 = vmul.f32 %v1544, 0.036000773
        %1581 = vrot.lane.b32.xlu0 %v1573, 126
        %v1582 = vpop.permute.xlu0 %1581
        %1583 = vrot.lane.b32.xlu0 %v1574, 126
        %v1584 = vpop.permute.xlu0 %1583
        %1585 = vrot.lane.b32.xlu0 %v1575, 126
        %v1586 = vpop.permute.xlu0 %1585
        %1587 = vrot.lane.b32.xlu0 %v1576, 126
        %v1588 = vpop.permute.xlu0 %1587
        %v1593 = vadd.f32 %v1569, %v1582
        %v1594 = vadd.f32 %v1570, %v1584
        %v1595 = vadd.f32 %v1571, %v1586
        %v1596 = vadd.f32 %v1572, %v1588
        %v1597 = vmul.f32 %v1541, 0.10936069
        %v1598 = vmul.f32 %v1542, 0.10936069
        %v1599 = vmul.f32 %v1543, 0.10936069
        %v1600 = vmul.f32 %v1544, 0.10936069
        %1605 = vrot.lane.b32.xlu0 %v1597, 125
        %v1606 = vpop.permute.xlu0 %1605
        %1607 = vrot.lane.b32.xlu0 %v1598, 125
        %v1608 = vpop.permute.xlu0 %1607
        %1609 = vrot.lane.b32.xlu0 %v1599, 125
        %v1610 = vpop.permute.xlu0 %1609
        %1611 = vrot.lane.b32.xlu0 %v1600, 125
        %v1612 = vpop.permute.xlu0 %1611
        %v1617 = vadd.f32 %v1593, %v1606
        %v1618 = vadd.f32 %v1594, %v1608
        %v1619 = vadd.f32 %v1595, %v1610
        %v1620 = vadd.f32 %v1596, %v1612
        %v1621 = vmul.f32 %v1541, 0.21300554
        %v1622 = vmul.f32 %v1542, 0.21300554
        %v1623 = vmul.f32 %v1543, 0.21300554
        %v1624 = vmul.f32 %v1544, 0.21300554
        %1629 = vrot.lane.b32.xlu0 %v1621, 124
        %v1630 = vpop.permute.xlu0 %1629
        %1631 = vrot.lane.b32.xlu0 %v1622, 124
        %v1632 = vpop.permute.xlu0 %1631
        %1633 = vrot.lane.b32.xlu0 %v1623, 124
        %v1634 = vpop.permute.xlu0 %1633
        %1635 = vrot.lane.b32.xlu0 %v1624, 124
        %v1636 = vpop.permute.xlu0 %1635
        %v1641 = vadd.f32 %v1617, %v1630
        %v1642 = vadd.f32 %v1618, %v1632
        %v1643 = vadd.f32 %v1619, %v1634
        %v1644 = vadd.f32 %v1620, %v1636
        %v1645 = vmul.f32 %v1541, 0.26601171
        %v1646 = vmul.f32 %v1542, 0.26601171
        %v1647 = vmul.f32 %v1543, 0.26601171
        %v1648 = vmul.f32 %v1544, 0.26601171
        %1653 = vrot.lane.b32.xlu0 %v1645, 123
        %v1654 = vpop.permute.xlu0 %1653
        %1655 = vrot.lane.b32.xlu0 %v1646, 123
        %v1656 = vpop.permute.xlu0 %1655
        %1657 = vrot.lane.b32.xlu0 %v1647, 123
        %v1658 = vpop.permute.xlu0 %1657
        %1659 = vrot.lane.b32.xlu0 %v1648, 123
        %v1660 = vpop.permute.xlu0 %1659
        %v1665 = vadd.f32 %v1641, %v1654
        %v1666 = vadd.f32 %v1642, %v1656
        %v1667 = vadd.f32 %v1643, %v1658
        %v1668 = vadd.f32 %v1644, %v1660
        %1669 = vrot.lane.b32.xlu0 %v1621, 122
        %v1670 = vpop.permute.xlu0 %1669
        %1671 = vrot.lane.b32.xlu0 %v1622, 122
        %v1672 = vpop.permute.xlu0 %1671
        %1673 = vrot.lane.b32.xlu0 %v1623, 122
        %v1674 = vpop.permute.xlu0 %1673
        %1675 = vrot.lane.b32.xlu0 %v1624, 122
        %v1676 = vpop.permute.xlu0 %1675
        %v1681 = vadd.f32 %v1665, %v1670
        %v1682 = vadd.f32 %v1666, %v1672
        %v1683 = vadd.f32 %v1667, %v1674
        %v1684 = vadd.f32 %v1668, %v1676
        %1685 = vrot.lane.b32.xlu0 %v1597, 121
        %v1686 = vpop.permute.xlu0 %1685
        %1687 = vrot.lane.b32.xlu0 %v1598, 121
        %v1688 = vpop.permute.xlu0 %1687
        %1689 = vrot.lane.b32.xlu0 %v1599, 121
        %v1690 = vpop.permute.xlu0 %1689
        %1691 = vrot.lane.b32.xlu0 %v1600, 121
        %v1692 = vpop.permute.xlu0 %1691
        %v1697 = vadd.f32 %v1681, %v1686
        %v1698 = vadd.f32 %v1682, %v1688
        %v1699 = vadd.f32 %v1683, %v1690
        %v1700 = vadd.f32 %v1684, %v1692
        %1701 = vrot.lane.b32.xlu0 %v1573, 120
        %v1702 = vpop.permute.xlu0 %1701
        %1703 = vrot.lane.b32.xlu0 %v1574, 120
        %v1704 = vpop.permute.xlu0 %1703
        %1705 = vrot.lane.b32.xlu0 %v1575, 120
        %v1706 = vpop.permute.xlu0 %1705
        %1707 = vrot.lane.b32.xlu0 %v1576, 120
        %v1708 = vpop.permute.xlu0 %1707
        %v1713 = vadd.f32 %v1697, %v1702
        %v1714 = vadd.f32 %v1698, %v1704
        %v1715 = vadd.f32 %v1699, %v1706
        %v1716 = vadd.f32 %v1700, %v1708
        %1717 = vrot.lane.b32.xlu0 %v1549, 119
        %v1718 = vpop.permute.xlu0 %1717
        %1719 = vrot.lane.b32.xlu0 %v1550, 119
        %v1720 = vpop.permute.xlu0 %1719
        %1721 = vrot.lane.b32.xlu0 %v1551, 119
        %v1722 = vpop.permute.xlu0 %1721
        %1723 = vrot.lane.b32.xlu0 %v1552, 119
        %v1724 = vpop.permute.xlu0 %1723
        %v1729 = vadd.f32 %v1713, %v1718
        %v1730 = vadd.f32 %v1714, %v1720
        %v1731 = vadd.f32 %v1715, %v1722
        %v1732 = vadd.f32 %v1716, %v1724
        %1737 = vrot.lane.b32.xlu0 %v1545, 118
        %v1738 = vpop.permute.xlu0 %1737
        %1739 = vrot.lane.b32.xlu0 %v1546, 118
        %v1740 = vpop.permute.xlu0 %1739
        %1741 = vrot.lane.b32.xlu0 %v1547, 118
        %v1742 = vpop.permute.xlu0 %1741
        %1743 = vrot.lane.b32.xlu0 %v1548, 118
        %v1744 = vpop.permute.xlu0 %1743
        %v1749 = vadd.f32 %v1729, %v1738
        %v1750 = vadd.f32 %v1730, %v1740
        %v1751 = vadd.f32 %v1731, %v1742
        %v1752 = vadd.f32 %v1732, %v1744
        %v1753 = vmul.f32 %v1749, 0.0010283801
        %v1754 = vmul.f32 %v1750, 0.0010283801
        %v1755 = vmul.f32 %v1749, 0.007598758
        %v1756 = vmul.f32 %v1750, 0.007598758
        %v1757 = vmul.f32 %v1751, 0.007598758
        %v1761 = vrot.slane %v1755, 1
        %v1762 = vrot.slane %v1756, 1
        %v1763 = vsel %vm438, %v1761, %v1762
        %v1764 = vrot.slane %v1757, 1
        %v1765 = vsel %vm438, %v1762, %v1764
        %v1768 = vadd.f32 %v1753, %v1763
        %v1769 = vadd.f32 %v1754, %v1765
        %v1770 = vmul.f32 %v1749, 0.036000773
        %v1771 = vmul.f32 %v1750, 0.036000773
        %v1772 = vmul.f32 %v1751, 0.036000773
        %v1776 = vrot.slane %v1770, 2
        %v1777 = vrot.slane %v1771, 2
        %v1778 = vsel %vm454, %v1776, %v1777
        %v1779 = vrot.slane %v1772, 2
        %v1780 = vsel %vm454, %v1777, %v1779
        %v1783 = vadd.f32 %v1768, %v1778
        %v1784 = vadd.f32 %v1769, %v1780
        %v1785 = vmul.f32 %v1749, 0.10936069
        %v1786 = vmul.f32 %v1750, 0.10936069
        %v1787 = vmul.f32 %v1751, 0.10936069
        %v1791 = vrot.slane %v1785, 3
        %v1792 = vrot.slane %v1786, 3
        %v1793 = vsel %vm470, %v1791, %v1792
        %v1794 = vrot.slane %v1787, 3
        %v1795 = vsel %vm470, %v1792, %v1794
        %v1798 = vadd.f32 %v1783, %v1793
        %v1799 = vadd.f32 %v1784, %v1795
        %v1800 = vmul.f32 %v1749, 0.21300554
        %v1801 = vmul.f32 %v1750, 0.21300554
        %v1802 = vmul.f32 %v1751, 0.21300554
        %v1806 = vrot.slane %v1800, 4
        %v1807 = vrot.slane %v1801, 4
        %v1808 = vsel %vm486, %v1806, %v1807
        %v1809 = vrot.slane %v1802, 4
        %v1810 = vsel %vm486, %v1807, %v1809
        %v1813 = vadd.f32 %v1798, %v1808
        %v1814 = vadd.f32 %v1799, %v1810
        %v1815 = vmul.f32 %v1749, 0.26601171
        %v1816 = vmul.f32 %v1750, 0.26601171
        %v1817 = vmul.f32 %v1751, 0.26601171
        %v1821 = vrot.slane %v1815, 5
        %v1822 = vrot.slane %v1816, 5
        %v1823 = vsel %vm502, %v1821, %v1822
        %v1824 = vrot.slane %v1817, 5
        %v1825 = vsel %vm502, %v1822, %v1824
        %v1828 = vadd.f32 %v1813, %v1823
        %v1829 = vadd.f32 %v1814, %v1825
        %v1830 = vrot.slane %v1800, 6
        %v1831 = vrot.slane %v1801, 6
        %v1832 = vsel %vm512, %v1830, %v1831
        %v1833 = vrot.slane %v1802, 6
        %v1834 = vsel %vm512, %v1831, %v1833
        %v1837 = vadd.f32 %v1828, %v1832
        %v1838 = vadd.f32 %v1829, %v1834
        %v1839 = vrot.slane %v1785, 7
        %v1840 = vrot.slane %v1786, 7
        %v1841 = vsel %vm522, %v1839, %v1840
        %v1842 = vrot.slane %v1787, 7
        %v1843 = vsel %vm522, %v1840, %v1842
        %v1846 = vadd.f32 %v1837, %v1841
        %v1847 = vadd.f32 %v1838, %v1843
        %v1848 = vadd.f32 %v1846, %v1771
        %v1849 = vadd.f32 %v1847, %v1772
        %v1850 = vmul.f32 %v1752, 0.007598758
        %v1852 = vrot.slane %v1850, 1
        %v1853 = vsel %vm438, %v1764, %v1852
        %v1855 = vadd.f32 %v1848, %v1765
        %v1856 = vadd.f32 %v1849, %v1853
        %v1857 = vmul.f32 %v1751, 0.0010283801
        %v1858 = vmul.f32 %v1752, 0.0010283801
        %v1862 = vrot.slane %v1754, 2
        %v1863 = vrot.slane %v1857, 2
        %v1864 = vsel %vm454, %v1862, %v1863
        %v1865 = vrot.slane %v1858, 2
        %v1866 = vsel %vm454, %v1863, %v1865
        %v1869 = vadd.f32 %v1855, %v1864
        %v1870 = vadd.f32 %v1856, %v1866
        %v1871 = vmul.f32 %v553, %v879
        %v1872 = vmul.f32 %v554, %v880
        %v1873 = vmul.f32 %v553, %v553
        %v1874 = vmul.f32 %v554, %v554
        %v1875 = vsub.f32 %v1209, %v1873
        %v1876 = vsub.f32 %v1210, %v1874
        %v1877 = vmul.f32 %v879, %v879
        %v1878 = vmul.f32 %v880, %v880
        %v1879 = vsub.f32 %v1539, %v1877
        %v1880 = vsub.f32 %v1540, %v1878
        %v1881 = vsub.f32 %v1869, %v1871
        %v1882 = vsub.f32 %v1870, %v1872
        %v1883 = vmul.f32 %v1871, 2.0
        %v1884 = vmul.f32 %v1872, 2.0
        %v1885 = vadd.f32 %v1883, 0.0001
        %v1886 = vadd.f32 %v1884, 0.0001
        %v1887 = vmul.f32 %v1881, 2.0
        %v1888 = vmul.f32 %v1882, 2.0
        %v1889 = vadd.f32 %v1887, 0.0009
        %v1890 = vadd.f32 %v1888, 0.0009
        %v1891 = vmul.f32 %v1885, %v1889
        %v1892 = vmul.f32 %v1886, %v1890
        %v1893 = vadd.f32 %v1873, %v1877
        %v1894 = vadd.f32 %v1874, %v1878
        %v1895 = vadd.f32 %v1893, 0.0001
        %v1896 = vadd.f32 %v1894, 0.0001
        %v1897 = vadd.f32 %v1875, %v1879
        %v1898 = vadd.f32 %v1876, %v1880
        %v1899 = vadd.f32 %v1897, 0.0009
        %v1900 = vadd.f32 %v1898, 0.0009
        %v1901 = vmul.f32 %v1895, %v1899
        %v1902 = vmul.f32 %v1896, %v1900
        %v1903 = vld [vmem:[#allocation4] sm:$0x1]
        %v1904 = vrcp.pop %v1901
        %v1905 = vmul.f32 %v1891, %v1904
        %v1906 = vrcp.pop %v1902
        %v1907 = vmul.f32 %v1892, %v1906
        %vm1908 = vcmask 130048
        %v1909 = vsel %vm1908, %v1905, 0.0
        %v1910 = vsel %vm1908, %v1907, 0.0
        %v1911 = vadd.f32 %v1909, %v1910
        %1912 = vadd.xlane.f32.xlu0 %v1911
        %v1913 = vpop.xlane.xlu0 %1912
        %v1914 = vrot.slane %v1913, 4
        %v1915 = vadd.f32 %v1913, %v1914
        %v1916 = vrot.slane %v1915, 2
        %v1917 = vadd.f32 %v1915, %v1916
        %v1918 = vrot.slane %v1917, 1
        %v1919 = vadd.f32 %v1917, %v1918
        %s1920 = vtos %v1919
        %v1921 = vstv %s1920
        %v1922 = vadd.f32 %v1903, %v1921
        %1923 = vst.msk [vmem:[#allocation4] sm:$0x1] %vm220, %v1922
        %p1924 = scmp.eq.s32.totalorder %s17, 1
        // Predicated region
        $region33: #{crowd_counter_forward.3} parent=27 // pred_check
          %p1925 = pneg %p1924
        $region34: #{crowd_counter_forward.3} parent=27 // pred_check_branch
          %1927 = sbr.rel (%p1925) target = $region36
        $region35: #{crowd_counter_forward.3} parent=27 // pred_region
          %v1928 = vld [vmem:[#allocation2] sm:$0x1]
          %v1929 = vrcp.pop 512.0
          %v1930 = vmul.f32 %v1928, %v1929
          %1931 = vst.msk [vmem:[#allocation2] sm:$0x1] %vm220, %v1930
          %v1932 = vld [vmem:[#allocation4] sm:$0x1]
          %v1933 = vmul.f32 %v1932, %v1929
          %v1934 = vsub.f32 1.0, %v1933
          %1935 = vst.msk [vmem:[#allocation4] sm:$0x1] %vm220, %v1934
        $region36: #{crowd_counter_forward.3} parent=27 // pred_fallthru
          _
        // Predicated region
        $region37: #{crowd_counter_forward.3} parent=27 // pred_check
          %p1936 = pneg %p82
        $region38: #{crowd_counter_forward.3} parent=27 // pred_check_branch
          %1938 = sbr.rel (%p1936) target = $region40
        $region39: #{crowd_counter_forward.3} parent=27 // pred_region
          %s1940 = ssub.s32 16, 16
          %1941 = vsyncadd [#allocation3], %s1940
          %s1943 = sshll.u32 [#allocation2], 4
          %s1944 = int_to_ptr.vmem [resolvable:$true] %s1943
          %1946 = dma.vmem_to_hbm [thread:$0]  %s1944, 16, %s2, [#allocation3]
        $region40: #{crowd_counter_forward.3} parent=27 // pred_fallthru
          _
        // Predicated region
        $region41: #{crowd_counter_forward.3} parent=27 // pred_check
          %p1947 = pneg %p103
        $region42: #{crowd_counter_forward.3} parent=27 // pred_check_branch
          %1949 = sbr.rel (%p1947) target = $region44
        $region43: #{crowd_counter_forward.3} parent=27 // pred_region
          %s1951 = ssub.s32 16, 16
          %1952 = vsyncadd [#allocation5], %s1951
          %s1954 = sshll.u32 [#allocation4], 4
          %s1955 = int_to_ptr.vmem [resolvable:$true] %s1954
          %1957 = dma.vmem_to_hbm [thread:$0]  %s1955, 16, %s3, [#allocation5]
        $region44: #{crowd_counter_forward.3} parent=27 // pred_fallthru
          _
        // Predicated region
        $region45: #{crowd_counter_forward.3} parent=27 // pred_check
          %p1958 = pneg %p82
        $region46: #{crowd_counter_forward.3} parent=27 // pred_check_branch
          %1960 = sbr.rel (%p1958) target = $region48
        $region47: #{crowd_counter_forward.3} parent=27 // pred_region
          %1961 = dma.done [#allocation3], 16
        $region48: #{crowd_counter_forward.3} parent=27 // pred_fallthru
          _
        // Predicated region
        $region49: #{crowd_counter_forward.3} parent=27 // pred_check
          %p1962 = pneg %p103
        $region50: #{crowd_counter_forward.3} parent=27 // pred_check_branch
          %1964 = sbr.rel (%p1962) target = $region52
        $region51: #{crowd_counter_forward.3} parent=27 // pred_region
          %1965 = dma.done [#allocation5], 16
        $region52: #{crowd_counter_forward.3} parent=27 // pred_fallthru
          _
      $region28: #{crowd_counter_forward.3} parent=5 // pred_fallthru
        _
      %p1966 = scmp.le.s32.totalorder 2, %s12
      // Predicated region
      $region53: #{crowd_counter_forward.3} parent=5 // pred_check
        %p1967 = pneg %p1966
      $region54: #{crowd_counter_forward.3} parent=5 // pred_check_branch
        %1969 = sbr.rel (%p1967) target = $region56
      $region55: #{crowd_counter_forward.3} parent=5 // pred_region
        %s1970 = ssub.s32 %s12, 2
      $region56: #{crowd_counter_forward.3} parent=5 // pred_fallthru
        _
    $region6: #{crowd_counter_forward.3} parent=1 // loop_footer
      %s16 = sadd.s32 1, %s12
    $region7: #{crowd_counter_forward.3} parent=1 // loop_footer_branch
      %11 = sbr.rel target = $region3
    $region8: #{crowd_counter_forward.3} parent=1 // loop_exit
      _
    %1971 = vsyncpa [#allocation3], 1
    %s1972 = scalar_lea.sflag [#allocation3], 1
    %1973 = vsyncpa %s1972, 1
    %1974 = vsyncpa [#allocation5], 1

// kernel: crowd_counter_forward.2
$region0: #{crowd_counter_forward.2}
  #allocation0 [shape = 'u32[]', space=smem, size = 0x4, offset = 0x4, fixed_abs, tag = 'smem constant byte address 0x4 - core index']
  #allocation1 [shape = 'u32[144,128]{1,0:T(1,128)}', space=vmem, size = 0x12000, scoped, tag = 'internal scratch']
  #allocation2 [shape = 'f32[1,1]{1,0:T(1,128)S(1)}', space=vmem, size = 0x200, scoped, tag = 'scoped memory for crowd_counter_forward.2']
  %s0 = inlined_call_operand.vmem [shape: f32[2,3,342], index: 0, kind: input, shape index: {}]
  %s1 = inlined_call_operand.vmem [shape: f32[9,16,3], index: 1, kind: input, shape index: {}]
  %s2 = inlined_call_operand.vmem [shape: f32[16,1], index: 2, kind: input, shape index: {}]
  %s3 = inlined_call_operand.vmem [shape: f32[1,16], index: 3, kind: input, shape index: {}]
  %s4 = inlined_call_operand.<no memory space> [shape: f32[1,1], index: 4, kind: input, shape index: {}]
  %s5 = inlined_call_operand.vmem [shape: f32[2,1,288], index: 5, kind: output, shape index: {}]
  %s6 = sld [smem:[#allocation0]]
  $region53: #{crowd_counter_forward.2} parent=0
    _
  %s8 = ssub.s32 1, %s6
  %s9 = scalar_select 0, %s8, %s6
  %v10 = vstv %s4
  %11 = vst [vmem:[#allocation2] sm:$0x1] %v10
  loop: start=0, step=1, limit=4
  $region2: #{crowd_counter_forward.2} parent=0 // loop_pre_header
    _
  $region3: #{crowd_counter_forward.2} parent=0 // loop_header
    %s13 = sphi 0, %s17
    %p14 = scmp.ge.s32.totalorder %s13, 4
    %s23 = sphi 0, %s25
    %s26 = sphi 0, %s23
    %s27 = sphi 0, %s26
    %s43 = sphi 0, %s27
    %s47 = sphi 0, %s47
    %s49 = sphi 0, %s47
    %s50 = sphi 0, %s49
    %s64 = sphi 0, %s50
    %s68 = sphi 0, %s68
    %s70 = sphi 0, %s68
    %s71 = sphi 0, %s70
    %s85 = sphi 0, %s71
    %s89 = sphi 0, %s89
    %s91 = sphi 0, %s89
    %s92 = sphi 0, %s91
    %s106 = sphi 0, %s92
    %s110 = sphi 0, %s110
    %s112 = sphi 0, %s110
    %s113 = sphi 0, %s112
    %s127 = sphi 0, %s113
    %s133 = sphi 0, %s135
    %s136 = sphi 0, %s133
    %s137 = sphi 0, %s136
    %s153 = sphi 0, %s137
  $region4: #{crowd_counter_forward.2} parent=0 // loop_header_branch
    %16 = sbr.rel (%p14) target = $region8
  $region5: #{crowd_counter_forward.2} parent=0 // loop_body
    %s18 = ssub.s32 %s13, 1
    %s19 = ssub.s32 %s13, 2
    %s20 = sadd.s32 %s13, 1
    %s21 = ssub.s32 %s13, %s20
    %p22 = scmp.eq.s32.totalorder %s21, 0
    %s24 = sadd.s32 %s23, 1
    %s25 = scalar_select %p22, %s23, %s24
    %p28 = pneg %p22
    %p29 = scmp.eq.s32.totalorder %s13, 1
    %p30 = por %p28, %p29
    %p31 = scmp.ne.s32.totalorder %s23, %s26
    %p32 = scmp.eq.s32.totalorder %s13, 0
    %p33 = por %p31, %p32
    %p34 = scmp.ne.s32.totalorder %s23, %s26
    %p35 = scmp.eq.s32.totalorder %s18, 1
    %p36 = por %p34, %p35
    %p37 = scmp.ne.s32.totalorder %s26, %s27
    %p38 = scmp.eq.s32.totalorder %s18, 0
    %p39 = por %p37, %p38
    %p40 = scmp.ne.s32.totalorder %s26, %s27
    %p41 = scmp.eq.s32.totalorder %s19, 1
    %p42 = por %p40, %p41
    %p44 = scmp.ne.s32.totalorder %s27, %s43
    %p45 = scmp.eq.s32.totalorder %s19, 0
    %p46 = por %p44, %p45
    %s48 = sadd.s32 %s47, 1
    %p51 = scmp.eq.s32.totalorder %s13, 1
    %p52 = scmp.ne.s32.totalorder %s47, %s49
    %p53 = scmp.eq.s32.totalorder %s13, 0
    %p54 = por %p52, %p53
    %p55 = scmp.ne.s32.totalorder %s47, %s49
    %p56 = scmp.eq.s32.totalorder %s18, 1
    %p57 = por %p55, %p56
    %p58 = scmp.ne.s32.totalorder %s49, %s50
    %p59 = scmp.eq.s32.totalorder %s18, 0
    %p60 = por %p58, %p59
    %p61 = scmp.ne.s32.totalorder %s49, %s50
    %p62 = scmp.eq.s32.totalorder %s19, 1
    %p63 = por %p61, %p62
    %p65 = scmp.ne.s32.totalorder %s50, %s64
    %p66 = scmp.eq.s32.totalorder %s19, 0
    %p67 = por %p65, %p66
    %s69 = sadd.s32 %s68, 1
    %p72 = scmp.eq.s32.totalorder %s13, 1
    %p73 = scmp.ne.s32.totalorder %s68, %s70
    %p74 = scmp.eq.s32.totalorder %s13, 0
    %p75 = por %p73, %p74
    %p76 = scmp.ne.s32.totalorder %s68, %s70
    %p77 = scmp.eq.s32.totalorder %s18, 1
    %p78 = por %p76, %p77
    %p79 = scmp.ne.s32.totalorder %s70, %s71
    %p80 = scmp.eq.s32.totalorder %s18, 0
    %p81 = por %p79, %p80
    %p82 = scmp.ne.s32.totalorder %s70, %s71
    %p83 = scmp.eq.s32.totalorder %s19, 1
    %p84 = por %p82, %p83
    %p86 = scmp.ne.s32.totalorder %s71, %s85
    %p87 = scmp.eq.s32.totalorder %s19, 0
    %p88 = por %p86, %p87
    %s90 = sadd.s32 %s89, 1
    %p93 = scmp.eq.s32.totalorder %s13, 1
    %p94 = scmp.ne.s32.totalorder %s89, %s91
    %p95 = scmp.eq.s32.totalorder %s13, 0
    %p96 = por %p94, %p95
    %p97 = scmp.ne.s32.totalorder %s89, %s91
    %p98 = scmp.eq.s32.totalorder %s18, 1
    %p99 = por %p97, %p98
    %p100 = scmp.ne.s32.totalorder %s91, %s92
    %p101 = scmp.eq.s32.totalorder %s18, 0
    %p102 = por %p100, %p101
    %p103 = scmp.ne.s32.totalorder %s91, %s92
    %p104 = scmp.eq.s32.totalorder %s19, 1
    %p105 = por %p103, %p104
    %p107 = scmp.ne.s32.totalorder %s92, %s106
    %p108 = scmp.eq.s32.totalorder %s19, 0
    %p109 = por %p107, %p108
    %s111 = sadd.s32 %s110, 1
    %p114 = scmp.eq.s32.totalorder %s13, 1
    %p115 = scmp.ne.s32.totalorder %s110, %s112
    %p116 = scmp.eq.s32.totalorder %s13, 0
    %p117 = por %p115, %p116
    %p118 = scmp.ne.s32.totalorder %s110, %s112
    %p119 = scmp.eq.s32.totalorder %s18, 1
    %p120 = por %p118, %p119
    %p121 = scmp.ne.s32.totalorder %s112, %s113
    %p122 = scmp.eq.s32.totalorder %s18, 0
    %p123 = por %p121, %p122
    %p124 = scmp.ne.s32.totalorder %s112, %s113
    %p125 = scmp.eq.s32.totalorder %s19, 1
    %p126 = por %p124, %p125
    %p128 = scmp.ne.s32.totalorder %s113, %s127
    %p129 = scmp.eq.s32.totalorder %s19, 0
    %p130 = por %p128, %p129
    %s131 = ssub.s32 %s13, %s20
    %p132 = scmp.eq.s32.totalorder %s131, 0
    %s134 = sadd.s32 %s133, 1
    %s135 = scalar_select %p132, %s133, %s134
    %p138 = pneg %p132
    %p139 = scmp.eq.s32.totalorder %s13, 1
    %p140 = por %p138, %p139
    %p141 = scmp.ne.s32.totalorder %s133, %s136
    %p142 = scmp.eq.s32.totalorder %s13, 0
    %p143 = por %p141, %p142
    %p144 = scmp.ne.s32.totalorder %s133, %s136
    %p145 = scmp.eq.s32.totalorder %s18, 1
    %p146 = por %p144, %p145
    %p147 = scmp.ne.s32.totalorder %s136, %s137
    %p148 = scmp.eq.s32.totalorder %s18, 0
    %p149 = por %p147, %p148
    %p150 = scmp.ne.s32.totalorder %s136, %s137
    %p151 = scmp.eq.s32.totalorder %s19, 1
    %p152 = por %p150, %p151
    %p154 = scmp.ne.s32.totalorder %s137, %s153
    %p155 = scmp.eq.s32.totalorder %s19, 0
    %p156 = por %p154, %p155
    %p157 = scmp.le.s32.totalorder 1, %s13
    %p158 = scmp.lt.s32.totalorder %s13, 3
    %p159 = pnand %p157, %p158
    %p160 = pneg %p159
    // Predicated region
    $region9: #{crowd_counter_forward.2} parent=5 // pred_check
      _
    $region10: #{crowd_counter_forward.2} parent=5 // pred_check_branch
      %162 = sbr.rel (%p159) target = $region12
    $region11: #{crowd_counter_forward.2} parent=5 // pred_region
      %s163 = ssub.s32 %s13, 1
      // Predicated region
      $region13: #{crowd_counter_forward.2} parent=11 // pred_check
        %p164 = pneg %p60
      $region14: #{crowd_counter_forward.2} parent=11 // pred_check_branch
        %166 = sbr.rel (%p164) target = $region16
      $region15: #{crowd_counter_forward.2} parent=11 // pred_region
        _
      $region16: #{crowd_counter_forward.2} parent=11 // pred_fallthru
        _
      // Predicated region
      $region17: #{crowd_counter_forward.2} parent=11 // pred_check
        %p167 = pneg %p81
      $region18: #{crowd_counter_forward.2} parent=11 // pred_check_branch
        %169 = sbr.rel (%p167) target = $region20
      $region19: #{crowd_counter_forward.2} parent=11 // pred_region
        _
      $region20: #{crowd_counter_forward.2} parent=11 // pred_fallthru
        _
      // Predicated region
      $region21: #{crowd_counter_forward.2} parent=11 // pred_check
        %p170 = pneg %p102
      $region22: #{crowd_counter_forward.2} parent=11 // pred_check_branch
        %172 = sbr.rel (%p170) target = $region24
      $region23: #{crowd_counter_forward.2} parent=11 // pred_region
        _
      $region24: #{crowd_counter_forward.2} parent=11 // pred_fallthru
        _
      // Predicated region
      $region25: #{crowd_counter_forward.2} parent=11 // pred_check
        %p173 = pneg %p123
      $region26: #{crowd_counter_forward.2} parent=11 // pred_check_branch
        %175 = sbr.rel (%p173) target = $region28
      $region27: #{crowd_counter_forward.2} parent=11 // pred_region
        _
      $region28: #{crowd_counter_forward.2} parent=11 // pred_fallthru
        _
    $region12: #{crowd_counter_forward.2} parent=5 // pred_fallthru
      _
    %p176 = scmp.lt.s32.totalorder %s13, 2
    // Predicated region
    $region29: #{crowd_counter_forward.2} parent=5 // pred_check
      %p177 = pneg %p176
    $region30: #{crowd_counter_forward.2} parent=5 // pred_check_branch
      %179 = sbr.rel (%p177) target = $region32
    $region31: #{crowd_counter_forward.2} parent=5 // pred_region
      // Predicated region
      $region33: #{crowd_counter_forward.2} parent=31 // pred_check
        %p180 = pneg %p33
      $region34: #{crowd_counter_forward.2} parent=31 // pred_check_branch
        %182 = sbr.rel (%p180) target = $region36
      $region35: #{crowd_counter_forward.2} parent=31 // pred_region
        %p183 = scmp.lt.s32.totalorder %s13, 1
        %s184 = scalar_select %p183, %s13, 1
        %s185 = smul.addr %s184, 3
        %s186 = smul.addr %s185, 4
        %s187 = scalar_lea.vmem %s0, %s186
      $region36: #{crowd_counter_forward.2} parent=31 // pred_fallthru
        _
    $region32: #{crowd_counter_forward.2} parent=5 // pred_fallthru
      _
    %p188 = scmp.le.s32.totalorder 1, %s13
    %p189 = scmp.lt.s32.totalorder %s13, 3
    %p190 = pnand %p188, %p189
    %p191 = pneg %p190
    // Predicated region
    $region37: #{crowd_counter_forward.2} parent=5 // pred_check
      _
    $region38: #{crowd_counter_forward.2} parent=5 // pred_check_branch
      %193 = sbr.rel (%p190) target = $region40
    $region39: #{crowd_counter_forward.2} parent=5 // pred_region
      %s194 = ssub.s32 %s13, 1
      %p195 = scmp.lt.s32.totalorder %s18, 1
      %s196 = scalar_select %p195, %s18, 1
      %s197 = smul.addr %s196, 3
      %s198 = smul.addr %s197, 4
      %s199 = scalar_lea.vmem %s0, %s198
      %p200 = pneg %p39
      %p201 = pneg %p36
      %p202 = pneg %p60
      %p203 = pneg %p57
      %p204 = pneg %p81
      %p205 = pneg %p78
      %p206 = pneg %p102
      %p207 = pneg %p99
      %p208 = pneg %p123
      %p209 = pneg %p120
      %p210 = pneg %p149
      %p211 = pneg %p146
      %p212 = scmp.lt.s32.totalorder %s18, 1
      %s213 = scalar_select %p212, %s18, 1
      %s214 = smul.addr %s213, 3
      %s215 = scalar_lea.vmem %s5, %s214
      %p216 = scmp.lt.s32.totalorder %s18, 1
      %s217 = scalar_select %p216, %s18, 1
      %s218 = smul.addr %s217, 3
      %s219 = smul.addr %s218, 4
      %s220 = scalar_lea.vmem %s0, %s219
      %p221 = scmp.lt.s32.totalorder %s18, 1
      %s222 = scalar_select %p221, %s18, 1
      %s223 = smul.addr %s222, 3
      %s224 = scalar_lea.vmem %s5, %s223
      %v225 = vld [vmem:[%s220] sm:$0x77]
      %v226 = vld [vmem:[%s220 + $0x8] sm:$0x7]
      %v227 = vld [vmem:[%s1] sm:$0xff]
      %v228 = vld [vmem:[%s1 + $0x8] sm:$0xff]
      %s229 = scalar_lea.vmem %s1, 16
      %v230 = vld [vmem:[%s229] sm:$0xff]
      %v231 = vld [vmem:[%s229 + $0x8] sm:$0xff]
      %v234 = vcombine.high %v225, %v225
      %235 = vrot.lane.b32.xlu0 %v225, 127
      %v236 = vpop.permute.xlu0 %235
      %237 = vrot.lane.b32.xlu0 %v234, 127
      %v238 = vpop.permute.xlu0 %237
      %239 = vrot.lane.b32.xlu0 %v226, 127
      %v240 = vpop.permute.xlu0 %239
      %vm241 = vcmask 1039360
      %v242 = vsel %vm241, %v236, %v238
      %v243 = vsel %vm241, %v238, %v240
      %vm244 = vcmask 23552
      %v246 = vsel %vm244, %v230, 0
      %v249 = vsel %vm244, %v231, 0
      %vm251 = vcmask 1042432
      %v252 = vsel %vm251, %v242, 0
      %v254 = vsel %vm251, %v243, 0
      %v256 = vsel %vm251, %v240, 0
      %258 = vmatprep.subr.mxu0 %v254
      %259 = vmatpush1.msra.mxu0 %v252
      %260 = vmatprep.subr.mxu0 0.0
      %261 = vmatpush1.msra.mxu0 0.0
      %262 = vmatprep.subr.mxu0 0.0
      %263 = vmatpush1.msra.mxu0 0.0
      %264 = vmatprep.subr.mxu0 0.0
      %265 = vmatpush1.msra.mxu0 0.0
      %266 = vmatprep.subr.mxu0 0.0
      %267 = vmatpush1.msra.mxu0 0.0
      %268 = vmatprep.subr.mxu0 0.0
      %269 = vmatpush1.msra.mxu0 0.0
      %270 = vmatprep.subr.mxu0 0.0
      %271 = vmatpush1.msra.mxu0 0.0
      %272 = vmatprep.subr.mxu0 0.0
      %273 = vmatpush1.msra.mxu0 0.0
      %274 = vmatprep.subr.mxu0 0.0
      %275 = vmatpush1.msra.mxu0 0.0
      %276 = vmatprep.subr.mxu0 0.0
      %277 = vmatpush1.msra.mxu0 0.0
      %278 = vmatprep.subr.mxu0 0.0
      %279 = vmatpush1.msra.mxu0 0.0
      %280 = vmatprep.subr.mxu0 0.0
      %281 = vmatpush1.msra.mxu0 0.0
      %282 = vmatprep.subr.mxu0 0.0
      %283 = vmatpush1.msra.mxu0 0.0
      %284 = vmatprep.subr.mxu0 0.0
      %285 = vmatpush1.msra.mxu0 0.0
      %286 = vmatprep.subr.mxu0 0.0
      %287 = vmatpush1.msra.mxu0 0.0
      %288 = vmatprep.subr.mxu0 0.0
      %289 = vmatpush1.msra.mxu0 0.0
      %290 = vmatprep.subr.mxu0 0.0
      %291 = vmatpush1.msra.mxu0 0.0
      %292 = vmatprep.subr.mxu0 0.0
      %293 = vmatpush1.msra.mxu0 0.0
      %294 = vmatprep.subr.mxu0 0.0
      %295 = vmatpush1.msra.mxu0 0.0
      %296 = vmatprep.subr.mxu0 0.0
      %297 = vmatpush1.msra.mxu0 0.0
      %298 = vmatprep.subr.mxu0 0.0
      %299 = vmatpush1.msra.mxu0 0.0
      %300 = vmatprep.subr.mxu0 0.0
      %301 = vmatpush1.msra.mxu0 0.0
      %302 = vmatprep.subr.mxu0 0.0
      %303 = vmatpush1.msra.mxu0 0.0
      %304 = vmatprep.subr.mxu0 0.0
      %305 = vmatpush1.msra.mxu0 0.0
      %306 = vmatprep.subr.mxu0 0.0
      %307 = vmatpush1.msra.mxu0 0.0
      %308 = vmatprep.subr.mxu0 0.0
      %309 = vmatpush1.msra.mxu0 0.0
      %310 = vmatprep.subr.mxu0 0.0
      %311 = vmatpush1.msra.mxu0 0.0
      %312 = vmatprep.subr.mxu0 0.0
      %313 = vmatpush1.msra.mxu0 0.0
      %314 = vmatprep.subr.mxu0 0.0
      %315 = vmatpush1.msra.mxu0 0.0
      %316 = vmatprep.subr.mxu0 0.0
      %317 = vmatpush1.msra.mxu0 0.0
      %318 = vmatprep.subr.mxu0 0.0
      %319 = vmatpush1.msra.mxu0 0.0
      %320 = vmatprep.subr.mxu0 0.0
      %321 = vmatpush1.msra.mxu0 0.0
      %322 = vmatprep.mubr.f32.mxu0 0.0
      %323 = vmatmul.mubr.f32.gmra.mrb[0].mxu0 %v246
      %v324 = vpop.f32.mrb[0].mxu0
      %v325 = vadd.f32 0.0, %v324
      %v326 = vpop.f32.mrb[0].mxu0
      %v327 = vadd.f32 0.0, %v326
      %328 = vmatprep.mubr.f32.mxu0 0.0
      %329 = vmatmul.mubr.f32.gmra.mrb[0].mxu0 %v249
      %v330 = vpop.f32.mrb[0].mxu0
      %v331 = vadd.f32 0.0, %v330
      %v332 = vpop.f32.mrb[0].mxu0
      %v333 = vadd.f32 0.0, %v332
      %334 = vdwg.mxu0
      %335 = vmatprep.subr.mxu0 0.0
      %336 = vmatpush1.msra.mxu0 %v256
      %337 = vmatprep.subr.mxu0 0.0
      %338 = vmatpush1.msra.mxu0 0.0
      %339 = vmatprep.subr.mxu0 0.0
      %340 = vmatpush1.msra.mxu0 0.0
      %341 = vmatprep.subr.mxu0 0.0
      %342 = vmatpush1.msra.mxu0 0.0
      %343 = vmatprep.subr.mxu0 0.0
      %344 = vmatpush1.msra.mxu0 0.0
      %345 = vmatprep.subr.mxu0 0.0
      %346 = vmatpush1.msra.mxu0 0.0
      %347 = vmatprep.subr.mxu0 0.0
      %348 = vmatpush1.msra.mxu0 0.0
      %349 = vmatprep.subr.mxu0 0.0
      %350 = vmatpush1.msra.mxu0 0.0
      %351 = vmatprep.subr.mxu0 0.0
      %352 = vmatpush1.msra.mxu0 0.0
      %353 = vmatprep.subr.mxu0 0.0
      %354 = vmatpush1.msra.mxu0 0.0
      %355 = vmatprep.subr.mxu0 0.0
      %356 = vmatpush1.msra.mxu0 0.0
      %357 = vmatprep.subr.mxu0 0.0
      %358 = vmatpush1.msra.mxu0 0.0
      %359 = vmatprep.subr.mxu0 0.0
      %360 = vmatpush1.msra.mxu0 0.0
      %361 = vmatprep.subr.mxu0 0.0
      %362 = vmatpush1.msra.mxu0 0.0
      %363 = vmatprep.subr.mxu0 0.0
      %364 = vmatpush1.msra.mxu0 0.0
      %365 = vmatprep.subr.mxu0 0.0
      %366 = vmatpush1.msra.mxu0 0.0
      %367 = vmatprep.subr.mxu0 0.0
      %368 = vmatpush1.msra.mxu0 0.0
      %369 = vmatprep.subr.mxu0 0.0
      %370 = vmatpush1.msra.mxu0 0.0
      %371 = vmatprep.subr.mxu0 0.0
      %372 = vmatpush1.msra.mxu0 0.0
      %373 = vmatprep.subr.mxu0 0.0
      %374 = vmatpush1.msra.mxu0 0.0
      %375 = vmatprep.subr.mxu0 0.0
      %376 = vmatpush1.msra.mxu0 0.0
      %377 = vmatprep.subr.mxu0 0.0
      %378 = vmatpush1.msra.mxu0 0.0
      %379 = vmatprep.subr.mxu0 0.0
      %380 = vmatpush1.msra.mxu0 0.0
      %381 = vmatprep.subr.mxu0 0.0
      %382 = vmatpush1.msra.mxu0 0.0
      %383 = vmatprep.subr.mxu0 0.0
      %384 = vmatpush1.msra.mxu0 0.0
      %385 = vmatprep.subr.mxu0 0.0
      %386 = vmatpush1.msra.mxu0 0.0
      %387 = vmatprep.subr.mxu0 0.0
      %388 = vmatpush1.msra.mxu0 0.0
      %389 = vmatprep.subr.mxu0 0.0
      %390 = vmatpush1.msra.mxu0 0.0
      %391 = vmatprep.subr.mxu0 0.0
      %392 = vmatpush1.msra.mxu0 0.0
      %393 = vmatprep.subr.mxu0 0.0
      %394 = vmatpush1.msra.mxu0 0.0
      %395 = vmatprep.subr.mxu0 0.0
      %396 = vmatpush1.msra.mxu0 0.0
      %397 = vmatprep.subr.mxu0 0.0
      %398 = vmatpush1.msra.mxu0 0.0
      %399 = vmatprep.mubr.f32.mxu0 0.0
      %400 = vmatmul.mubr.f32.gmra.mrb[0].mxu0 %v246
      %v401 = vpop.f32.mrb[0].mxu0
      %v402 = vadd.f32 0.0, %v401
      %v403 = vpop.f32.mrb[0].mxu0
      %404 = vmatprep.mubr.f32.mxu0 0.0
      %405 = vmatmul.mubr.f32.gmra.mrb[0].mxu0 %v249
      %v406 = vpop.f32.mrb[0].mxu0
      %v407 = vadd.f32 0.0, %v406
      %v408 = vpop.f32.mrb[0].mxu0
      %409 = vdwg.mxu0
      %v411 = vsel %vm244, %v227, 0
      %v414 = vsel %vm244, %v228, 0
      %v416 = vsel %vm251, %v225, 0
      %v418 = vsel %vm251, %v234, 0
      %v420 = vsel %vm251, %v226, 0
      %422 = vmatprep.subr.mxu0 %v418
      %423 = vmatpush1.msra.mxu0 %v416
      %424 = vmatprep.subr.mxu0 0.0
      %425 = vmatpush1.msra.mxu0 0.0
      %426 = vmatprep.subr.mxu0 0.0
      %427 = vmatpush1.msra.mxu0 0.0
      %428 = vmatprep.subr.mxu0 0.0
      %429 = vmatpush1.msra.mxu0 0.0
      %430 = vmatprep.subr.mxu0 0.0
      %431 = vmatpush1.msra.mxu0 0.0
      %432 = vmatprep.subr.mxu0 0.0
      %433 = vmatpush1.msra.mxu0 0.0
      %434 = vmatprep.subr.mxu0 0.0
      %435 = vmatpush1.msra.mxu0 0.0
      %436 = vmatprep.subr.mxu0 0.0
      %437 = vmatpush1.msra.mxu0 0.0
      %438 = vmatprep.subr.mxu0 0.0
      %439 = vmatpush1.msra.mxu0 0.0
      %440 = vmatprep.subr.mxu0 0.0
      %441 = vmatpush1.msra.mxu0 0.0
      %442 = vmatprep.subr.mxu0 0.0
      %443 = vmatpush1.msra.mxu0 0.0
      %444 = vmatprep.subr.mxu0 0.0
      %445 = vmatpush1.msra.mxu0 0.0
      %446 = vmatprep.subr.mxu0 0.0
      %447 = vmatpush1.msra.mxu0 0.0
      %448 = vmatprep.subr.mxu0 0.0
      %449 = vmatpush1.msra.mxu0 0.0
      %450 = vmatprep.subr.mxu0 0.0
      %451 = vmatpush1.msra.mxu0 0.0
      %452 = vmatprep.subr.mxu0 0.0
      %453 = vmatpush1.msra.mxu0 0.0
      %454 = vmatprep.subr.mxu0 0.0
      %455 = vmatpush1.msra.mxu0 0.0
      %456 = vmatprep.subr.mxu0 0.0
      %457 = vmatpush1.msra.mxu0 0.0
      %458 = vmatprep.subr.mxu0 0.0
      %459 = vmatpush1.msra.mxu0 0.0
      %460 = vmatprep.subr.mxu0 0.0
      %461 = vmatpush1.msra.mxu0 0.0
      %462 = vmatprep.subr.mxu0 0.0
      %463 = vmatpush1.msra.mxu0 0.0
      %464 = vmatprep.subr.mxu0 0.0
      %465 = vmatpush1.msra.mxu0 0.0
      %466 = vmatprep.subr.mxu0 0.0
      %467 = vmatpush1.msra.mxu0 0.0
      %468 = vmatprep.subr.mxu0 0.0
      %469 = vmatpush1.msra.mxu0 0.0
      %470 = vmatprep.subr.mxu0 0.0
      %471 = vmatpush1.msra.mxu0 0.0
      %472 = vmatprep.subr.mxu0 0.0
      %473 = vmatpush1.msra.mxu0 0.0
      %474 = vmatprep.subr.mxu0 0.0
      %475 = vmatpush1.msra.mxu0 0.0
      %476 = vmatprep.subr.mxu0 0.0
      %477 = vmatpush1.msra.mxu0 0.0
      %478 = vmatprep.subr.mxu0 0.0
      %479 = vmatpush1.msra.mxu0 0.0
      %480 = vmatprep.subr.mxu0 0.0
      %481 = vmatpush1.msra.mxu0 0.0
      %482 = vmatprep.subr.mxu0 0.0
      %483 = vmatpush1.msra.mxu0 0.0
      %484 = vmatprep.subr.mxu0 0.0
      %485 = vmatpush1.msra.mxu0 0.0
      %486 = vmatprep.mubr.f32.mxu0 0.0
      %487 = vmatmul.mubr.f32.gmra.mrb[0].mxu0 %v411
      %v488 = vpop.f32.mrb[0].mxu0
      %v489 = vadd.f32 %v325, %v488
      %v490 = vpop.f32.mrb[0].mxu0
      %v491 = vadd.f32 %v327, %v490
      %492 = vmatprep.mubr.f32.mxu0 0.0
      %493 = vmatmul.mubr.f32.gmra.mrb[0].mxu0 %v414
      %v494 = vpop.f32.mrb[0].mxu0
      %v495 = vadd.f32 %v331, %v494
      %v496 = vpop.f32.mrb[0].mxu0
      %v497 = vadd.f32 %v333, %v496
      %498 = vdwg.mxu0
      %499 = vmatprep.subr.mxu0 0.0
      %500 = vmatpush1.msra.mxu0 %v420
      %501 = vmatprep.subr.mxu0 0.0
      %502 = vmatpush1.msra.mxu0 0.0
      %503 = vmatprep.subr.mxu0 0.0
      %504 = vmatpush1.msra.mxu0 0.0
      %505 = vmatprep.subr.mxu0 0.0
      %506 = vmatpush1.msra.mxu0 0.0
      %507 = vmatprep.subr.mxu0 0.0
      %508 = vmatpush1.msra.mxu0 0.0
      %509 = vmatprep.subr.mxu0 0.0
      %510 = vmatpush1.msra.mxu0 0.0
      %511 = vmatprep.subr.mxu0 0.0
      %512 = vmatpush1.msra.mxu0 0.0
      %513 = vmatprep.subr.mxu0 0.0
      %514 = vmatpush1.msra.mxu0 0.0
      %515 = vmatprep.subr.mxu0 0.0
      %516 = vmatpush1.msra.mxu0 0.0
      %517 = vmatprep.subr.mxu0 0.0
      %518 = vmatpush1.msra.mxu0 0.0
      %519 = vmatprep.subr.mxu0 0.0
      %520 = vmatpush1.msra.mxu0 0.0
      %521 = vmatprep.subr.mxu0 0.0
      %522 = vmatpush1.msra.mxu0 0.0
      %523 = vmatprep.subr.mxu0 0.0
      %524 = vmatpush1.msra.mxu0 0.0
      %525 = vmatprep.subr.mxu0 0.0
      %526 = vmatpush1.msra.mxu0 0.0
      %527 = vmatprep.subr.mxu0 0.0
      %528 = vmatpush1.msra.mxu0 0.0
      %529 = vmatprep.subr.mxu0 0.0
      %530 = vmatpush1.msra.mxu0 0.0
      %531 = vmatprep.subr.mxu0 0.0
      %532 = vmatpush1.msra.mxu0 0.0
      %533 = vmatprep.subr.mxu0 0.0
      %534 = vmatpush1.msra.mxu0 0.0
      %535 = vmatprep.subr.mxu0 0.0
      %536 = vmatpush1.msra.mxu0 0.0
      %537 = vmatprep.subr.mxu0 0.0
      %538 = vmatpush1.msra.mxu0 0.0
      %539 = vmatprep.subr.mxu0 0.0
      %540 = vmatpush1.msra.mxu0 0.0
      %541 = vmatprep.subr.mxu0 0.0
      %542 = vmatpush1.msra.mxu0 0.0
      %543 = vmatprep.subr.mxu0 0.0
      %544 = vmatpush1.msra.mxu0 0.0
      %545 = vmatprep.subr.mxu0 0.0
      %546 = vmatpush1.msra.mxu0 0.0
      %547 = vmatprep.subr.mxu0 0.0
      %548 = vmatpush1.msra.mxu0 0.0
      %549 = vmatprep.subr.mxu0 0.0
      %550 = vmatpush1.msra.mxu0 0.0
      %551 = vmatprep.subr.mxu0 0.0
      %552 = vmatpush1.msra.mxu0 0.0
      %553 = vmatprep.subr.mxu0 0.0
      %554 = vmatpush1.msra.mxu0 0.0
      %555 = vmatprep.subr.mxu0 0.0
      %556 = vmatpush1.msra.mxu0 0.0
      %557 = vmatprep.subr.mxu0 0.0
      %558 = vmatpush1.msra.mxu0 0.0
      %559 = vmatprep.subr.mxu0 0.0
      %560 = vmatpush1.msra.mxu0 0.0
      %561 = vmatprep.subr.mxu0 0.0
      %562 = vmatpush1.msra.mxu0 0.0
      %563 = vmatprep.mubr.f32.mxu0 0.0
      %564 = vmatmul.mubr.f32.gmra.mrb[0].mxu0 %v411
      %v565 = vpop.f32.mrb[0].mxu0
      %v566 = vadd.f32 %v402, %v565
      %v567 = vpop.f32.mrb[0].mxu0
      %568 = vmatprep.mubr.f32.mxu0 0.0
      %569 = vmatmul.mubr.f32.gmra.mrb[0].mxu0 %v414
      %v570 = vpop.f32.mrb[0].mxu0
      %v571 = vadd.f32 %v407, %v570
      %v572 = vpop.f32.mrb[0].mxu0
      %573 = vdwg.mxu0
      %s574 = scalar_lea.vmem %s1, 32
      %v575 = vld [vmem:[%s574] sm:$0xff]
      %v576 = vld [vmem:[%s574 + $0x8] sm:$0xff]
      %577 = vrot.lane.b32.xlu0 %v225, 126
      %v578 = vpop.permute.xlu0 %577
      %579 = vrot.lane.b32.xlu0 %v234, 126
      %v580 = vpop.permute.xlu0 %579
      %581 = vrot.lane.b32.xlu0 %v226, 126
      %v582 = vpop.permute.xlu0 %581
      %vm583 = vcmask 1031168
      %v584 = vsel %vm583, %v578, %v580
      %v585 = vsel %vm583, %v580, %v582
      %v587 = vsel %vm244, %v575, 0
      %v590 = vsel %vm244, %v576, 0
      %v592 = vsel %vm251, %v584, 0
      %v594 = vsel %vm251, %v585, 0
      %v596 = vsel %vm251, %v582, 0
      %598 = vmatprep.subr.mxu0 %v594
      %599 = vmatpush1.msra.mxu0 %v592
      %600 = vmatprep.subr.mxu0 0.0
      %601 = vmatpush1.msra.mxu0 0.0
      %602 = vmatprep.subr.mxu0 0.0
      %603 = vmatpush1.msra.mxu0 0.0
      %604 = vmatprep.subr.mxu0 0.0
      %605 = vmatpush1.msra.mxu0 0.0
      %606 = vmatprep.subr.mxu0 0.0
      %607 = vmatpush1.msra.mxu0 0.0
      %608 = vmatprep.subr.mxu0 0.0
      %609 = vmatpush1.msra.mxu0 0.0
      %610 = vmatprep.subr.mxu0 0.0
      %611 = vmatpush1.msra.mxu0 0.0
      %612 = vmatprep.subr.mxu0 0.0
      %613 = vmatpush1.msra.mxu0 0.0
      %614 = vmatprep.subr.mxu0 0.0
      %615 = vmatpush1.msra.mxu0 0.0
      %616 = vmatprep.subr.mxu0 0.0
      %617 = vmatpush1.msra.mxu0 0.0
      %618 = vmatprep.subr.mxu0 0.0
      %619 = vmatpush1.msra.mxu0 0.0
      %620 = vmatprep.subr.mxu0 0.0
      %621 = vmatpush1.msra.mxu0 0.0
      %622 = vmatprep.subr.mxu0 0.0
      %623 = vmatpush1.msra.mxu0 0.0
      %624 = vmatprep.subr.mxu0 0.0
      %625 = vmatpush1.msra.mxu0 0.0
      %626 = vmatprep.subr.mxu0 0.0
      %627 = vmatpush1.msra.mxu0 0.0
      %628 = vmatprep.subr.mxu0 0.0
      %629 = vmatpush1.msra.mxu0 0.0
      %630 = vmatprep.subr.mxu0 0.0
      %631 = vmatpush1.msra.mxu0 0.0
      %632 = vmatprep.subr.mxu0 0.0
      %633 = vmatpush1.msra.mxu0 0.0
      %634 = vmatprep.subr.mxu0 0.0
      %635 = vmatpush1.msra.mxu0 0.0
      %636 = vmatprep.subr.mxu0 0.0
      %637 = vmatpush1.msra.mxu0 0.0
      %638 = vmatprep.subr.mxu0 0.0
      %639 = vmatpush1.msra.mxu0 0.0
      %640 = vmatprep.subr.mxu0 0.0
      %641 = vmatpush1.msra.mxu0 0.0
      %642 = vmatprep.subr.mxu0 0.0
      %643 = vmatpush1.msra.mxu0 0.0
      %644 = vmatprep.subr.mxu0 0.0
      %645 = vmatpush1.msra.mxu0 0.0
      %646 = vmatprep.subr.mxu0 0.0
      %647 = vmatpush1.msra.mxu0 0.0
      %648 = vmatprep.subr.mxu0 0.0
      %649 = vmatpush1.msra.mxu0 0.0
      %650 = vmatprep.subr.mxu0 0.0
      %651 = vmatpush1.msra.mxu0 0.0
      %652 = vmatprep.subr.mxu0 0.0
      %653 = vmatpush1.msra.mxu0 0.0
      %654 = vmatprep.subr.mxu0 0.0
      %655 = vmatpush1.msra.mxu0 0.0
      %656 = vmatprep.subr.mxu0 0.0
      %657 = vmatpush1.msra.mxu0 0.0
      %658 = vmatprep.subr.mxu0 0.0
      %659 = vmatpush1.msra.mxu0 0.0
      %660 = vmatprep.subr.mxu0 0.0
      %661 = vmatpush1.msra.mxu0 0.0
      %662 = vmatprep.mubr.f32.mxu0 0.0
      %663 = vmatmul.mubr.f32.gmra.mrb[0].mxu0 %v587
      %v664 = vpop.f32.mrb[0].mxu0
      %v665 = vadd.f32 0.0, %v664
      %v666 = vpop.f32.mrb[0].mxu0
      %v667 = vadd.f32 0.0, %v666
      %668 = vmatprep.mubr.f32.mxu0 0.0
      %669 = vmatmul.mubr.f32.gmra.mrb[0].mxu0 %v590
      %v670 = vpop.f32.mrb[0].mxu0
      %v671 = vadd.f32 0.0, %v670
      %v672 = vpop.f32.mrb[0].mxu0
      %v673 = vadd.f32 0.0, %v672
      %674 = vdwg.mxu0
      %675 = vmatprep.subr.mxu0 0.0
      %676 = vmatpush1.msra.mxu0 %v596
      %677 = vmatprep.subr.mxu0 0.0
      %678 = vmatpush1.msra.mxu0 0.0
      %679 = vmatprep.subr.mxu0 0.0
      %680 = vmatpush1.msra.mxu0 0.0
      %681 = vmatprep.subr.mxu0 0.0
      %682 = vmatpush1.msra.mxu0 0.0
      %683 = vmatprep.subr.mxu0 0.0
      %684 = vmatpush1.msra.mxu0 0.0
      %685 = vmatprep.subr.mxu0 0.0
      %686 = vmatpush1.msra.mxu0 0.0
      %687 = vmatprep.subr.mxu0 0.0
      %688 = vmatpush1.msra.mxu0 0.0
      %689 = vmatprep.subr.mxu0 0.0
      %690 = vmatpush1.msra.mxu0 0.0
      %691 = vmatprep.subr.mxu0 0.0
      %692 = vmatpush1.msra.mxu0 0.0
      %693 = vmatprep.subr.mxu0 0.0
      %694 = vmatpush1.msra.mxu0 0.0
      %695 = vmatprep.subr.mxu0 0.0
      %696 = vmatpush1.msra.mxu0 0.0
      %697 = vmatprep.subr.mxu0 0.0
      %698 = vmatpush1.msra.mxu0 0.0
      %699 = vmatprep.subr.mxu0 0.0
      %700 = vmatpush1.msra.mxu0 0.0
      %701 = vmatprep.subr.mxu0 0.0
      %702 = vmatpush1.msra.mxu0 0.0
      %703 = vmatprep.subr.mxu0 0.0
      %704 = vmatpush1.msra.mxu0 0.0
      %705 = vmatprep.subr.mxu0 0.0
      %706 = vmatpush1.msra.mxu0 0.0
      %707 = vmatprep.subr.mxu0 0.0
      %708 = vmatpush1.msra.mxu0 0.0
      %709 = vmatprep.subr.mxu0 0.0
      %710 = vmatpush1.msra.mxu0 0.0
      %711 = vmatprep.subr.mxu0 0.0
      %712 = vmatpush1.msra.mxu0 0.0
      %713 = vmatprep.subr.mxu0 0.0
      %714 = vmatpush1.msra.mxu0 0.0
      %715 = vmatprep.subr.mxu0 0.0
      %716 = vmatpush1.msra.mxu0 0.0
      %717 = vmatprep.subr.mxu0 0.0
      %718 = vmatpush1.msra.mxu0 0.0
      %719 = vmatprep.subr.mxu0 0.0
      %720 = vmatpush1.msra.mxu0 0.0
      %721 = vmatprep.subr.mxu0 0.0
      %722 = vmatpush1.msra.mxu0 0.0
      %723 = vmatprep.subr.mxu0 0.0
      %724 = vmatpush1.msra.mxu0 0.0
      %725 = vmatprep.subr.mxu0 0.0
      %726 = vmatpush1.msra.mxu0 0.0
      %727 = vmatprep.subr.mxu0 0.0
      %728 = vmatpush1.msra.mxu0 0.0
      %729 = vmatprep.subr.mxu0 0.0
      %730 = vmatpush1.msra.mxu0 0.0
      %731 = vmatprep.subr.mxu0 0.0
      %732 = vmatpush1.msra.mxu0 0.0
      %733 = vmatprep.subr.mxu0 0.0
      %734 = vmatpush1.msra.mxu0 0.0
      %735 = vmatprep.subr.mxu0 0.0
      %736 = vmatpush1.msra.mxu0 0.0
      %737 = vmatprep.subr.mxu0 0.0
      %738 = vmatpush1.msra.mxu0 0.0
      %739 = vmatprep.mubr.f32.mxu0 0.0
      %740 = vmatmul.mubr.f32.gmra.mrb[0].mxu0 %v587
      %v741 = vpop.f32.mrb[0].mxu0
      %v742 = vadd.f32 0.0, %v741
      %v743 = vpop.f32.mrb[0].mxu0
      %744 = vmatprep.mubr.f32.mxu0 0.0
      %745 = vmatmul.mubr.f32.gmra.mrb[0].mxu0 %v590
      %v746 = vpop.f32.mrb[0].mxu0
      %v747 = vadd.f32 0.0, %v746
      %v748 = vpop.f32.mrb[0].mxu0
      %749 = vdwg.mxu0
      %v750 = vadd.f32 %v489, %v665
      %v751 = vadd.f32 %v491, %v667
      %v752 = vadd.f32 %v566, %v742
      %v753 = vadd.f32 %v495, %v671
      %v754 = vadd.f32 %v497, %v673
      %v755 = vadd.f32 %v571, %v747
      %s756 = scalar_lea.vmem %s1, 48
      %v757 = vld [vmem:[%s756] sm:$0xff]
      %v758 = vld [vmem:[%s756 + $0x8] sm:$0xff]
      %759 = vrot.lane.b32.xlu0 %v225, 110
      %v760 = vpop.permute.xlu0 %759
      %761 = vrot.lane.b32.xlu0 %v234, 110
      %v762 = vpop.permute.xlu0 %761
      %763 = vrot.lane.b32.xlu0 %v226, 110
      %v764 = vpop.permute.xlu0 %763
      %vm765 = vcmask 900096
      %v766 = vsel %vm765, %v760, %v762
      %v767 = vsel %vm765, %v762, %v764
      %v769 = vsel %vm244, %v757, 0
      %v772 = vsel %vm244, %v758, 0
      %v774 = vsel %vm251, %v766, 0
      %v776 = vsel %vm251, %v767, 0
      %v778 = vsel %vm251, %v764, 0
      %780 = vmatprep.subr.mxu0 %v776
      %781 = vmatpush1.msra.mxu0 %v774
      %782 = vmatprep.subr.mxu0 0.0
      %783 = vmatpush1.msra.mxu0 0.0
      %784 = vmatprep.subr.mxu0 0.0
      %785 = vmatpush1.msra.mxu0 0.0
      %786 = vmatprep.subr.mxu0 0.0
      %787 = vmatpush1.msra.mxu0 0.0
      %788 = vmatprep.subr.mxu0 0.0
      %789 = vmatpush1.msra.mxu0 0.0
      %790 = vmatprep.subr.mxu0 0.0
      %791 = vmatpush1.msra.mxu0 0.0
      %792 = vmatprep.subr.mxu0 0.0
      %793 = vmatpush1.msra.mxu0 0.0
      %794 = vmatprep.subr.mxu0 0.0
      %795 = vmatpush1.msra.mxu0 0.0
      %796 = vmatprep.subr.mxu0 0.0
      %797 = vmatpush1.msra.mxu0 0.0
      %798 = vmatprep.subr.mxu0 0.0
      %799 = vmatpush1.msra.mxu0 0.0
      %800 = vmatprep.subr.mxu0 0.0
      %801 = vmatpush1.msra.mxu0 0.0
      %802 = vmatprep.subr.mxu0 0.0
      %803 = vmatpush1.msra.mxu0 0.0
      %804 = vmatprep.subr.mxu0 0.0
      %805 = vmatpush1.msra.mxu0 0.0
      %806 = vmatprep.subr.mxu0 0.0
      %807 = vmatpush1.msra.mxu0 0.0
      %808 = vmatprep.subr.mxu0 0.0
      %809 = vmatpush1.msra.mxu0 0.0
      %810 = vmatprep.subr.mxu0 0.0
      %811 = vmatpush1.msra.mxu0 0.0
      %812 = vmatprep.subr.mxu0 0.0
      %813 = vmatpush1.msra.mxu0 0.0
      %814 = vmatprep.subr.mxu0 0.0
      %815 = vmatpush1.msra.mxu0 0.0
      %816 = vmatprep.subr.mxu0 0.0
      %817 = vmatpush1.msra.mxu0 0.0
      %818 = vmatprep.subr.mxu0 0.0
      %819 = vmatpush1.msra.mxu0 0.0
      %820 = vmatprep.subr.mxu0 0.0
      %821 = vmatpush1.msra.mxu0 0.0
      %822 = vmatprep.subr.mxu0 0.0
      %823 = vmatpush1.msra.mxu0 0.0
      %824 = vmatprep.subr.mxu0 0.0
      %825 = vmatpush1.msra.mxu0 0.0
      %826 = vmatprep.subr.mxu0 0.0
      %827 = vmatpush1.msra.mxu0 0.0
      %828 = vmatprep.subr.mxu0 0.0
      %829 = vmatpush1.msra.mxu0 0.0
      %830 = vmatprep.subr.mxu0 0.0
      %831 = vmatpush1.msra.mxu0 0.0
      %832 = vmatprep.subr.mxu0 0.0
      %833 = vmatpush1.msra.mxu0 0.0
      %834 = vmatprep.subr.mxu0 0.0
      %835 = vmatpush1.msra.mxu0 0.0
      %836 = vmatprep.subr.mxu0 0.0
      %837 = vmatpush1.msra.mxu0 0.0
      %838 = vmatprep.subr.mxu0 0.0
      %839 = vmatpush1.msra.mxu0 0.0
      %840 = vmatprep.subr.mxu0 0.0
      %841 = vmatpush1.msra.mxu0 0.0
      %842 = vmatprep.subr.mxu0 0.0
      %843 = vmatpush1.msra.mxu0 0.0
      %844 = vmatprep.mubr.f32.mxu0 0.0
      %845 = vmatmul.mubr.f32.gmra.mrb[0].mxu0 %v769
      %v846 = vpop.f32.mrb[0].mxu0
      %v847 = vadd.f32 0.0, %v846
      %v848 = vpop.f32.mrb[0].mxu0
      %v849 = vadd.f32 0.0, %v848
      %850 = vmatprep.mubr.f32.mxu0 0.0
      %851 = vmatmul.mubr.f32.gmra.mrb[0].mxu0 %v772
      %v852 = vpop.f32.mrb[0].mxu0
      %v853 = vadd.f32 0.0, %v852
      %v854 = vpop.f32.mrb[0].mxu0
      %v855 = vadd.f32 0.0, %v854
      %856 = vdwg.mxu0
      %857 = vmatprep.subr.mxu0 0.0
      %858 = vmatpush1.msra.mxu0 %v778
      %859 = vmatprep.subr.mxu0 0.0
      %860 = vmatpush1.msra.mxu0 0.0
      %861 = vmatprep.subr.mxu0 0.0
      %862 = vmatpush1.msra.mxu0 0.0
      %863 = vmatprep.subr.mxu0 0.0
      %864 = vmatpush1.msra.mxu0 0.0
      %865 = vmatprep.subr.mxu0 0.0
      %866 = vmatpush1.msra.mxu0 0.0
      %867 = vmatprep.subr.mxu0 0.0
      %868 = vmatpush1.msra.mxu0 0.0
      %869 = vmatprep.subr.mxu0 0.0
      %870 = vmatpush1.msra.mxu0 0.0
      %871 = vmatprep.subr.mxu0 0.0
      %872 = vmatpush1.msra.mxu0 0.0
      %873 = vmatprep.subr.mxu0 0.0
      %874 = vmatpush1.msra.mxu0 0.0
      %875 = vmatprep.subr.mxu0 0.0
      %876 = vmatpush1.msra.mxu0 0.0
      %877 = vmatprep.subr.mxu0 0.0
      %878 = vmatpush1.msra.mxu0 0.0
      %879 = vmatprep.subr.mxu0 0.0
      %880 = vmatpush1.msra.mxu0 0.0
      %881 = vmatprep.subr.mxu0 0.0
      %882 = vmatpush1.msra.mxu0 0.0
      %883 = vmatprep.subr.mxu0 0.0
      %884 = vmatpush1.msra.mxu0 0.0
      %885 = vmatprep.subr.mxu0 0.0
      %886 = vmatpush1.msra.mxu0 0.0
      %887 = vmatprep.subr.mxu0 0.0
      %888 = vmatpush1.msra.mxu0 0.0
      %889 = vmatprep.subr.mxu0 0.0
      %890 = vmatpush1.msra.mxu0 0.0
      %891 = vmatprep.subr.mxu0 0.0
      %892 = vmatpush1.msra.mxu0 0.0
      %893 = vmatprep.subr.mxu0 0.0
      %894 = vmatpush1.msra.mxu0 0.0
      %895 = vmatprep.subr.mxu0 0.0
      %896 = vmatpush1.msra.mxu0 0.0
      %897 = vmatprep.subr.mxu0 0.0
      %898 = vmatpush1.msra.mxu0 0.0
      %899 = vmatprep.subr.mxu0 0.0
      %900 = vmatpush1.msra.mxu0 0.0
      %901 = vmatprep.subr.mxu0 0.0
      %902 = vmatpush1.msra.mxu0 0.0
      %903 = vmatprep.subr.mxu0 0.0
      %904 = vmatpush1.msra.mxu0 0.0
      %905 = vmatprep.subr.mxu0 0.0
      %906 = vmatpush1.msra.mxu0 0.0
      %907 = vmatprep.subr.mxu0 0.0
      %908 = vmatpush1.msra.mxu0 0.0
      %909 = vmatprep.subr.mxu0 0.0
      %910 = vmatpush1.msra.mxu0 0.0
      %911 = vmatprep.subr.mxu0 0.0
      %912 = vmatpush1.msra.mxu0 0.0
      %913 = vmatprep.subr.mxu0 0.0
      %914 = vmatpush1.msra.mxu0 0.0
      %915 = vmatprep.subr.mxu0 0.0
      %916 = vmatpush1.msra.mxu0 0.0
      %917 = vmatprep.subr.mxu0 0.0
      %918 = vmatpush1.msra.mxu0 0.0
      %919 = vmatprep.subr.mxu0 0.0
      %920 = vmatpush1.msra.mxu0 0.0
      %921 = vmatprep.mubr.f32.mxu0 0.0
      %922 = vmatmul.mubr.f32.gmra.mrb[0].mxu0 %v769
      %v923 = vpop.f32.mrb[0].mxu0
      %v924 = vadd.f32 0.0, %v923
      %v925 = vpop.f32.mrb[0].mxu0
      %926 = vmatprep.mubr.f32.mxu0 0.0
      %927 = vmatmul.mubr.f32.gmra.mrb[0].mxu0 %v772
      %v928 = vpop.f32.mrb[0].mxu0
      %v929 = vadd.f32 0.0, %v928
      %v930 = vpop.f32.mrb[0].mxu0
      %931 = vdwg.mxu0
      %v932 = vadd.f32 %v750, %v847
      %v933 = vadd.f32 %v751, %v849
      %v934 = vadd.f32 %v752, %v924
      %v935 = vadd.f32 %v753, %v853
      %v936 = vadd.f32 %v754, %v855
      %v937 = vadd.f32 %v755, %v929
      %s938 = scalar_lea.vmem %s1, 64
      %v939 = vld [vmem:[%s938] sm:$0xff]
      %v940 = vld [vmem:[%s938 + $0x8] sm:$0xff]
      %941 = vrot.lane.b32.xlu0 %v225, 109
      %v942 = vpop.permute.xlu0 %941
      %943 = vrot.lane.b32.xlu0 %v234, 109
      %v944 = vpop.permute.xlu0 %943
      %945 = vrot.lane.b32.xlu0 %v226, 109
      %v946 = vpop.permute.xlu0 %945
      %vm947 = vcmask 891904
      %v948 = vsel %vm947, %v942, %v944
      %v949 = vsel %vm947, %v944, %v946
      %v951 = vsel %vm244, %v939, 0
      %v954 = vsel %vm244, %v940, 0
      %v956 = vsel %vm251, %v948, 0
      %v958 = vsel %vm251, %v949, 0
      %v960 = vsel %vm251, %v946, 0
      %962 = vmatprep.subr.mxu0 %v958
      %963 = vmatpush1.msra.mxu0 %v956
      %964 = vmatprep.subr.mxu0 0.0
      %965 = vmatpush1.msra.mxu0 0.0
      %966 = vmatprep.subr.mxu0 0.0
      %967 = vmatpush1.msra.mxu0 0.0
      %968 = vmatprep.subr.mxu0 0.0
      %969 = vmatpush1.msra.mxu0 0.0
      %970 = vmatprep.subr.mxu0 0.0
      %971 = vmatpush1.msra.mxu0 0.0
      %972 = vmatprep.subr.mxu0 0.0
      %973 = vmatpush1.msra.mxu0 0.0
      %974 = vmatprep.subr.mxu0 0.0
      %975 = vmatpush1.msra.mxu0 0.0
      %976 = vmatprep.subr.mxu0 0.0
      %977 = vmatpush1.msra.mxu0 0.0
      %978 = vmatprep.subr.mxu0 0.0
      %979 = vmatpush1.msra.mxu0 0.0
      %980 = vmatprep.subr.mxu0 0.0
      %981 = vmatpush1.msra.mxu0 0.0
      %982 = vmatprep.subr.mxu0 0.0
      %983 = vmatpush1.msra.mxu0 0.0
      %984 = vmatprep.subr.mxu0 0.0
      %985 = vmatpush1.msra.mxu0 0.0
      %986 = vmatprep.subr.mxu0 0.0
      %987 = vmatpush1.msra.mxu0 0.0
      %988 = vmatprep.subr.mxu0 0.0
      %989 = vmatpush1.msra.mxu0 0.0
      %990 = vmatprep.subr.mxu0 0.0
      %991 = vmatpush1.msra.mxu0 0.0
      %992 = vmatprep.subr.mxu0 0.0
      %993 = vmatpush1.msra.mxu0 0.0
      %994 = vmatprep.subr.mxu0 0.0
      %995 = vmatpush1.msra.mxu0 0.0
      %996 = vmatprep.subr.mxu0 0.0
      %997 = vmatpush1.msra.mxu0 0.0
      %998 = vmatprep.subr.mxu0 0.0
      %999 = vmatpush1.msra.mxu0 0.0
      %1000 = vmatprep.subr.mxu0 0.0
      %1001 = vmatpush1.msra.mxu0 0.0
      %1002 = vmatprep.subr.mxu0 0.0
      %1003 = vmatpush1.msra.mxu0 0.0
      %1004 = vmatprep.subr.mxu0 0.0
      %1005 = vmatpush1.msra.mxu0 0.0
      %1006 = vmatprep.subr.mxu0 0.0
      %1007 = vmatpush1.msra.mxu0 0.0
      %1008 = vmatprep.subr.mxu0 0.0
      %1009 = vmatpush1.msra.mxu0 0.0
      %1010 = vmatprep.subr.mxu0 0.0
      %1011 = vmatpush1.msra.mxu0 0.0
      %1012 = vmatprep.subr.mxu0 0.0
      %1013 = vmatpush1.msra.mxu0 0.0
      %1014 = vmatprep.subr.mxu0 0.0
      %1015 = vmatpush1.msra.mxu0 0.0
      %1016 = vmatprep.subr.mxu0 0.0
      %1017 = vmatpush1.msra.mxu0 0.0
      %1018 = vmatprep.subr.mxu0 0.0
      %1019 = vmatpush1.msra.mxu0 0.0
      %1020 = vmatprep.subr.mxu0 0.0
      %1021 = vmatpush1.msra.mxu0 0.0
      %1022 = vmatprep.subr.mxu0 0.0
      %1023 = vmatpush1.msra.mxu0 0.0
      %1024 = vmatprep.subr.mxu0 0.0
      %1025 = vmatpush1.msra.mxu0 0.0
      %1026 = vmatprep.mubr.f32.mxu0 0.0
      %1027 = vmatmul.mubr.f32.gmra.mrb[0].mxu0 %v951
      %v1028 = vpop.f32.mrb[0].mxu0
      %v1029 = vadd.f32 0.0, %v1028
      %v1030 = vpop.f32.mrb[0].mxu0
      %v1031 = vadd.f32 0.0, %v1030
      %1032 = vmatprep.mubr.f32.mxu0 0.0
      %1033 = vmatmul.mubr.f32.gmra.mrb[0].mxu0 %v954
      %v1034 = vpop.f32.mrb[0].mxu0
      %v1035 = vadd.f32 0.0, %v1034
      %v1036 = vpop.f32.mrb[0].mxu0
      %v1037 = vadd.f32 0.0, %v1036
      %1038 = vdwg.mxu0
      %1039 = vmatprep.subr.mxu0 0.0
      %1040 = vmatpush1.msra.mxu0 %v960
      %1041 = vmatprep.subr.mxu0 0.0
      %1042 = vmatpush1.msra.mxu0 0.0
      %1043 = vmatprep.subr.mxu0 0.0
      %1044 = vmatpush1.msra.mxu0 0.0
      %1045 = vmatprep.subr.mxu0 0.0
      %1046 = vmatpush1.msra.mxu0 0.0
      %1047 = vmatprep.subr.mxu0 0.0
      %1048 = vmatpush1.msra.mxu0 0.0
      %1049 = vmatprep.subr.mxu0 0.0
      %1050 = vmatpush1.msra.mxu0 0.0
      %1051 = vmatprep.subr.mxu0 0.0
      %1052 = vmatpush1.msra.mxu0 0.0
      %1053 = vmatprep.subr.mxu0 0.0
      %1054 = vmatpush1.msra.mxu0 0.0
      %1055 = vmatprep.subr.mxu0 0.0
      %1056 = vmatpush1.msra.mxu0 0.0
      %1057 = vmatprep.subr.mxu0 0.0
      %1058 = vmatpush1.msra.mxu0 0.0
      %1059 = vmatprep.subr.mxu0 0.0
      %1060 = vmatpush1.msra.mxu0 0.0
      %1061 = vmatprep.subr.mxu0 0.0
      %1062 = vmatpush1.msra.mxu0 0.0
      %1063 = vmatprep.subr.mxu0 0.0
      %1064 = vmatpush1.msra.mxu0 0.0
      %1065 = vmatprep.subr.mxu0 0.0
      %1066 = vmatpush1.msra.mxu0 0.0
      %1067 = vmatprep.subr.mxu0 0.0
      %1068 = vmatpush1.msra.mxu0 0.0
      %1069 = vmatprep.subr.mxu0 0.0
      %1070 = vmatpush1.msra.mxu0 0.0
      %1071 = vmatprep.subr.mxu0 0.0
      %1072 = vmatpush1.msra.mxu0 0.0
      %1073 = vmatprep.subr.mxu0 0.0
      %1074 = vmatpush1.msra.mxu0 0.0
      %1075 = vmatprep.subr.mxu0 0.0
      %1076 = vmatpush1.msra.mxu0 0.0
      %1077 = vmatprep.subr.mxu0 0.0
      %1078 = vmatpush1.msra.mxu0 0.0
      %1079 = vmatprep.subr.mxu0 0.0
      %1080 = vmatpush1.msra.mxu0 0.0
      %1081 = vmatprep.subr.mxu0 0.0
      %1082 = vmatpush1.msra.mxu0 0.0
      %1083 = vmatprep.subr.mxu0 0.0
      %1084 = vmatpush1.msra.mxu0 0.0
      %1085 = vmatprep.subr.mxu0 0.0
      %1086 = vmatpush1.msra.mxu0 0.0
      %1087 = vmatprep.subr.mxu0 0.0
      %1088 = vmatpush1.msra.mxu0 0.0
      %1089 = vmatprep.subr.mxu0 0.0
      %1090 = vmatpush1.msra.mxu0 0.0
      %1091 = vmatprep.subr.mxu0 0.0
      %1092 = vmatpush1.msra.mxu0 0.0
      %1093 = vmatprep.subr.mxu0 0.0
      %1094 = vmatpush1.msra.mxu0 0.0
      %1095 = vmatprep.subr.mxu0 0.0
      %1096 = vmatpush1.msra.mxu0 0.0
      %1097 = vmatprep.subr.mxu0 0.0
      %1098 = vmatpush1.msra.mxu0 0.0
      %1099 = vmatprep.subr.mxu0 0.0
      %1100 = vmatpush1.msra.mxu0 0.0
      %1101 = vmatprep.subr.mxu0 0.0
      %1102 = vmatpush1.msra.mxu0 0.0
      %1103 = vmatprep.mubr.f32.mxu0 0.0
      %1104 = vmatmul.mubr.f32.gmra.mrb[0].mxu0 %v951
      %v1105 = vpop.f32.mrb[0].mxu0
      %v1106 = vadd.f32 0.0, %v1105
      %v1107 = vpop.f32.mrb[0].mxu0
      %1108 = vmatprep.mubr.f32.mxu0 0.0
      %1109 = vmatmul.mubr.f32.gmra.mrb[0].mxu0 %v954
      %v1110 = vpop.f32.mrb[0].mxu0
      %v1111 = vadd.f32 0.0, %v1110
      %v1112 = vpop.f32.mrb[0].mxu0
      %1113 = vdwg.mxu0
      %v1114 = vadd.f32 %v932, %v1029
      %v1115 = vadd.f32 %v933, %v1031
      %v1116 = vadd.f32 %v934, %v1106
      %v1117 = vadd.f32 %v935, %v1035
      %v1118 = vadd.f32 %v936, %v1037
      %v1119 = vadd.f32 %v937, %v1111
      %s1120 = scalar_lea.vmem %s1, 80
      %v1121 = vld [vmem:[%s1120] sm:$0xff]
      %v1122 = vld [vmem:[%s1120 + $0x8] sm:$0xff]
      %1123 = vrot.lane.b32.xlu0 %v225, 108
      %v1124 = vpop.permute.xlu0 %1123
      %1125 = vrot.lane.b32.xlu0 %v234, 108
      %v1126 = vpop.permute.xlu0 %1125
      %1127 = vrot.lane.b32.xlu0 %v226, 108
      %v1128 = vpop.permute.xlu0 %1127
      %vm1129 = vcmask 883712
      %v1130 = vsel %vm1129, %v1124, %v1126
      %v1131 = vsel %vm1129, %v1126, %v1128
      %v1133 = vsel %vm244, %v1121, 0
      %v1136 = vsel %vm244, %v1122, 0
      %v1138 = vsel %vm251, %v1130, 0
      %v1140 = vsel %vm251, %v1131, 0
      %v1142 = vsel %vm251, %v1128, 0
      %1144 = vmatprep.subr.mxu0 %v1140
      %1145 = vmatpush1.msra.mxu0 %v1138
      %1146 = vmatprep.subr.mxu0 0.0
      %1147 = vmatpush1.msra.mxu0 0.0
      %1148 = vmatprep.subr.mxu0 0.0
      %1149 = vmatpush1.msra.mxu0 0.0
      %1150 = vmatprep.subr.mxu0 0.0
      %1151 = vmatpush1.msra.mxu0 0.0
      %1152 = vmatprep.subr.mxu0 0.0
      %1153 = vmatpush1.msra.mxu0 0.0
      %1154 = vmatprep.subr.mxu0 0.0
      %1155 = vmatpush1.msra.mxu0 0.0
      %1156 = vmatprep.subr.mxu0 0.0
      %1157 = vmatpush1.msra.mxu0 0.0
      %1158 = vmatprep.subr.mxu0 0.0
      %1159 = vmatpush1.msra.mxu0 0.0
      %1160 = vmatprep.subr.mxu0 0.0
      %1161 = vmatpush1.msra.mxu0 0.0
      %1162 = vmatprep.subr.mxu0 0.0
      %1163 = vmatpush1.msra.mxu0 0.0
      %1164 = vmatprep.subr.mxu0 0.0
      %1165 = vmatpush1.msra.mxu0 0.0
      %1166 = vmatprep.subr.mxu0 0.0
      %1167 = vmatpush1.msra.mxu0 0.0
      %1168 = vmatprep.subr.mxu0 0.0
      %1169 = vmatpush1.msra.mxu0 0.0
      %1170 = vmatprep.subr.mxu0 0.0
      %1171 = vmatpush1.msra.mxu0 0.0
      %1172 = vmatprep.subr.mxu0 0.0
      %1173 = vmatpush1.msra.mxu0 0.0
      %1174 = vmatprep.subr.mxu0 0.0
      %1175 = vmatpush1.msra.mxu0 0.0
      %1176 = vmatprep.subr.mxu0 0.0
      %1177 = vmatpush1.msra.mxu0 0.0
      %1178 = vmatprep.subr.mxu0 0.0
      %1179 = vmatpush1.msra.mxu0 0.0
      %1180 = vmatprep.subr.mxu0 0.0
      %1181 = vmatpush1.msra.mxu0 0.0
      %1182 = vmatprep.subr.mxu0 0.0
      %1183 = vmatpush1.msra.mxu0 0.0
      %1184 = vmatprep.subr.mxu0 0.0
      %1185 = vmatpush1.msra.mxu0 0.0
      %1186 = vmatprep.subr.mxu0 0.0
      %1187 = vmatpush1.msra.mxu0 0.0
      %1188 = vmatprep.subr.mxu0 0.0
      %1189 = vmatpush1.msra.mxu0 0.0
      %1190 = vmatprep.subr.mxu0 0.0
      %1191 = vmatpush1.msra.mxu0 0.0
      %1192 = vmatprep.subr.mxu0 0.0
      %1193 = vmatpush1.msra.mxu0 0.0
      %1194 = vmatprep.subr.mxu0 0.0
      %1195 = vmatpush1.msra.mxu0 0.0
      %1196 = vmatprep.subr.mxu0 0.0
      %1197 = vmatpush1.msra.mxu0 0.0
      %1198 = vmatprep.subr.mxu0 0.0
      %1199 = vmatpush1.msra.mxu0 0.0
      %1200 = vmatprep.subr.mxu0 0.0
      %1201 = vmatpush1.msra.mxu0 0.0
      %1202 = vmatprep.subr.mxu0 0.0
      %1203 = vmatpush1.msra.mxu0 0.0
      %1204 = vmatprep.subr.mxu0 0.0
      %1205 = vmatpush1.msra.mxu0 0.0
      %1206 = vmatprep.subr.mxu0 0.0
      %1207 = vmatpush1.msra.mxu0 0.0
      %1208 = vmatprep.mubr.f32.mxu0 0.0
      %1209 = vmatmul.mubr.f32.gmra.mrb[0].mxu0 %v1133
      %v1210 = vpop.f32.mrb[0].mxu0
      %v1211 = vadd.f32 0.0, %v1210
      %v1212 = vpop.f32.mrb[0].mxu0
      %v1213 = vadd.f32 0.0, %v1212
      %1214 = vmatprep.mubr.f32.mxu0 0.0
      %1215 = vmatmul.mubr.f32.gmra.mrb[0].mxu0 %v1136
      %v1216 = vpop.f32.mrb[0].mxu0
      %v1217 = vadd.f32 0.0, %v1216
      %v1218 = vpop.f32.mrb[0].mxu0
      %v1219 = vadd.f32 0.0, %v1218
      %1220 = vdwg.mxu0
      %1221 = vmatprep.subr.mxu0 0.0
      %1222 = vmatpush1.msra.mxu0 %v1142
      %1223 = vmatprep.subr.mxu0 0.0
      %1224 = vmatpush1.msra.mxu0 0.0
      %1225 = vmatprep.subr.mxu0 0.0
      %1226 = vmatpush1.msra.mxu0 0.0
      %1227 = vmatprep.subr.mxu0 0.0
      %1228 = vmatpush1.msra.mxu0 0.0
      %1229 = vmatprep.subr.mxu0 0.0
      %1230 = vmatpush1.msra.mxu0 0.0
      %1231 = vmatprep.subr.mxu0 0.0
      %1232 = vmatpush1.msra.mxu0 0.0
      %1233 = vmatprep.subr.mxu0 0.0
      %1234 = vmatpush1.msra.mxu0 0.0
      %1235 = vmatprep.subr.mxu0 0.0
      %1236 = vmatpush1.msra.mxu0 0.0
      %1237 = vmatprep.subr.mxu0 0.0
      %1238 = vmatpush1.msra.mxu0 0.0
      %1239 = vmatprep.subr.mxu0 0.0
      %1240 = vmatpush1.msra.mxu0 0.0
      %1241 = vmatprep.subr.mxu0 0.0
      %1242 = vmatpush1.msra.mxu0 0.0
      %1243 = vmatprep.subr.mxu0 0.0
      %1244 = vmatpush1.msra.mxu0 0.0
      %1245 = vmatprep.subr.mxu0 0.0
      %1246 = vmatpush1.msra.mxu0 0.0
      %1247 = vmatprep.subr.mxu0 0.0
      %1248 = vmatpush1.msra.mxu0 0.0
      %1249 = vmatprep.subr.mxu0 0.0
      %1250 = vmatpush1.msra.mxu0 0.0
      %1251 = vmatprep.subr.mxu0 0.0
      %1252 = vmatpush1.msra.mxu0 0.0
      %1253 = vmatprep.subr.mxu0 0.0
      %1254 = vmatpush1.msra.mxu0 0.0
      %1255 = vmatprep.subr.mxu0 0.0
      %1256 = vmatpush1.msra.mxu0 0.0
      %1257 = vmatprep.subr.mxu0 0.0
      %1258 = vmatpush1.msra.mxu0 0.0
      %1259 = vmatprep.subr.mxu0 0.0
      %1260 = vmatpush1.msra.mxu0 0.0
      %1261 = vmatprep.subr.mxu0 0.0
      %1262 = vmatpush1.msra.mxu0 0.0
      %1263 = vmatprep.subr.mxu0 0.0
      %1264 = vmatpush1.msra.mxu0 0.0
      %1265 = vmatprep.subr.mxu0 0.0
      %1266 = vmatpush1.msra.mxu0 0.0
      %1267 = vmatprep.subr.mxu0 0.0
      %1268 = vmatpush1.msra.mxu0 0.0
      %1269 = vmatprep.subr.mxu0 0.0
      %1270 = vmatpush1.msra.mxu0 0.0
      %1271 = vmatprep.subr.mxu0 0.0
      %1272 = vmatpush1.msra.mxu0 0.0
      %1273 = vmatprep.subr.mxu0 0.0
      %1274 = vmatpush1.msra.mxu0 0.0
      %1275 = vmatprep.subr.mxu0 0.0
      %1276 = vmatpush1.msra.mxu0 0.0
      %1277 = vmatprep.subr.mxu0 0.0
      %1278 = vmatpush1.msra.mxu0 0.0
      %1279 = vmatprep.subr.mxu0 0.0
      %1280 = vmatpush1.msra.mxu0 0.0
      %1281 = vmatprep.subr.mxu0 0.0
      %1282 = vmatpush1.msra.mxu0 0.0
      %1283 = vmatprep.subr.mxu0 0.0
      %1284 = vmatpush1.msra.mxu0 0.0
      %1285 = vmatprep.mubr.f32.mxu0 0.0
      %1286 = vmatmul.mubr.f32.gmra.mrb[0].mxu0 %v1133
      %v1287 = vpop.f32.mrb[0].mxu0
      %v1288 = vadd.f32 0.0, %v1287
      %v1289 = vpop.f32.mrb[0].mxu0
      %1290 = vmatprep.mubr.f32.mxu0 0.0
      %1291 = vmatmul.mubr.f32.gmra.mrb[0].mxu0 %v1136
      %v1292 = vpop.f32.mrb[0].mxu0
      %v1293 = vadd.f32 0.0, %v1292
      %v1294 = vpop.f32.mrb[0].mxu0
      %1295 = vdwg.mxu0
      %v1296 = vadd.f32 %v1114, %v1211
      %v1297 = vadd.f32 %v1115, %v1213
      %v1298 = vadd.f32 %v1116, %v1288
      %v1299 = vadd.f32 %v1117, %v1217
      %v1300 = vadd.f32 %v1118, %v1219
      %v1301 = vadd.f32 %v1119, %v1293
      %s1302 = scalar_lea.vmem %s1, 96
      %v1303 = vld [vmem:[%s1302] sm:$0xff]
      %v1304 = vld [vmem:[%s1302 + $0x8] sm:$0xff]
      %1305 = vrot.lane.b32.xlu0 %v225, 92
      %v1306 = vpop.permute.xlu0 %1305
      %1307 = vrot.lane.b32.xlu0 %v234, 92
      %v1308 = vpop.permute.xlu0 %1307
      %1309 = vrot.lane.b32.xlu0 %v226, 92
      %v1310 = vpop.permute.xlu0 %1309
      %vm1311 = vcmask 752640
      %v1312 = vsel %vm1311, %v1306, %v1308
      %v1313 = vsel %vm1311, %v1308, %v1310
      %v1315 = vsel %vm244, %v1303, 0
      %v1318 = vsel %vm244, %v1304, 0
      %v1320 = vsel %vm251, %v1312, 0
      %v1322 = vsel %vm251, %v1313, 0
      %v1324 = vsel %vm251, %v1310, 0
      %1326 = vmatprep.subr.mxu0 %v1322
      %1327 = vmatpush1.msra.mxu0 %v1320
      %1328 = vmatprep.subr.mxu0 0.0
      %1329 = vmatpush1.msra.mxu0 0.0
      %1330 = vmatprep.subr.mxu0 0.0
      %1331 = vmatpush1.msra.mxu0 0.0
      %1332 = vmatprep.subr.mxu0 0.0
      %1333 = vmatpush1.msra.mxu0 0.0
      %1334 = vmatprep.subr.mxu0 0.0
      %1335 = vmatpush1.msra.mxu0 0.0
      %1336 = vmatprep.subr.mxu0 0.0
      %1337 = vmatpush1.msra.mxu0 0.0
      %1338 = vmatprep.subr.mxu0 0.0
      %1339 = vmatpush1.msra.mxu0 0.0
      %1340 = vmatprep.subr.mxu0 0.0
      %1341 = vmatpush1.msra.mxu0 0.0
      %1342 = vmatprep.subr.mxu0 0.0
      %1343 = vmatpush1.msra.mxu0 0.0
      %1344 = vmatprep.subr.mxu0 0.0
      %1345 = vmatpush1.msra.mxu0 0.0
      %1346 = vmatprep.subr.mxu0 0.0
      %1347 = vmatpush1.msra.mxu0 0.0
      %1348 = vmatprep.subr.mxu0 0.0
      %1349 = vmatpush1.msra.mxu0 0.0
      %1350 = vmatprep.subr.mxu0 0.0
      %1351 = vmatpush1.msra.mxu0 0.0
      %1352 = vmatprep.subr.mxu0 0.0
      %1353 = vmatpush1.msra.mxu0 0.0
      %1354 = vmatprep.subr.mxu0 0.0
      %1355 = vmatpush1.msra.mxu0 0.0
      %1356 = vmatprep.subr.mxu0 0.0
      %1357 = vmatpush1.msra.mxu0 0.0
      %1358 = vmatprep.subr.mxu0 0.0
      %1359 = vmatpush1.msra.mxu0 0.0
      %1360 = vmatprep.subr.mxu0 0.0
      %1361 = vmatpush1.msra.mxu0 0.0
      %1362 = vmatprep.subr.mxu0 0.0
      %1363 = vmatpush1.msra.mxu0 0.0
      %1364 = vmatprep.subr.mxu0 0.0
      %1365 = vmatpush1.msra.mxu0 0.0
      %1366 = vmatprep.subr.mxu0 0.0
      %1367 = vmatpush1.msra.mxu0 0.0
      %1368 = vmatprep.subr.mxu0 0.0
      %1369 = vmatpush1.msra.mxu0 0.0
      %1370 = vmatprep.subr.mxu0 0.0
      %1371 = vmatpush1.msra.mxu0 0.0
      %1372 = vmatprep.subr.mxu0 0.0
      %1373 = vmatpush1.msra.mxu0 0.0
      %1374 = vmatprep.subr.mxu0 0.0
      %1375 = vmatpush1.msra.mxu0 0.0
      %1376 = vmatprep.subr.mxu0 0.0
      %1377 = vmatpush1.msra.mxu0 0.0
      %1378 = vmatprep.subr.mxu0 0.0
      %1379 = vmatpush1.msra.mxu0 0.0
      %1380 = vmatprep.subr.mxu0 0.0
      %1381 = vmatpush1.msra.mxu0 0.0
      %1382 = vmatprep.subr.mxu0 0.0
      %1383 = vmatpush1.msra.mxu0 0.0
      %1384 = vmatprep.subr.mxu0 0.0
      %1385 = vmatpush1.msra.mxu0 0.0
      %1386 = vmatprep.subr.mxu0 0.0
      %1387 = vmatpush1.msra.mxu0 0.0
      %1388 = vmatprep.subr.mxu0 0.0
      %1389 = vmatpush1.msra.mxu0 0.0
      %1390 = vmatprep.mubr.f32.mxu0 0.0
      %1391 = vmatmul.mubr.f32.gmra.mrb[0].mxu0 %v1315
      %v1392 = vpop.f32.mrb[0].mxu0
      %v1393 = vadd.f32 0.0, %v1392
      %v1394 = vpop.f32.mrb[0].mxu0
      %v1395 = vadd.f32 0.0, %v1394
      %1396 = vmatprep.mubr.f32.mxu0 0.0
      %1397 = vmatmul.mubr.f32.gmra.mrb[0].mxu0 %v1318
      %v1398 = vpop.f32.mrb[0].mxu0
      %v1399 = vadd.f32 0.0, %v1398
      %v1400 = vpop.f32.mrb[0].mxu0
      %v1401 = vadd.f32 0.0, %v1400
      %1402 = vdwg.mxu0
      %1403 = vmatprep.subr.mxu0 0.0
      %1404 = vmatpush1.msra.mxu0 %v1324
      %1405 = vmatprep.subr.mxu0 0.0
      %1406 = vmatpush1.msra.mxu0 0.0
      %1407 = vmatprep.subr.mxu0 0.0
      %1408 = vmatpush1.msra.mxu0 0.0
      %1409 = vmatprep.subr.mxu0 0.0
      %1410 = vmatpush1.msra.mxu0 0.0
      %1411 = vmatprep.subr.mxu0 0.0
      %1412 = vmatpush1.msra.mxu0 0.0
      %1413 = vmatprep.subr.mxu0 0.0
      %1414 = vmatpush1.msra.mxu0 0.0
      %1415 = vmatprep.subr.mxu0 0.0
      %1416 = vmatpush1.msra.mxu0 0.0
      %1417 = vmatprep.subr.mxu0 0.0
      %1418 = vmatpush1.msra.mxu0 0.0
      %1419 = vmatprep.subr.mxu0 0.0
      %1420 = vmatpush1.msra.mxu0 0.0
      %1421 = vmatprep.subr.mxu0 0.0
      %1422 = vmatpush1.msra.mxu0 0.0
      %1423 = vmatprep.subr.mxu0 0.0
      %1424 = vmatpush1.msra.mxu0 0.0
      %1425 = vmatprep.subr.mxu0 0.0
      %1426 = vmatpush1.msra.mxu0 0.0
      %1427 = vmatprep.subr.mxu0 0.0
      %1428 = vmatpush1.msra.mxu0 0.0
      %1429 = vmatprep.subr.mxu0 0.0
      %1430 = vmatpush1.msra.mxu0 0.0
      %1431 = vmatprep.subr.mxu0 0.0
      %1432 = vmatpush1.msra.mxu0 0.0
      %1433 = vmatprep.subr.mxu0 0.0
      %1434 = vmatpush1.msra.mxu0 0.0
      %1435 = vmatprep.subr.mxu0 0.0
      %1436 = vmatpush1.msra.mxu0 0.0
      %1437 = vmatprep.subr.mxu0 0.0
      %1438 = vmatpush1.msra.mxu0 0.0
      %1439 = vmatprep.subr.mxu0 0.0
      %1440 = vmatpush1.msra.mxu0 0.0
      %1441 = vmatprep.subr.mxu0 0.0
      %1442 = vmatpush1.msra.mxu0 0.0
      %1443 = vmatprep.subr.mxu0 0.0
      %1444 = vmatpush1.msra.mxu0 0.0
      %1445 = vmatprep.subr.mxu0 0.0
      %1446 = vmatpush1.msra.mxu0 0.0
      %1447 = vmatprep.subr.mxu0 0.0
      %1448 = vmatpush1.msra.mxu0 0.0
      %1449 = vmatprep.subr.mxu0 0.0
      %1450 = vmatpush1.msra.mxu0 0.0
      %1451 = vmatprep.subr.mxu0 0.0
      %1452 = vmatpush1.msra.mxu0 0.0
      %1453 = vmatprep.subr.mxu0 0.0
      %1454 = vmatpush1.msra.mxu0 0.0
      %1455 = vmatprep.subr.mxu0 0.0
      %1456 = vmatpush1.msra.mxu0 0.0
      %1457 = vmatprep.subr.mxu0 0.0
      %1458 = vmatpush1.msra.mxu0 0.0
      %1459 = vmatprep.subr.mxu0 0.0
      %1460 = vmatpush1.msra.mxu0 0.0
      %1461 = vmatprep.subr.mxu0 0.0
      %1462 = vmatpush1.msra.mxu0 0.0
      %1463 = vmatprep.subr.mxu0 0.0
      %1464 = vmatpush1.msra.mxu0 0.0
      %1465 = vmatprep.subr.mxu0 0.0
      %1466 = vmatpush1.msra.mxu0 0.0
      %1467 = vmatprep.mubr.f32.mxu0 0.0
      %1468 = vmatmul.mubr.f32.gmra.mrb[0].mxu0 %v1315
      %v1469 = vpop.f32.mrb[0].mxu0
      %v1470 = vadd.f32 0.0, %v1469
      %v1471 = vpop.f32.mrb[0].mxu0
      %1472 = vmatprep.mubr.f32.mxu0 0.0
      %1473 = vmatmul.mubr.f32.gmra.mrb[0].mxu0 %v1318
      %v1474 = vpop.f32.mrb[0].mxu0
      %v1475 = vadd.f32 0.0, %v1474
      %v1476 = vpop.f32.mrb[0].mxu0
      %1477 = vdwg.mxu0
      %v1478 = vadd.f32 %v1296, %v1393
      %v1479 = vadd.f32 %v1297, %v1395
      %v1480 = vadd.f32 %v1298, %v1470
      %v1481 = vadd.f32 %v1299, %v1399
      %v1482 = vadd.f32 %v1300, %v1401
      %v1483 = vadd.f32 %v1301, %v1475
      %s1484 = scalar_lea.vmem %s1, 112
      %v1485 = vld [vmem:[%s1484] sm:$0xff]
      %v1486 = vld [vmem:[%s1484 + $0x8] sm:$0xff]
      %1487 = vrot.lane.b32.xlu0 %v225, 91
      %v1488 = vpop.permute.xlu0 %1487
      %1489 = vrot.lane.b32.xlu0 %v234, 91
      %v1490 = vpop.permute.xlu0 %1489
      %1491 = vrot.lane.b32.xlu0 %v226, 91
      %v1492 = vpop.permute.xlu0 %1491
      %vm1493 = vcmask 744448
      %v1494 = vsel %vm1493, %v1488, %v1490
      %v1495 = vsel %vm1493, %v1490, %v1492
      %v1497 = vsel %vm244, %v1485, 0
      %v1500 = vsel %vm244, %v1486, 0
      %v1502 = vsel %vm251, %v1494, 0
      %v1504 = vsel %vm251, %v1495, 0
      %v1506 = vsel %vm251, %v1492, 0
      %1508 = vmatprep.subr.mxu0 %v1504
      %1509 = vmatpush1.msra.mxu0 %v1502
      %1510 = vmatprep.subr.mxu0 0.0
      %1511 = vmatpush1.msra.mxu0 0.0
      %1512 = vmatprep.subr.mxu0 0.0
      %1513 = vmatpush1.msra.mxu0 0.0
      %1514 = vmatprep.subr.mxu0 0.0
      %1515 = vmatpush1.msra.mxu0 0.0
      %1516 = vmatprep.subr.mxu0 0.0
      %1517 = vmatpush1.msra.mxu0 0.0
      %1518 = vmatprep.subr.mxu0 0.0
      %1519 = vmatpush1.msra.mxu0 0.0
      %1520 = vmatprep.subr.mxu0 0.0
      %1521 = vmatpush1.msra.mxu0 0.0
      %1522 = vmatprep.subr.mxu0 0.0
      %1523 = vmatpush1.msra.mxu0 0.0
      %1524 = vmatprep.subr.mxu0 0.0
      %1525 = vmatpush1.msra.mxu0 0.0
      %1526 = vmatprep.subr.mxu0 0.0
      %1527 = vmatpush1.msra.mxu0 0.0
      %1528 = vmatprep.subr.mxu0 0.0
      %1529 = vmatpush1.msra.mxu0 0.0
      %1530 = vmatprep.subr.mxu0 0.0
      %1531 = vmatpush1.msra.mxu0 0.0
      %1532 = vmatprep.subr.mxu0 0.0
      %1533 = vmatpush1.msra.mxu0 0.0
      %1534 = vmatprep.subr.mxu0 0.0
      %1535 = vmatpush1.msra.mxu0 0.0
      %1536 = vmatprep.subr.mxu0 0.0
      %1537 = vmatpush1.msra.mxu0 0.0
      %1538 = vmatprep.subr.mxu0 0.0
      %1539 = vmatpush1.msra.mxu0 0.0
      %1540 = vmatprep.subr.mxu0 0.0
      %1541 = vmatpush1.msra.mxu0 0.0
      %1542 = vmatprep.subr.mxu0 0.0
      %1543 = vmatpush1.msra.mxu0 0.0
      %1544 = vmatprep.subr.mxu0 0.0
      %1545 = vmatpush1.msra.mxu0 0.0
      %1546 = vmatprep.subr.mxu0 0.0
      %1547 = vmatpush1.msra.mxu0 0.0
      %1548 = vmatprep.subr.mxu0 0.0
      %1549 = vmatpush1.msra.mxu0 0.0
      %1550 = vmatprep.subr.mxu0 0.0
      %1551 = vmatpush1.msra.mxu0 0.0
      %1552 = vmatprep.subr.mxu0 0.0
      %1553 = vmatpush1.msra.mxu0 0.0
      %1554 = vmatprep.subr.mxu0 0.0
      %1555 = vmatpush1.msra.mxu0 0.0
      %1556 = vmatprep.subr.mxu0 0.0
      %1557 = vmatpush1.msra.mxu0 0.0
      %1558 = vmatprep.subr.mxu0 0.0
      %1559 = vmatpush1.msra.mxu0 0.0
      %1560 = vmatprep.subr.mxu0 0.0
      %1561 = vmatpush1.msra.mxu0 0.0
      %1562 = vmatprep.subr.mxu0 0.0
      %1563 = vmatpush1.msra.mxu0 0.0
      %1564 = vmatprep.subr.mxu0 0.0
      %1565 = vmatpush1.msra.mxu0 0.0
      %1566 = vmatprep.subr.mxu0 0.0
      %1567 = vmatpush1.msra.mxu0 0.0
      %1568 = vmatprep.subr.mxu0 0.0
      %1569 = vmatpush1.msra.mxu0 0.0
      %1570 = vmatprep.subr.mxu0 0.0
      %1571 = vmatpush1.msra.mxu0 0.0
      %1572 = vmatprep.mubr.f32.mxu0 0.0
      %1573 = vmatmul.mubr.f32.gmra.mrb[0].mxu0 %v1497
      %v1574 = vpop.f32.mrb[0].mxu0
      %v1575 = vadd.f32 0.0, %v1574
      %v1576 = vpop.f32.mrb[0].mxu0
      %v1577 = vadd.f32 0.0, %v1576
      %1578 = vmatprep.mubr.f32.mxu0 0.0
      %1579 = vmatmul.mubr.f32.gmra.mrb[0].mxu0 %v1500
      %v1580 = vpop.f32.mrb[0].mxu0
      %v1581 = vadd.f32 0.0, %v1580
      %v1582 = vpop.f32.mrb[0].mxu0
      %v1583 = vadd.f32 0.0, %v1582
      %1584 = vdwg.mxu0
      %1585 = vmatprep.subr.mxu0 0.0
      %1586 = vmatpush1.msra.mxu0 %v1506
      %1587 = vmatprep.subr.mxu0 0.0
      %1588 = vmatpush1.msra.mxu0 0.0
      %1589 = vmatprep.subr.mxu0 0.0
      %1590 = vmatpush1.msra.mxu0 0.0
      %1591 = vmatprep.subr.mxu0 0.0
      %1592 = vmatpush1.msra.mxu0 0.0
      %1593 = vmatprep.subr.mxu0 0.0
      %1594 = vmatpush1.msra.mxu0 0.0
      %1595 = vmatprep.subr.mxu0 0.0
      %1596 = vmatpush1.msra.mxu0 0.0
      %1597 = vmatprep.subr.mxu0 0.0
      %1598 = vmatpush1.msra.mxu0 0.0
      %1599 = vmatprep.subr.mxu0 0.0
      %1600 = vmatpush1.msra.mxu0 0.0
      %1601 = vmatprep.subr.mxu0 0.0
      %1602 = vmatpush1.msra.mxu0 0.0
      %1603 = vmatprep.subr.mxu0 0.0
      %1604 = vmatpush1.msra.mxu0 0.0
      %1605 = vmatprep.subr.mxu0 0.0
      %1606 = vmatpush1.msra.mxu0 0.0
      %1607 = vmatprep.subr.mxu0 0.0
      %1608 = vmatpush1.msra.mxu0 0.0
      %1609 = vmatprep.subr.mxu0 0.0
      %1610 = vmatpush1.msra.mxu0 0.0
      %1611 = vmatprep.subr.mxu0 0.0
      %1612 = vmatpush1.msra.mxu0 0.0
      %1613 = vmatprep.subr.mxu0 0.0
      %1614 = vmatpush1.msra.mxu0 0.0
      %1615 = vmatprep.subr.mxu0 0.0
      %1616 = vmatpush1.msra.mxu0 0.0
      %1617 = vmatprep.subr.mxu0 0.0
      %1618 = vmatpush1.msra.mxu0 0.0
      %1619 = vmatprep.subr.mxu0 0.0
      %1620 = vmatpush1.msra.mxu0 0.0
      %1621 = vmatprep.subr.mxu0 0.0
      %1622 = vmatpush1.msra.mxu0 0.0
      %1623 = vmatprep.subr.mxu0 0.0
      %1624 = vmatpush1.msra.mxu0 0.0
      %1625 = vmatprep.subr.mxu0 0.0
      %1626 = vmatpush1.msra.mxu0 0.0
      %1627 = vmatprep.subr.mxu0 0.0
      %1628 = vmatpush1.msra.mxu0 0.0
      %1629 = vmatprep.subr.mxu0 0.0
      %1630 = vmatpush1.msra.mxu0 0.0
      %1631 = vmatprep.subr.mxu0 0.0
      %1632 = vmatpush1.msra.mxu0 0.0
      %1633 = vmatprep.subr.mxu0 0.0
      %1634 = vmatpush1.msra.mxu0 0.0
      %1635 = vmatprep.subr.mxu0 0.0
      %1636 = vmatpush1.msra.mxu0 0.0
      %1637 = vmatprep.subr.mxu0 0.0
      %1638 = vmatpush1.msra.mxu0 0.0
      %1639 = vmatprep.subr.mxu0 0.0
      %1640 = vmatpush1.msra.mxu0 0.0
      %1641 = vmatprep.subr.mxu0 0.0
      %1642 = vmatpush1.msra.mxu0 0.0
      %1643 = vmatprep.subr.mxu0 0.0
      %1644 = vmatpush1.msra.mxu0 0.0
      %1645 = vmatprep.subr.mxu0 0.0
      %1646 = vmatpush1.msra.mxu0 0.0
      %1647 = vmatprep.subr.mxu0 0.0
      %1648 = vmatpush1.msra.mxu0 0.0
      %1649 = vmatprep.mubr.f32.mxu0 0.0
      %1650 = vmatmul.mubr.f32.gmra.mrb[0].mxu0 %v1497
      %v1651 = vpop.f32.mrb[0].mxu0
      %v1652 = vadd.f32 0.0, %v1651
      %v1653 = vpop.f32.mrb[0].mxu0
      %1654 = vmatprep.mubr.f32.mxu0 0.0
      %1655 = vmatmul.mubr.f32.gmra.mrb[0].mxu0 %v1500
      %v1656 = vpop.f32.mrb[0].mxu0
      %v1657 = vadd.f32 0.0, %v1656
      %v1658 = vpop.f32.mrb[0].mxu0
      %1659 = vdwg.mxu0
      %v1660 = vadd.f32 %v1478, %v1575
      %v1661 = vadd.f32 %v1479, %v1577
      %v1662 = vadd.f32 %v1480, %v1652
      %v1663 = vadd.f32 %v1481, %v1581
      %v1664 = vadd.f32 %v1482, %v1583
      %v1665 = vadd.f32 %v1483, %v1657
      %s1666 = scalar_lea.vmem %s1, 128
      %v1667 = vld [vmem:[%s1666] sm:$0xff]
      %v1668 = vld [vmem:[%s1666 + $0x8] sm:$0xff]
      %1669 = vrot.lane.b32.xlu0 %v225, 90
      %v1670 = vpop.permute.xlu0 %1669
      %1671 = vrot.lane.b32.xlu0 %v234, 90
      %v1672 = vpop.permute.xlu0 %1671
      %1673 = vrot.lane.b32.xlu0 %v226, 90
      %v1674 = vpop.permute.xlu0 %1673
      %vm1675 = vcmask 736256
      %v1676 = vsel %vm1675, %v1670, %v1672
      %v1677 = vsel %vm1675, %v1672, %v1674
      %v1679 = vsel %vm244, %v1667, 0
      %v1682 = vsel %vm244, %v1668, 0
      %v1684 = vsel %vm251, %v1676, 0
      %v1686 = vsel %vm251, %v1677, 0
      %v1688 = vsel %vm251, %v1674, 0
      %1690 = vmatprep.subr.mxu0 %v1686
      %1691 = vmatpush1.msra.mxu0 %v1684
      %1692 = vmatprep.subr.mxu0 0.0
      %1693 = vmatpush1.msra.mxu0 0.0
      %1694 = vmatprep.subr.mxu0 0.0
      %1695 = vmatpush1.msra.mxu0 0.0
      %1696 = vmatprep.subr.mxu0 0.0
      %1697 = vmatpush1.msra.mxu0 0.0
      %1698 = vmatprep.subr.mxu0 0.0
      %1699 = vmatpush1.msra.mxu0 0.0
      %1700 = vmatprep.subr.mxu0 0.0
      %1701 = vmatpush1.msra.mxu0 0.0
      %1702 = vmatprep.subr.mxu0 0.0
      %1703 = vmatpush1.msra.mxu0 0.0
      %1704 = vmatprep.subr.mxu0 0.0
      %1705 = vmatpush1.msra.mxu0 0.0
      %1706 = vmatprep.subr.mxu0 0.0
      %1707 = vmatpush1.msra.mxu0 0.0
      %1708 = vmatprep.subr.mxu0 0.0
      %1709 = vmatpush1.msra.mxu0 0.0
      %1710 = vmatprep.subr.mxu0 0.0
      %1711 = vmatpush1.msra.mxu0 0.0
      %1712 = vmatprep.subr.mxu0 0.0
      %1713 = vmatpush1.msra.mxu0 0.0
      %1714 = vmatprep.subr.mxu0 0.0
      %1715 = vmatpush1.msra.mxu0 0.0
      %1716 = vmatprep.subr.mxu0 0.0
      %1717 = vmatpush1.msra.mxu0 0.0
      %1718 = vmatprep.subr.mxu0 0.0
      %1719 = vmatpush1.msra.mxu0 0.0
      %1720 = vmatprep.subr.mxu0 0.0
      %1721 = vmatpush1.msra.mxu0 0.0
      %1722 = vmatprep.subr.mxu0 0.0
      %1723 = vmatpush1.msra.mxu0 0.0
      %1724 = vmatprep.subr.mxu0 0.0
      %1725 = vmatpush1.msra.mxu0 0.0
      %1726 = vmatprep.subr.mxu0 0.0
      %1727 = vmatpush1.msra.mxu0 0.0
      %1728 = vmatprep.subr.mxu0 0.0
      %1729 = vmatpush1.msra.mxu0 0.0
      %1730 = vmatprep.subr.mxu0 0.0
      %1731 = vmatpush1.msra.mxu0 0.0
      %1732 = vmatprep.subr.mxu0 0.0
      %1733 = vmatpush1.msra.mxu0 0.0
      %1734 = vmatprep.subr.mxu0 0.0
      %1735 = vmatpush1.msra.mxu0 0.0
      %1736 = vmatprep.subr.mxu0 0.0
      %1737 = vmatpush1.msra.mxu0 0.0
      %1738 = vmatprep.subr.mxu0 0.0
      %1739 = vmatpush1.msra.mxu0 0.0
      %1740 = vmatprep.subr.mxu0 0.0
      %1741 = vmatpush1.msra.mxu0 0.0
      %1742 = vmatprep.subr.mxu0 0.0
      %1743 = vmatpush1.msra.mxu0 0.0
      %1744 = vmatprep.subr.mxu0 0.0
      %1745 = vmatpush1.msra.mxu0 0.0
      %1746 = vmatprep.subr.mxu0 0.0
      %1747 = vmatpush1.msra.mxu0 0.0
      %1748 = vmatprep.subr.mxu0 0.0
      %1749 = vmatpush1.msra.mxu0 0.0
      %1750 = vmatprep.subr.mxu0 0.0
      %1751 = vmatpush1.msra.mxu0 0.0
      %1752 = vmatprep.subr.mxu0 0.0
      %1753 = vmatpush1.msra.mxu0 0.0
      %1754 = vmatprep.mubr.f32.mxu0 0.0
      %1755 = vmatmul.mubr.f32.gmra.mrb[0].mxu0 %v1679
      %v1756 = vpop.f32.mrb[0].mxu0
      %v1757 = vadd.f32 0.0, %v1756
      %v1758 = vpop.f32.mrb[0].mxu0
      %v1759 = vadd.f32 0.0, %v1758
      %1760 = vmatprep.mubr.f32.mxu0 0.0
      %1761 = vmatmul.mubr.f32.gmra.mrb[0].mxu0 %v1682
      %v1762 = vpop.f32.mrb[0].mxu0
      %v1763 = vadd.f32 0.0, %v1762
      %v1764 = vpop.f32.mrb[0].mxu0
      %v1765 = vadd.f32 0.0, %v1764
      %1766 = vdwg.mxu0
      %1767 = vmatprep.subr.mxu0 0.0
      %1768 = vmatpush1.msra.mxu0 %v1688
      %1769 = vmatprep.subr.mxu0 0.0
      %1770 = vmatpush1.msra.mxu0 0.0
      %1771 = vmatprep.subr.mxu0 0.0
      %1772 = vmatpush1.msra.mxu0 0.0
      %1773 = vmatprep.subr.mxu0 0.0
      %1774 = vmatpush1.msra.mxu0 0.0
      %1775 = vmatprep.subr.mxu0 0.0
      %1776 = vmatpush1.msra.mxu0 0.0
      %1777 = vmatprep.subr.mxu0 0.0
      %1778 = vmatpush1.msra.mxu0 0.0
      %1779 = vmatprep.subr.mxu0 0.0
      %1780 = vmatpush1.msra.mxu0 0.0
      %1781 = vmatprep.subr.mxu0 0.0
      %1782 = vmatpush1.msra.mxu0 0.0
      %1783 = vmatprep.subr.mxu0 0.0
      %1784 = vmatpush1.msra.mxu0 0.0
      %1785 = vmatprep.subr.mxu0 0.0
      %1786 = vmatpush1.msra.mxu0 0.0
      %1787 = vmatprep.subr.mxu0 0.0
      %1788 = vmatpush1.msra.mxu0 0.0
      %1789 = vmatprep.subr.mxu0 0.0
      %1790 = vmatpush1.msra.mxu0 0.0
      %1791 = vmatprep.subr.mxu0 0.0
      %1792 = vmatpush1.msra.mxu0 0.0
      %1793 = vmatprep.subr.mxu0 0.0
      %1794 = vmatpush1.msra.mxu0 0.0
      %1795 = vmatprep.subr.mxu0 0.0
      %1796 = vmatpush1.msra.mxu0 0.0
      %1797 = vmatprep.subr.mxu0 0.0
      %1798 = vmatpush1.msra.mxu0 0.0
      %1799 = vmatprep.subr.mxu0 0.0
      %1800 = vmatpush1.msra.mxu0 0.0
      %1801 = vmatprep.subr.mxu0 0.0
      %1802 = vmatpush1.msra.mxu0 0.0
      %1803 = vmatprep.subr.mxu0 0.0
      %1804 = vmatpush1.msra.mxu0 0.0
      %1805 = vmatprep.subr.mxu0 0.0
      %1806 = vmatpush1.msra.mxu0 0.0
      %1807 = vmatprep.subr.mxu0 0.0
      %1808 = vmatpush1.msra.mxu0 0.0
      %1809 = vmatprep.subr.mxu0 0.0
      %1810 = vmatpush1.msra.mxu0 0.0
      %1811 = vmatprep.subr.mxu0 0.0
      %1812 = vmatpush1.msra.mxu0 0.0
      %1813 = vmatprep.subr.mxu0 0.0
      %1814 = vmatpush1.msra.mxu0 0.0
      %1815 = vmatprep.subr.mxu0 0.0
      %1816 = vmatpush1.msra.mxu0 0.0
      %1817 = vmatprep.subr.mxu0 0.0
      %1818 = vmatpush1.msra.mxu0 0.0
      %1819 = vmatprep.subr.mxu0 0.0
      %1820 = vmatpush1.msra.mxu0 0.0
      %1821 = vmatprep.subr.mxu0 0.0
      %1822 = vmatpush1.msra.mxu0 0.0
      %1823 = vmatprep.subr.mxu0 0.0
      %1824 = vmatpush1.msra.mxu0 0.0
      %1825 = vmatprep.subr.mxu0 0.0
      %1826 = vmatpush1.msra.mxu0 0.0
      %1827 = vmatprep.subr.mxu0 0.0
      %1828 = vmatpush1.msra.mxu0 0.0
      %1829 = vmatprep.subr.mxu0 0.0
      %1830 = vmatpush1.msra.mxu0 0.0
      %1831 = vmatprep.mubr.f32.mxu0 0.0
      %1832 = vmatmul.mubr.f32.gmra.mrb[0].mxu0 %v1679
      %v1833 = vpop.f32.mrb[0].mxu0
      %v1834 = vadd.f32 0.0, %v1833
      %v1835 = vpop.f32.mrb[0].mxu0
      %1836 = vmatprep.mubr.f32.mxu0 0.0
      %1837 = vmatmul.mubr.f32.gmra.mrb[0].mxu0 %v1682
      %v1838 = vpop.f32.mrb[0].mxu0
      %v1839 = vadd.f32 0.0, %v1838
      %v1840 = vpop.f32.mrb[0].mxu0
      %1841 = vdwg.mxu0
      %v1842 = vadd.f32 %v1660, %v1757
      %v1843 = vadd.f32 %v1661, %v1759
      %v1844 = vadd.f32 %v1662, %v1834
      %v1845 = vadd.f32 %v1663, %v1763
      %v1846 = vadd.f32 %v1664, %v1765
      %v1847 = vadd.f32 %v1665, %v1839
      %v1848 = vld [vmem:[%s2] sm:$0xff]
      %v1849 = vld [vmem:[%s2 + $0x8] sm:$0xff]
      %1851 = vset.pattern.permute.xlu0 0
      %1852 = vperm.xlu0 %1851, %v1848
      %v1853 = vpop.permute.xlu0 %1852
      %1856 = vset.pattern.permute.xlu0 0
      %1857 = vperm.xlu0 %1856, %v1849
      %v1858 = vpop.permute.xlu0 %1857
      %v1860 = vadd.f32 %v1842, %v1853
      %v1861 = vadd.f32 %v1843, %v1853
      %v1862 = vadd.f32 %v1844, %v1853
      %v1863 = vadd.f32 %v1845, %v1858
      %v1864 = vadd.f32 %v1846, %v1858
      %v1865 = vadd.f32 %v1847, %v1858
      %v1866 = vmax.f32 %v1860, 0.0
      %v1867 = vmax.f32 %v1861, 0.0
      %v1868 = vmax.f32 %v1862, 0.0
      %v1869 = vmax.f32 %v1863, 0.0
      %v1870 = vmax.f32 %v1864, 0.0
      %v1871 = vmax.f32 %v1865, 0.0
      %v1872 = vld [vmem:[%s3] sm:$0x1]
      %v1873 = vld [vmem:[#allocation2] sm:$0x1]
      %1875 = vset.pattern.permute.xlu0 0
      %1876 = vperm.xlu0 %1875, %v1873
      %v1877 = vpop.permute.xlu0 %1876
      %v1879 = vlaneseq
      %v1880 = vshrl.u32 %v1879, 7
      %v1881 = vsub.s32 0, %v1880
      %v1882 = vrot.slane %v1877, %v1881
      %vm1883 = vcmask 130048
      %v1885 = vsel %vm1883, %v1872, 0
      %1887 = vmatprep.subr.mxu0 %v1867
      %1888 = vmatpush1.msra.mxu0 %v1866
      %1889 = vmatprep.subr.mxu0 %v1870
      %1890 = vmatpush1.msra.mxu0 %v1869
      %1891 = vmatprep.subr.mxu0 0.0
      %1892 = vmatpush1.msra.mxu0 0.0
      %1893 = vmatprep.subr.mxu0 0.0
      %1894 = vmatpush1.msra.mxu0 0.0
      %1895 = vmatprep.subr.mxu0 0.0
      %1896 = vmatpush1.msra.mxu0 0.0
      %1897 = vmatprep.subr.mxu0 0.0
      %1898 = vmatpush1.msra.mxu0 0.0
      %1899 = vmatprep.subr.mxu0 0.0
      %1900 = vmatpush1.msra.mxu0 0.0
      %1901 = vmatprep.subr.mxu0 0.0
      %1902 = vmatpush1.msra.mxu0 0.0
      %1903 = vmatprep.subr.mxu0 0.0
      %1904 = vmatpush1.msra.mxu0 0.0
      %1905 = vmatprep.subr.mxu0 0.0
      %1906 = vmatpush1.msra.mxu0 0.0
      %1907 = vmatprep.subr.mxu0 0.0
      %1908 = vmatpush1.msra.mxu0 0.0
      %1909 = vmatprep.subr.mxu0 0.0
      %1910 = vmatpush1.msra.mxu0 0.0
      %1911 = vmatprep.subr.mxu0 0.0
      %1912 = vmatpush1.msra.mxu0 0.0
      %1913 = vmatprep.subr.mxu0 0.0
      %1914 = vmatpush1.msra.mxu0 0.0
      %1915 = vmatprep.subr.mxu0 0.0
      %1916 = vmatpush1.msra.mxu0 0.0
      %1917 = vmatprep.subr.mxu0 0.0
      %1918 = vmatpush1.msra.mxu0 0.0
      %1919 = vmatprep.subr.mxu0 0.0
      %1920 = vmatpush1.msra.mxu0 0.0
      %1921 = vmatprep.subr.mxu0 0.0
      %1922 = vmatpush1.msra.mxu0 0.0
      %1923 = vmatprep.subr.mxu0 0.0
      %1924 = vmatpush1.msra.mxu0 0.0
      %1925 = vmatprep.subr.mxu0 0.0
      %1926 = vmatpush1.msra.mxu0 0.0
      %1927 = vmatprep.subr.mxu0 0.0
      %1928 = vmatpush1.msra.mxu0 0.0
      %1929 = vmatprep.subr.mxu0 0.0
      %1930 = vmatpush1.msra.mxu0 0.0
      %1931 = vmatprep.subr.mxu0 0.0
      %1932 = vmatpush1.msra.mxu0 0.0
      %1933 = vmatprep.subr.mxu0 0.0
      %1934 = vmatpush1.msra.mxu0 0.0
      %1935 = vmatprep.subr.mxu0 0.0
      %1936 = vmatpush1.msra.mxu0 0.0
      %1937 = vmatprep.subr.mxu0 0.0
      %1938 = vmatpush1.msra.mxu0 0.0
      %1939 = vmatprep.subr.mxu0 0.0
      %1940 = vmatpush1.msra.mxu0 0.0
      %1941 = vmatprep.subr.mxu0 0.0
      %1942 = vmatpush1.msra.mxu0 0.0
      %1943 = vmatprep.subr.mxu0 0.0
      %1944 = vmatpush1.msra.mxu0 0.0
      %1945 = vmatprep.subr.mxu0 0.0
      %1946 = vmatpush1.msra.mxu0 0.0
      %1947 = vmatprep.subr.mxu0 0.0
      %1948 = vmatpush1.msra.mxu0 0.0
      %1949 = vmatprep.subr.mxu0 0.0
      %1950 = vmatpush1.msra.mxu0 0.0
      %1951 = vmatprep.mubr.f32.mxu0 0.0
      %1952 = vmatmul.mubr.f32.gmra.mrb[0].mxu0 %v1885
      %v1953 = vpop.f32.mrb[0].mxu0
      %v1954 = vadd.f32 %v1882, %v1953
      %v1955 = vpop.f32.mrb[0].mxu0
      %v1956 = vadd.f32 %v1882, %v1955
      %1957 = vdwg.mxu0
      %1958 = vmatprep.subr.mxu0 0.0
      %1959 = vmatpush1.msra.mxu0 %v1868
      %1960 = vmatprep.subr.mxu0 0.0
      %1961 = vmatpush1.msra.mxu0 %v1871
      %1962 = vmatprep.subr.mxu0 0.0
      %1963 = vmatpush1.msra.mxu0 0.0
      %1964 = vmatprep.subr.mxu0 0.0
      %1965 = vmatpush1.msra.mxu0 0.0
      %1966 = vmatprep.subr.mxu0 0.0
      %1967 = vmatpush1.msra.mxu0 0.0
      %1968 = vmatprep.subr.mxu0 0.0
      %1969 = vmatpush1.msra.mxu0 0.0
      %1970 = vmatprep.subr.mxu0 0.0
      %1971 = vmatpush1.msra.mxu0 0.0
      %1972 = vmatprep.subr.mxu0 0.0
      %1973 = vmatpush1.msra.mxu0 0.0
      %1974 = vmatprep.subr.mxu0 0.0
      %1975 = vmatpush1.msra.mxu0 0.0
      %1976 = vmatprep.subr.mxu0 0.0
      %1977 = vmatpush1.msra.mxu0 0.0
      %1978 = vmatprep.subr.mxu0 0.0
      %1979 = vmatpush1.msra.mxu0 0.0
      %1980 = vmatprep.subr.mxu0 0.0
      %1981 = vmatpush1.msra.mxu0 0.0
      %1982 = vmatprep.subr.mxu0 0.0
      %1983 = vmatpush1.msra.mxu0 0.0
      %1984 = vmatprep.subr.mxu0 0.0
      %1985 = vmatpush1.msra.mxu0 0.0
      %1986 = vmatprep.subr.mxu0 0.0
      %1987 = vmatpush1.msra.mxu0 0.0
      %1988 = vmatprep.subr.mxu0 0.0
      %1989 = vmatpush1.msra.mxu0 0.0
      %1990 = vmatprep.subr.mxu0 0.0
      %1991 = vmatpush1.msra.mxu0 0.0
      %1992 = vmatprep.subr.mxu0 0.0
      %1993 = vmatpush1.msra.mxu0 0.0
      %1994 = vmatprep.subr.mxu0 0.0
      %1995 = vmatpush1.msra.mxu0 0.0
      %1996 = vmatprep.subr.mxu0 0.0
      %1997 = vmatpush1.msra.mxu0 0.0
      %1998 = vmatprep.subr.mxu0 0.0
      %1999 = vmatpush1.msra.mxu0 0.0
      %2000 = vmatprep.subr.mxu0 0.0
      %2001 = vmatpush1.msra.mxu0 0.0
      %2002 = vmatprep.subr.mxu0 0.0
      %2003 = vmatpush1.msra.mxu0 0.0
      %2004 = vmatprep.subr.mxu0 0.0
      %2005 = vmatpush1.msra.mxu0 0.0
      %2006 = vmatprep.subr.mxu0 0.0
      %2007 = vmatpush1.msra.mxu0 0.0
      %2008 = vmatprep.subr.mxu0 0.0
      %2009 = vmatpush1.msra.mxu0 0.0
      %2010 = vmatprep.subr.mxu0 0.0
      %2011 = vmatpush1.msra.mxu0 0.0
      %2012 = vmatprep.subr.mxu0 0.0
      %2013 = vmatpush1.msra.mxu0 0.0
      %2014 = vmatprep.subr.mxu0 0.0
      %2015 = vmatpush1.msra.mxu0 0.0
      %2016 = vmatprep.subr.mxu0 0.0
      %2017 = vmatpush1.msra.mxu0 0.0
      %2018 = vmatprep.subr.mxu0 0.0
      %2019 = vmatpush1.msra.mxu0 0.0
      %2020 = vmatprep.subr.mxu0 0.0
      %2021 = vmatpush1.msra.mxu0 0.0
      %2022 = vmatprep.mubr.f32.mxu0 0.0
      %2023 = vmatmul.mubr.f32.gmra.mrb[0].mxu0 %v1885
      %v2024 = vpop.f32.mrb[0].mxu0
      %v2025 = vadd.f32 %v1882, %v2024
      %v2026 = vpop.f32.mrb[0].mxu0
      %2027 = vdwg.mxu0
      %v2031 = vcombine.low %v1954, %v1956
      %v2033 = vunpack.c.l.s4 1966171168
      %v2034 = vunpack.c.0.s8 %v2033
      %v2035 = vlaneseq
      %v2036 = vshrl.u32 %v2035, 7
      %v2037 = vsub.s32 %v2034, %v2036
      %v2038 = vrot.slane %v2031, %v2037
      %v2040 = vunpack.c.l.s4 1966171168
      %v2041 = vunpack.c.0.s8 %v2040
      %v2042 = vlaneseq
      %v2043 = vshrl.u32 %v2042, 7
      %v2044 = vsub.s32 %v2041, %v2043
      %v2045 = vrot.slane %v2025, %v2044
      %v2046 = vcombine.low %v2038, %v2045
      %v2048 = vunpack.c.l.s4 1966171168
      %v2049 = vunpack.c.0.s8 %v2048
      %v2050 = vlaneseq
      %v2051 = vshrl.u32 %v2050, 7
      %v2052 = vsub.s32 %v2049, %v2051
      %v2053 = vrot.slane %v2046, %v2052
      %v2055 = vlaneseq
      %vm2056 = vcmp.ge.s32.totalorder %v2055, 0
      %vm2057 = vcmp.lt.s32.totalorder %v2055, 288
      %vm2058 = vmand %vm2056, %vm2057
      %2059 = vst.msk [vmem:[%s224] sm:$0x7] %vm2058, %v2053
      %p2060 = scmp.lt.s32.totalorder %s18, 1
      %s2061 = scalar_select %p2060, %s18, 1
      %s2062 = smul.addr %s2061, 3
      %s2063 = scalar_lea.vmem %s5, %s2062
      // Predicated region
      $region41: #{crowd_counter_forward.2} parent=39 // pred_check
        %p2064 = pneg %p146
      $region42: #{crowd_counter_forward.2} parent=39 // pred_check_branch
        %2066 = sbr.rel (%p2064) target = $region44
      $region43: #{crowd_counter_forward.2} parent=39 // pred_region
        _
      $region44: #{crowd_counter_forward.2} parent=39 // pred_fallthru
        _
    $region40: #{crowd_counter_forward.2} parent=5 // pred_fallthru
      _
    %p2067 = scmp.le.s32.totalorder 2, %s13
    // Predicated region
    $region45: #{crowd_counter_forward.2} parent=5 // pred_check
      %p2068 = pneg %p2067
    $region46: #{crowd_counter_forward.2} parent=5 // pred_check_branch
      %2070 = sbr.rel (%p2068) target = $region48
    $region47: #{crowd_counter_forward.2} parent=5 // pred_region
      %s2071 = ssub.s32 %s13, 2
      // Predicated region
      $region49: #{crowd_counter_forward.2} parent=47 // pred_check
        %p2072 = pneg %p152
      $region50: #{crowd_counter_forward.2} parent=47 // pred_check_branch
        %2074 = sbr.rel (%p2072) target = $region52
      $region51: #{crowd_counter_forward.2} parent=47 // pred_region
        %p2075 = scmp.lt.s32.totalorder %s19, 1
        %s2076 = scalar_select %p2075, %s19, 1
        %s2077 = smul.addr %s2076, 3
        %s2078 = scalar_lea.vmem %s5, %s2077
      $region52: #{crowd_counter_forward.2} parent=47 // pred_fallthru
        _
    $region48: #{crowd_counter_forward.2} parent=5 // pred_fallthru
      _
  $region6: #{crowd_counter_forward.2} parent=0 // loop_footer
    %s17 = sadd.s32 1, %s13
  $region7: #{crowd_counter_forward.2} parent=0 // loop_footer_branch
    %12 = sbr.rel target = $region3
  $region8: #{crowd_counter_forward.2} parent=0 // loop_exit
    _

</llo_original>
